<compile_context>
chip_gen: v6e
topology: v6e:2x2x1
jax: 0.10.0
libtpu: 0.0.40
codegen_flags: <defaults>
</compile_context>

<pallas_src>
import jax
import jax.numpy as jnp
from jax import lax
from jax.experimental import pallas as pl
from jax.experimental.pallas import tpu as pltpu

EMBED     = 384                    # args.features_dim
GRID_HW   = 24                     # forward() hard-codes view(-1, 24, 24, 384)
N_TOK     = GRID_HW * GRID_HW      # 576 tokens
POOL      = 3                      # nn.MaxPool2d(3, 3)
OUT_HW    = GRID_HW // POOL        # 8
N_POS     = OUT_HW * OUT_HW        # 64 pooled positions
N_WIN     = POOL * POOL            # 9 window offsets
IN_CH     = 3
PATCH     = 2
PATCH_DIM = IN_CH * PATCH * PATCH  # 12
IMG_HW    = GRID_HW * PATCH        # 48
GEM_P     = 3.0                    # GeM Parameter(ones(1)*3)
GEM_EPS   = 1e-6
NORM_EPS  = 1e-12                  # F.normalize default eps


# -----------------------------------------------------------------------------
# Fused kernel: synthetic patch-embedding backbone + both head branches.
# TODO(synk): the real backbone is a pretrained CCT-14 transformer
# (cct_14_7x2_384); it is replaced by a deterministic synthetic patch-embedding
# projection since pretrained checkpoints cannot be loaded in-script.
#
# Per grid step (Bt batches), streaming over the 9 pool-window slabs w:
#   slab_w = p[:, w*64:(w+1)*64] @ W + b              (bf16 MXU, f32 acc/bias)
#   x0 acc = running max over w                       (Bt, 64, 384)
#   x1 acc += sum_tokens( clamp(L2norm(slab_w), eps)^3 )   (Bt, 1, 384)
# then: x0 = channel-L2(x0 acc); x1 = L2( (x1 acc / 576)^(1/3) ).
# -----------------------------------------------------------------------------
def _fused_kernel(p_ref, w_ref, b_ref, o0_ref, o1_ref):
    Bt = p_ref.shape[0]
    eps2 = NORM_EPS * NORM_EPS

    w_bf = w_ref[...]                       # (12, 384) bf16, read once
    bias = b_ref[...]                       # (1, 384) f32, read once

    pooled_max = None                       # (Bt, 64, 384) running max  (x0)
    gem_sum = None                          # (Bt, 1, 384) channel sum   (x1)

    # Stream over the 9 pool-window slabs; the full (Bt, 576, 384) token map
    # is never materialized in VMEM.
    for w in range(N_WIN):
        slab = p_ref[:, w * N_POS:(w + 1) * N_POS, :]            # (Bt, 64, 12) bf16
        tok = jnp.dot(slab.reshape(Bt * N_POS, PATCH_DIM), w_bf,
                      preferred_element_type=jnp.float32)        # (Bt*64, 384) f32
        tok = (tok + bias).reshape(Bt, N_POS, EMBED)             # f32 bias add

        # ---- x0 branch: running 3x3/stride-3 max pool.
        pooled_max = tok if pooled_max is None else jnp.maximum(pooled_max, tok)

        # ---- x1 branch: per-token channel L2 norm -> clamp -> ^3 -> token sum.
        inv_tn = lax.rsqrt(jnp.maximum(
            jnp.sum(tok * tok, axis=-1, keepdims=True), eps2))   # (Bt, 64, 1)
        c = jnp.maximum(tok * inv_tn, GEM_EPS)                   # clamp(min=eps)
        c3 = c * c * c                                           # pow(p), p = 3
        slab_sum = jnp.sum(c3, axis=1, keepdims=True)            # (Bt, 1, 384)
        gem_sum = slab_sum if gem_sum is None else gem_sum + slab_sum

    # x0: per-position channel L2 normalization of the pooled map.
    inv_pn = lax.rsqrt(jnp.maximum(
        jnp.sum(pooled_max * pooled_max, axis=-1, keepdims=True), eps2))
    o0_ref[...] = pooled_max * inv_pn

    # x1: GeM(p=3, eps=1e-6) over all 576 tokens -> final L2 normalization.
    g = gem_sum * (1.0 / N_TOK)                                  # avg_pool2d
    g = jnp.exp(jnp.log(g) * (1.0 / GEM_P))                      # pow(1/p); g > 0
    inv_gn = lax.rsqrt(jnp.maximum(
        jnp.sum(g * g, axis=-1, keepdims=True), eps2))
    o1_ref[...] = g * inv_gn


def _pick_block_b(B):
    # Prefer >= 2 grid steps (megacore / 2-TC sharding on v7x), then the
    # largest Bt up to 8 to amortize the ~0.35 us per-grid-step overhead.
    # The streamed working set (~8 MB at Bt=8) fits every chip's scoped VMEM.
    for bt in (8, 4, 2, 1):
        if B % bt == 0 and B // bt >= 2:
            return bt
    for bt in (8, 4, 2, 1):
        if B % bt == 0:
            return bt
    return 1


def geo_localization_net(imgs, w_embed, b_embed):
    # imgs: NCHW (B, 3, 48, 48), matching the PyTorch conv-input convention.
    B, C, H, W = imgs.shape

    # Patchify (cheap glue on the raw 27 KB/image input) directly into
    # 3x3-pool-window token order: token t = (di*3+dj)*64 + (i*8+j) for grid
    # pos (3i+di, 3j+dj), feature order (c, r, s) within each 2x2 patch.
    # NOTE: this reordering is only valid because the synthetic backbone is
    # pointwise per token; a real transformer backbone must see natural order.
    # Cast to bf16 so the MXU matmul is single-pass and the HBM input halves.
    x = imgs.reshape(B, C, OUT_HW, POOL, PATCH, OUT_HW, POOL, PATCH)
    x = x.transpose(0, 3, 6, 2, 5, 1, 4, 7)          # (B, di, dj, i, j, c, r, s)
    x = x.reshape(B, N_TOK, PATCH_DIM).astype(jnp.bfloat16)

    w_bf = w_embed.astype(jnp.bfloat16)              # MXU operands in bf16
    b_f32 = b_embed.astype(jnp.float32)              # bias added in f32

    Bt = _pick_block_b(B)

    out0, out1 = pl.pallas_call(
        _fused_kernel,
        out_shape=(
            jax.ShapeDtypeStruct((B, N_POS, EMBED), jnp.float32),
            jax.ShapeDtypeStruct((B, 1, EMBED), jnp.float32),
        ),
        grid_spec=pltpu.PrefetchScalarGridSpec(
            num_scalar_prefetch=0,
            grid=(B // Bt,),
            in_specs=[
                pl.BlockSpec((Bt, N_TOK, PATCH_DIM), lambda b_: (b_, 0, 0)),
                pl.BlockSpec((PATCH_DIM, EMBED), lambda b_: (0, 0)),
                pl.BlockSpec((1, EMBED), lambda b_: (0, 0)),
            ],
            out_specs=(
                pl.BlockSpec((Bt, N_POS, EMBED), lambda b_: (b_, 0, 0)),
                pl.BlockSpec((Bt, 1, EMBED), lambda b_: (b_, 0, 0)),
            ),
        ),
        compiler_params=pltpu.CompilerParams(
            dimension_semantics=("parallel",),
            vmem_limit_bytes=32 * 1024 * 1024),
    )(x, w_bf, b_f32)

    x0 = out0.reshape(B, OUT_HW, OUT_HW, EMBED)      # (B, 8, 8, 384)
    x1 = out1.reshape(B, EMBED)                      # (B, 384)
    return x0, x1


if __name__ == "__main__":
    key = jax.random.PRNGKey(0)
    k_img, k_w, k_b = jax.random.split(key, 3)

    B = 2
    imgs = jax.random.normal(k_img, (B, IN_CH, IMG_HW, IMG_HW), dtype=jnp.float32)
    # Deterministic synthetic backbone parameters.
    w_embed = jax.random.normal(k_w, (PATCH_DIM, EMBED), dtype=jnp.float32) * 0.1
    b_embed = jax.random.normal(k_b, (1, EMBED), dtype=jnp.float32) * 0.01

    x0, x1 = jax.jit(geo_localization_net)(imgs, w_embed, b_embed)
    jax.block_until_ready((x0, x1))

    assert x0.shape == (B, OUT_HW, OUT_HW, EMBED) and x0.dtype == jnp.float32
    assert x1.shape == (B, EMBED) and x1.dtype == jnp.float32
    assert bool(jnp.all(jnp.isfinite(x0))) and bool(jnp.all(jnp.isfinite(x1)))
    print("KERNEL_OK")
</pallas_src>

<mosaic_0001>
module attributes {stable_mosaic.version = 11 : i64} {
  func.func @_fused_kernel(%arg0: i32, %arg1: memref<1x576x12xbf16, #tpu.memory_space<vmem>>, %arg2: memref<12x384xbf16, #tpu.memory_space<vmem>>, %arg3: memref<1x384xf32, #tpu.memory_space<vmem>>, %arg4: memref<1x64x384xf32, #tpu.memory_space<vmem>>, %arg5: memref<1x1x384xf32, #tpu.memory_space<vmem>>) attributes {dimension_semantics = [#tpu.dimension_semantics<parallel>], iteration_bounds = array<i64: 2>, scalar_prefetch = 0 : i64, scratch_operands = 0 : i64, tpu.core_type = #tpu.core_type<tc>, window_params = [{transform_indices = @transform_0, window_bounds = array<i64: 1, 576, 12>}, {pipeline_mode = #tpu.pipeline_mode<synchronous>, transform_indices = @transform_1, window_bounds = array<i64: 12, 384>}, {pipeline_mode = #tpu.pipeline_mode<synchronous>, transform_indices = @transform_2, window_bounds = array<i64: 1, 384>}, {transform_indices = @transform_3, window_bounds = array<i64: 1, 64, 384>}, {transform_indices = @transform_4, window_bounds = array<i64: 1, 1, 384>}]} {
    %c0 = arith.constant 0 : index
    %c0_0 = arith.constant 0 : index
    %0 = vector.load %arg2[%c0, %c0_0] : memref<12x384xbf16, #tpu.memory_space<vmem>>, vector<12x384xbf16>
    %c0_1 = arith.constant 0 : index
    %c0_2 = arith.constant 0 : index
    %1 = vector.load %arg3[%c0_1, %c0_2] : memref<1x384xf32, #tpu.memory_space<vmem>>, vector<1x384xf32>
    %c0_3 = arith.constant 0 : index
    %c0_4 = arith.constant 0 : index
    %c0_5 = arith.constant 0 : index
    %2 = vector.load %arg1[%c0_3, %c0_4, %c0_5] : memref<1x576x12xbf16, #tpu.memory_space<vmem>>, vector<1x64x12xbf16>
    %3 = vector.shape_cast %2 : vector<1x64x12xbf16> to vector<64x12xbf16>
    %cst = arith.constant dense<0.000000e+00> : vector<64x384xf32>
    %4 = tpu.matmul %3, %0, %cst {dimension_numbers = #tpu.dot_dimension_numbers<[1], [0], [0], [1], [0, 0, 1, 1], [], []>} : vector<64x12xbf16>, vector<12x384xbf16>, vector<64x384xf32> -> vector<64x384xf32>
    %5 = vector.broadcast %1 : vector<1x384xf32> to vector<64x384xf32>
    %6 = arith.addf %4, %5 : vector<64x384xf32>
    %7 = vector.shape_cast %6 : vector<64x384xf32> to vector<1x64x384xf32>
    %8 = arith.mulf %7, %7 : vector<1x64x384xf32>
    %cst_6 = arith.constant dense<0.000000e+00> : vector<1x64xf32>
    %9 = vector.multi_reduction <add>, %8, %cst_6 [2] : vector<1x64x384xf32> to vector<1x64xf32>
    %10 = vector.shape_cast %9 : vector<1x64xf32> to vector<1x64x1xf32>
    %cst_7 = arith.constant 1.000000e-24 : f32
    %11 = vector.broadcast %cst_7 : f32 to vector<1x64x1xf32>
    %12 = arith.maximumf %10, %11 : vector<1x64x1xf32>
    %13 = math.rsqrt %12 : vector<1x64x1xf32>
    %14 = vector.broadcast %13 : vector<1x64x1xf32> to vector<1x64x384xf32>
    %15 = arith.mulf %7, %14 : vector<1x64x384xf32>
    %cst_8 = arith.constant 9.99999997E-7 : f32
    %16 = vector.broadcast %cst_8 : f32 to vector<1x64x384xf32>
    %17 = arith.maximumf %15, %16 : vector<1x64x384xf32>
    %18 = arith.mulf %17, %17 : vector<1x64x384xf32>
    %19 = arith.mulf %18, %17 : vector<1x64x384xf32>
    %cst_9 = arith.constant dense<0.000000e+00> : vector<1x384xf32>
    %20 = vector.multi_reduction <add>, %19, %cst_9 [1] : vector<1x64x384xf32> to vector<1x384xf32>
    %21 = vector.shape_cast %20 : vector<1x384xf32> to vector<1x1x384xf32>
    %c0_10 = arith.constant 0 : index
    %c64 = arith.constant 64 : index
    %c0_11 = arith.constant 0 : index
    %22 = vector.load %arg1[%c0_10, %c64, %c0_11] : memref<1x576x12xbf16, #tpu.memory_space<vmem>>, vector<1x64x12xbf16>
    %23 = vector.shape_cast %22 : vector<1x64x12xbf16> to vector<64x12xbf16>
    %cst_12 = arith.constant dense<0.000000e+00> : vector<64x384xf32>
    %24 = tpu.matmul %23, %0, %cst_12 {dimension_numbers = #tpu.dot_dimension_numbers<[1], [0], [0], [1], [0, 0, 1, 1], [], []>} : vector<64x12xbf16>, vector<12x384xbf16>, vector<64x384xf32> -> vector<64x384xf32>
    %25 = vector.broadcast %1 : vector<1x384xf32> to vector<64x384xf32>
    %26 = arith.addf %24, %25 : vector<64x384xf32>
    %27 = vector.shape_cast %26 : vector<64x384xf32> to vector<1x64x384xf32>
    %28 = arith.maximumf %7, %27 : vector<1x64x384xf32>
    %29 = arith.mulf %27, %27 : vector<1x64x384xf32>
    %cst_13 = arith.constant dense<0.000000e+00> : vector<1x64xf32>
    %30 = vector.multi_reduction <add>, %29, %cst_13 [2] : vector<1x64x384xf32> to vector<1x64xf32>
    %31 = vector.shape_cast %30 : vector<1x64xf32> to vector<1x64x1xf32>
    %cst_14 = arith.constant 1.000000e-24 : f32
    %32 = vector.broadcast %cst_14 : f32 to vector<1x64x1xf32>
    %33 = arith.maximumf %31, %32 : vector<1x64x1xf32>
    %34 = math.rsqrt %33 : vector<1x64x1xf32>
    %35 = vector.broadcast %34 : vector<1x64x1xf32> to vector<1x64x384xf32>
    %36 = arith.mulf %27, %35 : vector<1x64x384xf32>
    %cst_15 = arith.constant 9.99999997E-7 : f32
    %37 = vector.broadcast %cst_15 : f32 to vector<1x64x384xf32>
    %38 = arith.maximumf %36, %37 : vector<1x64x384xf32>
    %39 = arith.mulf %38, %38 : vector<1x64x384xf32>
    %40 = arith.mulf %39, %38 : vector<1x64x384xf32>
    %cst_16 = arith.constant dense<0.000000e+00> : vector<1x384xf32>
    %41 = vector.multi_reduction <add>, %40, %cst_16 [1] : vector<1x64x384xf32> to vector<1x384xf32>
    %42 = vector.shape_cast %41 : vector<1x384xf32> to vector<1x1x384xf32>
    %43 = arith.addf %21, %42 : vector<1x1x384xf32>
    %c0_17 = arith.constant 0 : index
    %c128 = arith.constant 128 : index
    %c0_18 = arith.constant 0 : index
    %44 = vector.load %arg1[%c0_17, %c128, %c0_18] : memref<1x576x12xbf16, #tpu.memory_space<vmem>>, vector<1x64x12xbf16>
    %45 = vector.shape_cast %44 : vector<1x64x12xbf16> to vector<64x12xbf16>
    %cst_19 = arith.constant dense<0.000000e+00> : vector<64x384xf32>
    %46 = tpu.matmul %45, %0, %cst_19 {dimension_numbers = #tpu.dot_dimension_numbers<[1], [0], [0], [1], [0, 0, 1, 1], [], []>} : vector<64x12xbf16>, vector<12x384xbf16>, vector<64x384xf32> -> vector<64x384xf32>
    %47 = vector.broadcast %1 : vector<1x384xf32> to vector<64x384xf32>
    %48 = arith.addf %46, %47 : vector<64x384xf32>
    %49 = vector.shape_cast %48 : vector<64x384xf32> to vector<1x64x384xf32>
    %50 = arith.maximumf %28, %49 : vector<1x64x384xf32>
    %51 = arith.mulf %49, %49 : vector<1x64x384xf32>
    %cst_20 = arith.constant dense<0.000000e+00> : vector<1x64xf32>
    %52 = vector.multi_reduction <add>, %51, %cst_20 [2] : vector<1x64x384xf32> to vector<1x64xf32>
    %53 = vector.shape_cast %52 : vector<1x64xf32> to vector<1x64x1xf32>
    %cst_21 = arith.constant 1.000000e-24 : f32
    %54 = vector.broadcast %cst_21 : f32 to vector<1x64x1xf32>
    %55 = arith.maximumf %53, %54 : vector<1x64x1xf32>
    %56 = math.rsqrt %55 : vector<1x64x1xf32>
    %57 = vector.broadcast %56 : vector<1x64x1xf32> to vector<1x64x384xf32>
    %58 = arith.mulf %49, %57 : vector<1x64x384xf32>
    %cst_22 = arith.constant 9.99999997E-7 : f32
    %59 = vector.broadcast %cst_22 : f32 to vector<1x64x384xf32>
    %60 = arith.maximumf %58, %59 : vector<1x64x384xf32>
    %61 = arith.mulf %60, %60 : vector<1x64x384xf32>
    %62 = arith.mulf %61, %60 : vector<1x64x384xf32>
    %cst_23 = arith.constant dense<0.000000e+00> : vector<1x384xf32>
    %63 = vector.multi_reduction <add>, %62, %cst_23 [1] : vector<1x64x384xf32> to vector<1x384xf32>
    %64 = vector.shape_cast %63 : vector<1x384xf32> to vector<1x1x384xf32>
    %65 = arith.addf %43, %64 : vector<1x1x384xf32>
    %c0_24 = arith.constant 0 : index
    %c192 = arith.constant 192 : index
    %c0_25 = arith.constant 0 : index
    %66 = vector.load %arg1[%c0_24, %c192, %c0_25] : memref<1x576x12xbf16, #tpu.memory_space<vmem>>, vector<1x64x12xbf16>
    %67 = vector.shape_cast %66 : vector<1x64x12xbf16> to vector<64x12xbf16>
    %cst_26 = arith.constant dense<0.000000e+00> : vector<64x384xf32>
    %68 = tpu.matmul %67, %0, %cst_26 {dimension_numbers = #tpu.dot_dimension_numbers<[1], [0], [0], [1], [0, 0, 1, 1], [], []>} : vector<64x12xbf16>, vector<12x384xbf16>, vector<64x384xf32> -> vector<64x384xf32>
    %69 = vector.broadcast %1 : vector<1x384xf32> to vector<64x384xf32>
    %70 = arith.addf %68, %69 : vector<64x384xf32>
    %71 = vector.shape_cast %70 : vector<64x384xf32> to vector<1x64x384xf32>
    %72 = arith.maximumf %50, %71 : vector<1x64x384xf32>
    %73 = arith.mulf %71, %71 : vector<1x64x384xf32>
    %cst_27 = arith.constant dense<0.000000e+00> : vector<1x64xf32>
    %74 = vector.multi_reduction <add>, %73, %cst_27 [2] : vector<1x64x384xf32> to vector<1x64xf32>
    %75 = vector.shape_cast %74 : vector<1x64xf32> to vector<1x64x1xf32>
    %cst_28 = arith.constant 1.000000e-24 : f32
    %76 = vector.broadcast %cst_28 : f32 to vector<1x64x1xf32>
    %77 = arith.maximumf %75, %76 : vector<1x64x1xf32>
    %78 = math.rsqrt %77 : vector<1x64x1xf32>
    %79 = vector.broadcast %78 : vector<1x64x1xf32> to vector<1x64x384xf32>
    %80 = arith.mulf %71, %79 : vector<1x64x384xf32>
    %cst_29 = arith.constant 9.99999997E-7 : f32
    %81 = vector.broadcast %cst_29 : f32 to vector<1x64x384xf32>
    %82 = arith.maximumf %80, %81 : vector<1x64x384xf32>
    %83 = arith.mulf %82, %82 : vector<1x64x384xf32>
    %84 = arith.mulf %83, %82 : vector<1x64x384xf32>
    %cst_30 = arith.constant dense<0.000000e+00> : vector<1x384xf32>
    %85 = vector.multi_reduction <add>, %84, %cst_30 [1] : vector<1x64x384xf32> to vector<1x384xf32>
    %86 = vector.shape_cast %85 : vector<1x384xf32> to vector<1x1x384xf32>
    %87 = arith.addf %65, %86 : vector<1x1x384xf32>
    %c0_31 = arith.constant 0 : index
    %c256 = arith.constant 256 : index
    %c0_32 = arith.constant 0 : index
    %88 = vector.load %arg1[%c0_31, %c256, %c0_32] : memref<1x576x12xbf16, #tpu.memory_space<vmem>>, vector<1x64x12xbf16>
    %89 = vector.shape_cast %88 : vector<1x64x12xbf16> to vector<64x12xbf16>
    %cst_33 = arith.constant dense<0.000000e+00> : vector<64x384xf32>
    %90 = tpu.matmul %89, %0, %cst_33 {dimension_numbers = #tpu.dot_dimension_numbers<[1], [0], [0], [1], [0, 0, 1, 1], [], []>} : vector<64x12xbf16>, vector<12x384xbf16>, vector<64x384xf32> -> vector<64x384xf32>
    %91 = vector.broadcast %1 : vector<1x384xf32> to vector<64x384xf32>
    %92 = arith.addf %90, %91 : vector<64x384xf32>
    %93 = vector.shape_cast %92 : vector<64x384xf32> to vector<1x64x384xf32>
    %94 = arith.maximumf %72, %93 : vector<1x64x384xf32>
    %95 = arith.mulf %93, %93 : vector<1x64x384xf32>
    %cst_34 = arith.constant dense<0.000000e+00> : vector<1x64xf32>
    %96 = vector.multi_reduction <add>, %95, %cst_34 [2] : vector<1x64x384xf32> to vector<1x64xf32>
    %97 = vector.shape_cast %96 : vector<1x64xf32> to vector<1x64x1xf32>
    %cst_35 = arith.constant 1.000000e-24 : f32
    %98 = vector.broadcast %cst_35 : f32 to vector<1x64x1xf32>
    %99 = arith.maximumf %97, %98 : vector<1x64x1xf32>
    %100 = math.rsqrt %99 : vector<1x64x1xf32>
    %101 = vector.broadcast %100 : vector<1x64x1xf32> to vector<1x64x384xf32>
    %102 = arith.mulf %93, %101 : vector<1x64x384xf32>
    %cst_36 = arith.constant 9.99999997E-7 : f32
    %103 = vector.broadcast %cst_36 : f32 to vector<1x64x384xf32>
    %104 = arith.maximumf %102, %103 : vector<1x64x384xf32>
    %105 = arith.mulf %104, %104 : vector<1x64x384xf32>
    %106 = arith.mulf %105, %104 : vector<1x64x384xf32>
    %cst_37 = arith.constant dense<0.000000e+00> : vector<1x384xf32>
    %107 = vector.multi_reduction <add>, %106, %cst_37 [1] : vector<1x64x384xf32> to vector<1x384xf32>
    %108 = vector.shape_cast %107 : vector<1x384xf32> to vector<1x1x384xf32>
    %109 = arith.addf %87, %108 : vector<1x1x384xf32>
    %c0_38 = arith.constant 0 : index
    %c320 = arith.constant 320 : index
    %c0_39 = arith.constant 0 : index
    %110 = vector.load %arg1[%c0_38, %c320, %c0_39] : memref<1x576x12xbf16, #tpu.memory_space<vmem>>, vector<1x64x12xbf16>
    %111 = vector.shape_cast %110 : vector<1x64x12xbf16> to vector<64x12xbf16>
    %cst_40 = arith.constant dense<0.000000e+00> : vector<64x384xf32>
    %112 = tpu.matmul %111, %0, %cst_40 {dimension_numbers = #tpu.dot_dimension_numbers<[1], [0], [0], [1], [0, 0, 1, 1], [], []>} : vector<64x12xbf16>, vector<12x384xbf16>, vector<64x384xf32> -> vector<64x384xf32>
    %113 = vector.broadcast %1 : vector<1x384xf32> to vector<64x384xf32>
    %114 = arith.addf %112, %113 : vector<64x384xf32>
    %115 = vector.shape_cast %114 : vector<64x384xf32> to vector<1x64x384xf32>
    %116 = arith.maximumf %94, %115 : vector<1x64x384xf32>
    %117 = arith.mulf %115, %115 : vector<1x64x384xf32>
    %cst_41 = arith.constant dense<0.000000e+00> : vector<1x64xf32>
    %118 = vector.multi_reduction <add>, %117, %cst_41 [2] : vector<1x64x384xf32> to vector<1x64xf32>
    %119 = vector.shape_cast %118 : vector<1x64xf32> to vector<1x64x1xf32>
    %cst_42 = arith.constant 1.000000e-24 : f32
    %120 = vector.broadcast %cst_42 : f32 to vector<1x64x1xf32>
    %121 = arith.maximumf %119, %120 : vector<1x64x1xf32>
    %122 = math.rsqrt %121 : vector<1x64x1xf32>
    %123 = vector.broadcast %122 : vector<1x64x1xf32> to vector<1x64x384xf32>
    %124 = arith.mulf %115, %123 : vector<1x64x384xf32>
    %cst_43 = arith.constant 9.99999997E-7 : f32
    %125 = vector.broadcast %cst_43 : f32 to vector<1x64x384xf32>
    %126 = arith.maximumf %124, %125 : vector<1x64x384xf32>
    %127 = arith.mulf %126, %126 : vector<1x64x384xf32>
    %128 = arith.mulf %127, %126 : vector<1x64x384xf32>
    %cst_44 = arith.constant dense<0.000000e+00> : vector<1x384xf32>
    %129 = vector.multi_reduction <add>, %128, %cst_44 [1] : vector<1x64x384xf32> to vector<1x384xf32>
    %130 = vector.shape_cast %129 : vector<1x384xf32> to vector<1x1x384xf32>
    %131 = arith.addf %109, %130 : vector<1x1x384xf32>
    %c0_45 = arith.constant 0 : index
    %c384 = arith.constant 384 : index
    %c0_46 = arith.constant 0 : index
    %132 = vector.load %arg1[%c0_45, %c384, %c0_46] : memref<1x576x12xbf16, #tpu.memory_space<vmem>>, vector<1x64x12xbf16>
    %133 = vector.shape_cast %132 : vector<1x64x12xbf16> to vector<64x12xbf16>
    %cst_47 = arith.constant dense<0.000000e+00> : vector<64x384xf32>
    %134 = tpu.matmul %133, %0, %cst_47 {dimension_numbers = #tpu.dot_dimension_numbers<[1], [0], [0], [1], [0, 0, 1, 1], [], []>} : vector<64x12xbf16>, vector<12x384xbf16>, vector<64x384xf32> -> vector<64x384xf32>
    %135 = vector.broadcast %1 : vector<1x384xf32> to vector<64x384xf32>
    %136 = arith.addf %134, %135 : vector<64x384xf32>
    %137 = vector.shape_cast %136 : vector<64x384xf32> to vector<1x64x384xf32>
    %138 = arith.maximumf %116, %137 : vector<1x64x384xf32>
    %139 = arith.mulf %137, %137 : vector<1x64x384xf32>
    %cst_48 = arith.constant dense<0.000000e+00> : vector<1x64xf32>
    %140 = vector.multi_reduction <add>, %139, %cst_48 [2] : vector<1x64x384xf32> to vector<1x64xf32>
    %141 = vector.shape_cast %140 : vector<1x64xf32> to vector<1x64x1xf32>
    %cst_49 = arith.constant 1.000000e-24 : f32
    %142 = vector.broadcast %cst_49 : f32 to vector<1x64x1xf32>
    %143 = arith.maximumf %141, %142 : vector<1x64x1xf32>
    %144 = math.rsqrt %143 : vector<1x64x1xf32>
    %145 = vector.broadcast %144 : vector<1x64x1xf32> to vector<1x64x384xf32>
    %146 = arith.mulf %137, %145 : vector<1x64x384xf32>
    %cst_50 = arith.constant 9.99999997E-7 : f32
    %147 = vector.broadcast %cst_50 : f32 to vector<1x64x384xf32>
    %148 = arith.maximumf %146, %147 : vector<1x64x384xf32>
    %149 = arith.mulf %148, %148 : vector<1x64x384xf32>
    %150 = arith.mulf %149, %148 : vector<1x64x384xf32>
    %cst_51 = arith.constant dense<0.000000e+00> : vector<1x384xf32>
    %151 = vector.multi_reduction <add>, %150, %cst_51 [1] : vector<1x64x384xf32> to vector<1x384xf32>
    %152 = vector.shape_cast %151 : vector<1x384xf32> to vector<1x1x384xf32>
    %153 = arith.addf %131, %152 : vector<1x1x384xf32>
    %c0_52 = arith.constant 0 : index
    %c448 = arith.constant 448 : index
    %c0_53 = arith.constant 0 : index
    %154 = vector.load %arg1[%c0_52, %c448, %c0_53] : memref<1x576x12xbf16, #tpu.memory_space<vmem>>, vector<1x64x12xbf16>
    %155 = vector.shape_cast %154 : vector<1x64x12xbf16> to vector<64x12xbf16>
    %cst_54 = arith.constant dense<0.000000e+00> : vector<64x384xf32>
    %156 = tpu.matmul %155, %0, %cst_54 {dimension_numbers = #tpu.dot_dimension_numbers<[1], [0], [0], [1], [0, 0, 1, 1], [], []>} : vector<64x12xbf16>, vector<12x384xbf16>, vector<64x384xf32> -> vector<64x384xf32>
    %157 = vector.broadcast %1 : vector<1x384xf32> to vector<64x384xf32>
    %158 = arith.addf %156, %157 : vector<64x384xf32>
    %159 = vector.shape_cast %158 : vector<64x384xf32> to vector<1x64x384xf32>
    %160 = arith.maximumf %138, %159 : vector<1x64x384xf32>
    %161 = arith.mulf %159, %159 : vector<1x64x384xf32>
    %cst_55 = arith.constant dense<0.000000e+00> : vector<1x64xf32>
    %162 = vector.multi_reduction <add>, %161, %cst_55 [2] : vector<1x64x384xf32> to vector<1x64xf32>
    %163 = vector.shape_cast %162 : vector<1x64xf32> to vector<1x64x1xf32>
    %cst_56 = arith.constant 1.000000e-24 : f32
    %164 = vector.broadcast %cst_56 : f32 to vector<1x64x1xf32>
    %165 = arith.maximumf %163, %164 : vector<1x64x1xf32>
    %166 = math.rsqrt %165 : vector<1x64x1xf32>
    %167 = vector.broadcast %166 : vector<1x64x1xf32> to vector<1x64x384xf32>
    %168 = arith.mulf %159, %167 : vector<1x64x384xf32>
    %cst_57 = arith.constant 9.99999997E-7 : f32
    %169 = vector.broadcast %cst_57 : f32 to vector<1x64x384xf32>
    %170 = arith.maximumf %168, %169 : vector<1x64x384xf32>
    %171 = arith.mulf %170, %170 : vector<1x64x384xf32>
    %172 = arith.mulf %171, %170 : vector<1x64x384xf32>
    %cst_58 = arith.constant dense<0.000000e+00> : vector<1x384xf32>
    %173 = vector.multi_reduction <add>, %172, %cst_58 [1] : vector<1x64x384xf32> to vector<1x384xf32>
    %174 = vector.shape_cast %173 : vector<1x384xf32> to vector<1x1x384xf32>
    %175 = arith.addf %153, %174 : vector<1x1x384xf32>
    %c0_59 = arith.constant 0 : index
    %c512 = arith.constant 512 : index
    %c0_60 = arith.constant 0 : index
    %176 = vector.load %arg1[%c0_59, %c512, %c0_60] : memref<1x576x12xbf16, #tpu.memory_space<vmem>>, vector<1x64x12xbf16>
    %177 = vector.shape_cast %176 : vector<1x64x12xbf16> to vector<64x12xbf16>
    %cst_61 = arith.constant dense<0.000000e+00> : vector<64x384xf32>
    %178 = tpu.matmul %177, %0, %cst_61 {dimension_numbers = #tpu.dot_dimension_numbers<[1], [0], [0], [1], [0, 0, 1, 1], [], []>} : vector<64x12xbf16>, vector<12x384xbf16>, vector<64x384xf32> -> vector<64x384xf32>
    %179 = vector.broadcast %1 : vector<1x384xf32> to vector<64x384xf32>
    %180 = arith.addf %178, %179 : vector<64x384xf32>
    %181 = vector.shape_cast %180 : vector<64x384xf32> to vector<1x64x384xf32>
    %182 = arith.maximumf %160, %181 : vector<1x64x384xf32>
    %183 = arith.mulf %181, %181 : vector<1x64x384xf32>
    %cst_62 = arith.constant dense<0.000000e+00> : vector<1x64xf32>
    %184 = vector.multi_reduction <add>, %183, %cst_62 [2] : vector<1x64x384xf32> to vector<1x64xf32>
    %185 = vector.shape_cast %184 : vector<1x64xf32> to vector<1x64x1xf32>
    %cst_63 = arith.constant 1.000000e-24 : f32
    %186 = vector.broadcast %cst_63 : f32 to vector<1x64x1xf32>
    %187 = arith.maximumf %185, %186 : vector<1x64x1xf32>
    %188 = math.rsqrt %187 : vector<1x64x1xf32>
    %189 = vector.broadcast %188 : vector<1x64x1xf32> to vector<1x64x384xf32>
    %190 = arith.mulf %181, %189 : vector<1x64x384xf32>
    %cst_64 = arith.constant 9.99999997E-7 : f32
    %191 = vector.broadcast %cst_64 : f32 to vector<1x64x384xf32>
    %192 = arith.maximumf %190, %191 : vector<1x64x384xf32>
    %193 = arith.mulf %192, %192 : vector<1x64x384xf32>
    %194 = arith.mulf %193, %192 : vector<1x64x384xf32>
    %cst_65 = arith.constant dense<0.000000e+00> : vector<1x384xf32>
    %195 = vector.multi_reduction <add>, %194, %cst_65 [1] : vector<1x64x384xf32> to vector<1x384xf32>
    %196 = vector.shape_cast %195 : vector<1x384xf32> to vector<1x1x384xf32>
    %197 = arith.addf %175, %196 : vector<1x1x384xf32>
    %198 = arith.mulf %182, %182 : vector<1x64x384xf32>
    %cst_66 = arith.constant dense<0.000000e+00> : vector<1x64xf32>
    %199 = vector.multi_reduction <add>, %198, %cst_66 [2] : vector<1x64x384xf32> to vector<1x64xf32>
    %200 = vector.shape_cast %199 : vector<1x64xf32> to vector<1x64x1xf32>
    %cst_67 = arith.constant 1.000000e-24 : f32
    %201 = vector.broadcast %cst_67 : f32 to vector<1x64x1xf32>
    %202 = arith.maximumf %200, %201 : vector<1x64x1xf32>
    %203 = math.rsqrt %202 : vector<1x64x1xf32>
    %204 = vector.broadcast %203 : vector<1x64x1xf32> to vector<1x64x384xf32>
    %205 = arith.mulf %182, %204 : vector<1x64x384xf32>
    %c0_68 = arith.constant 0 : index
    %c0_69 = arith.constant 0 : index
    %c0_70 = arith.constant 0 : index
    %206 = vector.load %arg4[%c0_68, %c0_69, %c0_70] : memref<1x64x384xf32, #tpu.memory_space<vmem>>, vector<1x64x384xf32>
    tpu.vector_store %arg4[%c0_68, %c0_69, %c0_70], %205 {strides = array<i32>} : memref<1x64x384xf32, #tpu.memory_space<vmem>>, vector<1x64x384xf32>,
    %cst_71 = arith.constant 0.00173611112 : f32
    %207 = vector.broadcast %cst_71 : f32 to vector<1x1x384xf32>
    %208 = arith.mulf %197, %207 : vector<1x1x384xf32>
    %209 = math.log %208 : vector<1x1x384xf32>
    %cst_72 = arith.constant 0.333333343 : f32
    %210 = vector.broadcast %cst_72 : f32 to vector<1x1x384xf32>
    %211 = arith.mulf %209, %210 : vector<1x1x384xf32>
    %212 = math.exp %211 : vector<1x1x384xf32>
    %213 = arith.mulf %212, %212 : vector<1x1x384xf32>
    %cst_73 = arith.constant dense<0.000000e+00> : vector<1x1xf32>
    %214 = vector.multi_reduction <add>, %213, %cst_73 [2] : vector<1x1x384xf32> to vector<1x1xf32>
    %215 = vector.shape_cast %214 : vector<1x1xf32> to vector<1x1x1xf32>
    %cst_74 = arith.constant 1.000000e-24 : f32
    %216 = vector.broadcast %cst_74 : f32 to vector<1x1x1xf32>
    %217 = arith.maximumf %215, %216 : vector<1x1x1xf32>
    %218 = math.rsqrt %217 : vector<1x1x1xf32>
    %219 = vector.broadcast %218 : vector<1x1x1xf32> to vector<1x1x384xf32>
    %220 = arith.mulf %212, %219 : vector<1x1x384xf32>
    %c0_75 = arith.constant 0 : index
    %c0_76 = arith.constant 0 : index
    %c0_77 = arith.constant 0 : index
    %221 = vector.load %arg5[%c0_75, %c0_76, %c0_77] : memref<1x1x384xf32, #tpu.memory_space<vmem>>, vector<1x1x384xf32>
    tpu.vector_store %arg5[%c0_75, %c0_76, %c0_77], %220 {strides = array<i32>} : memref<1x1x384xf32, #tpu.memory_space<vmem>>, vector<1x1x384xf32>,
    return
  }
  func.func @transform_0(%arg0: i32) -> (i32, i32, i32) {
    %c0_i32 = arith.constant 0 : i32
    %c0_i32_0 = arith.constant 0 : i32
    %c0_i32_1 = arith.constant 0 : i32
    return %arg0, %c0_i32, %c0_i32_0 : i32, i32, i32
  }
  func.func @transform_1(%arg0: i32) -> (i32, i32) {
    %c0_i32 = arith.constant 0 : i32
    %c0_i32_0 = arith.constant 0 : i32
    %c0_i32_1 = arith.constant 0 : i32
    return %c0_i32, %c0_i32_0 : i32, i32
  }
  func.func @transform_2(%arg0: i32) -> (i32, i32) {
    %c0_i32 = arith.constant 0 : i32
    %c0_i32_0 = arith.constant 0 : i32
    %c0_i32_1 = arith.constant 0 : i32
    return %c0_i32, %c0_i32_0 : i32, i32
  }
  func.func @transform_3(%arg0: i32) -> (i32, i32, i32) {
    %c0_i32 = arith.constant 0 : i32
    %c0_i32_0 = arith.constant 0 : i32
    %c0_i32_1 = arith.constant 0 : i32
    return %arg0, %c0_i32, %c0_i32_0 : i32, i32, i32
  }
  func.func @transform_4(%arg0: i32) -> (i32, i32, i32) {
    %c0_i32 = arith.constant 0 : i32
    %c0_i32_0 = arith.constant 0 : i32
    %c0_i32_1 = arith.constant 0 : i32
    return %arg0, %c0_i32, %c0_i32_0 : i32, i32, i32
  }
}

</mosaic_0001>

<llo_original>
// kernel: geo_localization_net.1
$region0: #{geo_localization_net.1}
  #allocation0 [shape = 'u32[]', space=smem, size = 0x4, offset = 0x4, fixed_abs, tag = 'smem constant byte address 0x4 - core index']
  #allocation1 [shape = 'u32[144,128]{1,0:T(1,128)}', space=vmem, size = 0x12000, scoped, tag = 'internal scratch']
  %s0 = inlined_call_operand.vmem [shape: bf16[2,576,12], index: 0, kind: input, shape index: {}]
  %s1 = inlined_call_operand.vmem [shape: bf16[12,384], index: 1, kind: input, shape index: {}]
  %s2 = inlined_call_operand.vmem [shape: f32[1,384], index: 2, kind: input, shape index: {}]
  %s3 = inlined_call_operand.hbm [shape: f32[2,64,384], index: 3, kind: output, shape index: {0}]
  %s4 = inlined_call_operand.vmem [shape: f32[2,1,384], index: 4, kind: output, shape index: {1}]
  %5 = xla_tuple %s3, %s4
  %s6 = sld [smem:[#allocation0]]
  $region53: #{geo_localization_net.1} parent=0
    _
  %s8 = ssub.s32 1, %s6
  %s9 = scalar_select 0, %s8, %s6
  $region1: #{geo_localization_net.1} parent=0
    #allocation2 [shape = 'u8[196608]{0}', space=vmem, size = 0x30000, scoped, tag = 'output window, operand 0']
    #allocation3 [shape = 's32[2]{0}', space=sflag, size = 0x8, scoped, tag = 'scoped memory for geo_localization_net.1']
    %10 = vsyncpa [#allocation3], 0
    %s11 = scalar_lea.sflag [#allocation3], 1
    %12 = vsyncpa %s11, 0
    loop: start=0, step=1, limit=4
    $region2: #{geo_localization_net.1} parent=1 // loop_pre_header
      _
    $region3: #{geo_localization_net.1} parent=1 // loop_header
      %s14 = sphi 0, %s18
      %p15 = scmp.ge.s32.totalorder %s14, 4
      %s24 = sphi 0, %s26
      %s27 = sphi 0, %s24
      %s28 = sphi 0, %s27
      %s44 = sphi 0, %s28
      %s48 = sphi 0, %s48
      %s50 = sphi 0, %s48
      %s51 = sphi 0, %s50
      %s65 = sphi 0, %s51
      %s69 = sphi 0, %s69
      %s71 = sphi 0, %s69
      %s72 = sphi 0, %s71
      %s86 = sphi 0, %s72
      %s92 = sphi 0, %s94
      %s95 = sphi 0, %s92
      %s96 = sphi 0, %s95
      %s112 = sphi 0, %s96
      %s118 = sphi 0, %s120
      %s121 = sphi 0, %s118
      %s122 = sphi 0, %s121
      %s138 = sphi 0, %s122
    $region4: #{geo_localization_net.1} parent=1 // loop_header_branch
      %17 = sbr.rel (%p15) target = $region8
    $region5: #{geo_localization_net.1} parent=1 // loop_body
      %s19 = ssub.s32 %s14, 1
      %s20 = ssub.s32 %s14, 2
      %s21 = sadd.s32 %s14, 1
      %s22 = ssub.s32 %s14, %s21
      %p23 = scmp.eq.s32.totalorder %s22, 0
      %s25 = sadd.s32 %s24, 1
      %s26 = scalar_select %p23, %s24, %s25
      %p29 = pneg %p23
      %p30 = scmp.eq.s32.totalorder %s14, 1
      %p31 = por %p29, %p30
      %p32 = scmp.ne.s32.totalorder %s24, %s27
      %p33 = scmp.eq.s32.totalorder %s14, 0
      %p34 = por %p32, %p33
      %p35 = scmp.ne.s32.totalorder %s24, %s27
      %p36 = scmp.eq.s32.totalorder %s19, 1
      %p37 = por %p35, %p36
      %p38 = scmp.ne.s32.totalorder %s27, %s28
      %p39 = scmp.eq.s32.totalorder %s19, 0
      %p40 = por %p38, %p39
      %p41 = scmp.ne.s32.totalorder %s27, %s28
      %p42 = scmp.eq.s32.totalorder %s20, 1
      %p43 = por %p41, %p42
      %p45 = scmp.ne.s32.totalorder %s28, %s44
      %p46 = scmp.eq.s32.totalorder %s20, 0
      %p47 = por %p45, %p46
      %s49 = sadd.s32 %s48, 1
      %p52 = scmp.eq.s32.totalorder %s14, 1
      %p53 = scmp.ne.s32.totalorder %s48, %s50
      %p54 = scmp.eq.s32.totalorder %s14, 0
      %p55 = por %p53, %p54
      %p56 = scmp.ne.s32.totalorder %s48, %s50
      %p57 = scmp.eq.s32.totalorder %s19, 1
      %p58 = por %p56, %p57
      %p59 = scmp.ne.s32.totalorder %s50, %s51
      %p60 = scmp.eq.s32.totalorder %s19, 0
      %p61 = por %p59, %p60
      %p62 = scmp.ne.s32.totalorder %s50, %s51
      %p63 = scmp.eq.s32.totalorder %s20, 1
      %p64 = por %p62, %p63
      %p66 = scmp.ne.s32.totalorder %s51, %s65
      %p67 = scmp.eq.s32.totalorder %s20, 0
      %p68 = por %p66, %p67
      %s70 = sadd.s32 %s69, 1
      %p73 = scmp.eq.s32.totalorder %s14, 1
      %p74 = scmp.ne.s32.totalorder %s69, %s71
      %p75 = scmp.eq.s32.totalorder %s14, 0
      %p76 = por %p74, %p75
      %p77 = scmp.ne.s32.totalorder %s69, %s71
      %p78 = scmp.eq.s32.totalorder %s19, 1
      %p79 = por %p77, %p78
      %p80 = scmp.ne.s32.totalorder %s71, %s72
      %p81 = scmp.eq.s32.totalorder %s19, 0
      %p82 = por %p80, %p81
      %p83 = scmp.ne.s32.totalorder %s71, %s72
      %p84 = scmp.eq.s32.totalorder %s20, 1
      %p85 = por %p83, %p84
      %p87 = scmp.ne.s32.totalorder %s72, %s86
      %p88 = scmp.eq.s32.totalorder %s20, 0
      %p89 = por %p87, %p88
      %s90 = ssub.s32 %s14, %s21
      %p91 = scmp.eq.s32.totalorder %s90, 0
      %s93 = sadd.s32 %s92, 1
      %s94 = scalar_select %p91, %s92, %s93
      %p97 = pneg %p91
      %p98 = scmp.eq.s32.totalorder %s14, 1
      %p99 = por %p97, %p98
      %p100 = scmp.ne.s32.totalorder %s92, %s95
      %p101 = scmp.eq.s32.totalorder %s14, 0
      %p102 = por %p100, %p101
      %p103 = scmp.ne.s32.totalorder %s92, %s95
      %p104 = scmp.eq.s32.totalorder %s19, 1
      %p105 = por %p103, %p104
      %p106 = scmp.ne.s32.totalorder %s95, %s96
      %p107 = scmp.eq.s32.totalorder %s19, 0
      %p108 = por %p106, %p107
      %p109 = scmp.ne.s32.totalorder %s95, %s96
      %p110 = scmp.eq.s32.totalorder %s20, 1
      %p111 = por %p109, %p110
      %p113 = scmp.ne.s32.totalorder %s96, %s112
      %p114 = scmp.eq.s32.totalorder %s20, 0
      %p115 = por %p113, %p114
      %s116 = ssub.s32 %s14, %s21
      %p117 = scmp.eq.s32.totalorder %s116, 0
      %s119 = sadd.s32 %s118, 1
      %s120 = scalar_select %p117, %s118, %s119
      %p123 = pneg %p117
      %p124 = scmp.eq.s32.totalorder %s14, 1
      %p125 = por %p123, %p124
      %p126 = scmp.ne.s32.totalorder %s118, %s121
      %p127 = scmp.eq.s32.totalorder %s14, 0
      %p128 = por %p126, %p127
      %p129 = scmp.ne.s32.totalorder %s118, %s121
      %p130 = scmp.eq.s32.totalorder %s19, 1
      %p131 = por %p129, %p130
      %p132 = scmp.ne.s32.totalorder %s121, %s122
      %p133 = scmp.eq.s32.totalorder %s19, 0
      %p134 = por %p132, %p133
      %p135 = scmp.ne.s32.totalorder %s121, %s122
      %p136 = scmp.eq.s32.totalorder %s20, 1
      %p137 = por %p135, %p136
      %p139 = scmp.ne.s32.totalorder %s122, %s138
      %p140 = scmp.eq.s32.totalorder %s20, 0
      %p141 = por %p139, %p140
      %p142 = scmp.le.s32.totalorder 1, %s14
      %p143 = scmp.lt.s32.totalorder %s14, 3
      %p144 = pnand %p142, %p143
      %p145 = pneg %p144
      // Predicated region
      $region9: #{geo_localization_net.1} parent=5 // pred_check
        _
      $region10: #{geo_localization_net.1} parent=5 // pred_check_branch
        %147 = sbr.rel (%p144) target = $region12
      $region11: #{geo_localization_net.1} parent=5 // pred_region
        %s148 = ssub.s32 %s14, 1
        // Predicated region
        $region13: #{geo_localization_net.1} parent=11 // pred_check
          %p149 = pneg %p61
        $region14: #{geo_localization_net.1} parent=11 // pred_check_branch
          %151 = sbr.rel (%p149) target = $region16
        $region15: #{geo_localization_net.1} parent=11 // pred_region
          _
        $region16: #{geo_localization_net.1} parent=11 // pred_fallthru
          _
        // Predicated region
        $region17: #{geo_localization_net.1} parent=11 // pred_check
          %p152 = pneg %p82
        $region18: #{geo_localization_net.1} parent=11 // pred_check_branch
          %154 = sbr.rel (%p152) target = $region20
        $region19: #{geo_localization_net.1} parent=11 // pred_region
          _
        $region20: #{geo_localization_net.1} parent=11 // pred_fallthru
          _
      $region12: #{geo_localization_net.1} parent=5 // pred_fallthru
        _
      %p155 = scmp.lt.s32.totalorder %s14, 2
      // Predicated region
      $region21: #{geo_localization_net.1} parent=5 // pred_check
        %p156 = pneg %p155
      $region22: #{geo_localization_net.1} parent=5 // pred_check_branch
        %158 = sbr.rel (%p156) target = $region24
      $region23: #{geo_localization_net.1} parent=5 // pred_region
        // Predicated region
        $region25: #{geo_localization_net.1} parent=23 // pred_check
          %p159 = pneg %p34
        $region26: #{geo_localization_net.1} parent=23 // pred_check_branch
          %161 = sbr.rel (%p159) target = $region28
        $region27: #{geo_localization_net.1} parent=23 // pred_region
          %p162 = scmp.lt.s32.totalorder %s14, 1
          %s163 = scalar_select %p162, %s14, 1
          %s164 = smul.addr %s163, 72
          %s165 = smul.addr %s164, 4
          %s166 = scalar_lea.vmem %s0, %s165
        $region28: #{geo_localization_net.1} parent=23 // pred_fallthru
          _
      $region24: #{geo_localization_net.1} parent=5 // pred_fallthru
        _
      %p167 = scmp.le.s32.totalorder 1, %s14
      %p168 = scmp.lt.s32.totalorder %s14, 3
      %p169 = pnand %p167, %p168
      %p170 = pneg %p169
      // Predicated region
      $region29: #{geo_localization_net.1} parent=5 // pred_check
        _
      $region30: #{geo_localization_net.1} parent=5 // pred_check_branch
        %172 = sbr.rel (%p169) target = $region32
      $region31: #{geo_localization_net.1} parent=5 // pred_region
        %s173 = ssub.s32 %s14, 1
        %p174 = scmp.lt.s32.totalorder %s19, 1
        %s175 = scalar_select %p174, %s19, 1
        %s176 = smul.addr %s175, 72
        %s177 = smul.addr %s176, 4
        %s178 = scalar_lea.vmem %s0, %s177
        %p179 = pneg %p40
        %p180 = pneg %p37
        %p181 = pneg %p61
        %p182 = pneg %p58
        %p183 = pneg %p82
        %p184 = pneg %p79
        %p185 = pneg %p108
        %p186 = pneg %p105
        %s187 = sand.u32 %s95, 1
        %s188 = scalar_lea.sflag [#allocation3], %s187
        %s189 = sand.u32 %s95, 1
        %s190 = smul.addr %s189, 192
        %s191 = scalar_lea.vmem [#allocation2], %s190
        %p192 = pneg %p134
        %p193 = pneg %p131
        %p194 = scmp.lt.s32.totalorder %s19, 1
        %s195 = scalar_select %p194, %s19, 1
        %s196 = smul.addr %s195, 3
        %s197 = scalar_lea.vmem %s4, %s196
        %p198 = scmp.lt.s32.totalorder %s19, 1
        %s199 = scalar_select %p198, %s19, 1
        %s200 = smul.addr %s199, 72
        %s201 = smul.addr %s200, 4
        %s202 = scalar_lea.vmem %s0, %s201
        %p203 = scmp.lt.s32.totalorder %s19, 1
        %s204 = scalar_select %p203, %s19, 1
        %s205 = smul.addr %s204, 3
        %s206 = scalar_lea.vmem %s4, %s205
        %v208 = vld [vmem:[%s1] sm:$0xff]
        %v209 = vld [vmem:[%s1 + $0x8] sm:$0xf]
        %v210 = vld [vmem:[%s1 + $0xc] sm:$0x33]
        %v211 = vld [vmem:[%s1 + $0x14] sm:$0x3]
        %v212 = vld [vmem:[%s2] sm:$0x7]
        %v213 = vld [vmem:[%s202] sm:$0xf]
        %v214 = vld [vmem:[%s202 + $0x4] sm:$0xf]
        %v215 = vld [vmem:[%s202 + $0x8] sm:$0xf]
        %v216 = vld [vmem:[%s202 + $0xc] sm:$0xf]
        %v217 = vld [vmem:[%s202 + $0x10] sm:$0xf]
        %v218 = vld [vmem:[%s202 + $0x14] sm:$0xf]
        %v219 = vld [vmem:[%s202 + $0x18] sm:$0xf]
        %v220 = vld [vmem:[%s202 + $0x1c] sm:$0xf]
        %v222 = vlaneseq
        %v223 = vshrl.u32 %v222, 7
        %v224 = vsub.s32 0, %v223
        %v225 = vrot.slane %v212, %v224
        %v226 = vlaneseq
        %v227 = vshrl.u32 %v226, 7
        %v228 = vsub.s32 1, %v227
        %v229 = vrot.slane %v212, %v228
        %v230 = vlaneseq
        %v231 = vshrl.u32 %v230, 7
        %v232 = vsub.s32 2, %v231
        %v233 = vrot.slane %v212, %v232
        %v245 = vunpack.c.l.b16 %v213
        %v246 = vunpack.c.l.b16 %v214
        %v247 = vunpack.c.l.b16 %v215
        %v248 = vunpack.c.l.b16 %v216
        %v249 = vunpack.c.l.b16 %v217
        %v250 = vunpack.c.l.b16 %v218
        %v251 = vunpack.c.l.b16 %v219
        %v252 = vunpack.c.l.b16 %v220
        %v253 = vpack.c.b16 %v246, %v245
        %v254 = vpack.c.b16 %v248, %v247
        %v255 = vpack.c.b16 %v250, %v249
        %v256 = vpack.c.b16 %v252, %v251
        %v261 = vunpack.c.l.b16 %v208
        %v262 = vunpack.c.h.b16 %v208
        %v263 = vunpack.c.l.b16 %v209
        %v264 = vunpack.c.l.b16 %v210
        %v265 = vunpack.c.h.b16 %v210
        %v266 = vunpack.c.l.b16 %v211
        %v267 = vpack.c.b16 %v264, %v261
        %v268 = vpack.c.b16 %v265, %v262
        %v269 = vpack.c.b16 %v266, %v263
        %vm270 = vcmask 97280
        %v272 = vsel %vm270, %v253, 0
        %v275 = vsel %vm270, %v254, 0
        %v278 = vsel %vm270, %v255, 0
        %v281 = vsel %vm270, %v256, 0
        %vm283 = vcmask 1045504
        %v285 = vsel %vm283, %v267, 0
        %v288 = vsel %vm283, %v268, 0
        %v291 = vsel %vm283, %v269, 0
        %293 = vmatprep.subr.bf16.mxu0 0
        %294 = vmatpush1.bf16.msra.mxu0 0
        %295 = vmatprep.subr.bf16.mxu0 0
        %296 = vmatpush1.bf16.msra.mxu0 0
        %297 = vmatprep.subr.bf16.mxu0 0
        %298 = vmatpush1.bf16.msra.mxu0 0
        %299 = vmatprep.subr.bf16.mxu0 0
        %300 = vmatpush1.bf16.msra.mxu0 0
        %301 = vmatprep.subr.bf16.mxu0 0
        %302 = vmatpush1.bf16.msra.mxu0 0
        %303 = vmatprep.subr.bf16.mxu0 0
        %304 = vmatpush1.bf16.msra.mxu0 0
        %305 = vmatprep.subr.bf16.mxu0 0
        %306 = vmatpush1.bf16.msra.mxu0 0
        %307 = vmatprep.subr.bf16.mxu0 %v288
        %308 = vmatpush1.bf16.msra.mxu0 %v285
        %309 = vmatprep.subr.bf16.mxu0 0
        %310 = vmatpush2.bf16.msra.mxu0 0
        %311 = vmatprep.subr.bf16.mxu0 0
        %312 = vmatpush2.bf16.msra.mxu0 0
        %313 = vmatprep.subr.bf16.mxu0 0
        %314 = vmatpush2.bf16.msra.mxu0 0
        %315 = vmatprep.subr.bf16.mxu0 0
        %316 = vmatpush2.bf16.msra.mxu0 0
        %317 = vmatprep.subr.bf16.mxu0 0
        %318 = vmatpush2.bf16.msra.mxu0 0
        %319 = vmatprep.subr.bf16.mxu0 0
        %320 = vmatpush2.bf16.msra.mxu0 0
        %321 = vmatprep.subr.bf16.mxu0 0
        %322 = vmatpush2.bf16.msra.mxu0 0
        %323 = vmatprep.subr.bf16.mxu0 0
        %324 = vmatpush2.bf16.msra.mxu0 0
        %325 = vmatprep.mubr.bf16.mxu0 0
        %326 = vmatmul.mubr.bf16.gmra.mxu0 %v272
        %v327 = vpop.f32.mrf.mxu0
        %v328 = vadd.f32 %v225, %v327
        %v329 = vpop.f32.mrf.mxu0
        %v330 = vadd.f32 %v229, %v329
        %v331 = vpop.f32.mrf.mxu0
        %v332 = vadd.f32 %v225, %v331
        %v333 = vpop.f32.mrf.mxu0
        %v334 = vadd.f32 %v229, %v333
        %335 = vmatprep.mubr.bf16.mxu0 0
        %336 = vmatmul.mubr.bf16.gmra.mxu0 %v275
        %v337 = vpop.f32.mrf.mxu0
        %v338 = vadd.f32 %v225, %v337
        %v339 = vpop.f32.mrf.mxu0
        %v340 = vadd.f32 %v229, %v339
        %v341 = vpop.f32.mrf.mxu0
        %v342 = vadd.f32 %v225, %v341
        %v343 = vpop.f32.mrf.mxu0
        %v344 = vadd.f32 %v229, %v343
        %345 = vmatprep.mubr.bf16.mxu0 0
        %346 = vmatmul.mubr.bf16.gmra.mxu0 %v278
        %v347 = vpop.f32.mrf.mxu0
        %v348 = vadd.f32 %v225, %v347
        %v349 = vpop.f32.mrf.mxu0
        %v350 = vadd.f32 %v229, %v349
        %v351 = vpop.f32.mrf.mxu0
        %v352 = vadd.f32 %v225, %v351
        %v353 = vpop.f32.mrf.mxu0
        %v354 = vadd.f32 %v229, %v353
        %355 = vmatprep.mubr.bf16.mxu0 0
        %356 = vmatmul.mubr.bf16.gmra.mxu0 %v281
        %v357 = vpop.f32.mrf.mxu0
        %v358 = vadd.f32 %v225, %v357
        %v359 = vpop.f32.mrf.mxu0
        %v360 = vadd.f32 %v229, %v359
        %v361 = vpop.f32.mrf.mxu0
        %v362 = vadd.f32 %v225, %v361
        %v363 = vpop.f32.mrf.mxu0
        %v364 = vadd.f32 %v229, %v363
        %365 = vdwg.mxu0
        %366 = vmatprep.subr.bf16.mxu0 0
        %367 = vmatpush1.bf16.msra.mxu0 0
        %368 = vmatprep.subr.bf16.mxu0 0
        %369 = vmatpush1.bf16.msra.mxu0 0
        %370 = vmatprep.subr.bf16.mxu0 0
        %371 = vmatpush1.bf16.msra.mxu0 0
        %372 = vmatprep.subr.bf16.mxu0 0
        %373 = vmatpush1.bf16.msra.mxu0 0
        %374 = vmatprep.subr.bf16.mxu0 0
        %375 = vmatpush1.bf16.msra.mxu0 0
        %376 = vmatprep.subr.bf16.mxu0 0
        %377 = vmatpush1.bf16.msra.mxu0 0
        %378 = vmatprep.subr.bf16.mxu0 0
        %379 = vmatpush1.bf16.msra.mxu0 0
        %380 = vmatprep.subr.bf16.mxu0 0
        %381 = vmatpush1.bf16.msra.mxu0 %v291
        %382 = vmatprep.subr.bf16.mxu0 0
        %383 = vmatpush2.bf16.msra.mxu0 0
        %384 = vmatprep.subr.bf16.mxu0 0
        %385 = vmatpush2.bf16.msra.mxu0 0
        %386 = vmatprep.subr.bf16.mxu0 0
        %387 = vmatpush2.bf16.msra.mxu0 0
        %388 = vmatprep.subr.bf16.mxu0 0
        %389 = vmatpush2.bf16.msra.mxu0 0
        %390 = vmatprep.subr.bf16.mxu0 0
        %391 = vmatpush2.bf16.msra.mxu0 0
        %392 = vmatprep.subr.bf16.mxu0 0
        %393 = vmatpush2.bf16.msra.mxu0 0
        %394 = vmatprep.subr.bf16.mxu0 0
        %395 = vmatpush2.bf16.msra.mxu0 0
        %396 = vmatprep.subr.bf16.mxu0 0
        %397 = vmatpush2.bf16.msra.mxu0 0
        %398 = vmatprep.mubr.bf16.mxu0 0
        %399 = vmatmul.mubr.bf16.gmra.mxu0 %v272
        %v400 = vpop.f32.mrf.mxu0
        %v401 = vadd.f32 %v233, %v400
        %v402 = vpop.f32.mrf.mxu0
        %v403 = vpop.f32.mrf.mxu0
        %v404 = vadd.f32 %v233, %v403
        %v405 = vpop.f32.mrf.mxu0
        %406 = vmatprep.mubr.bf16.mxu0 0
        %407 = vmatmul.mubr.bf16.gmra.mxu0 %v275
        %v408 = vpop.f32.mrf.mxu0
        %v409 = vadd.f32 %v233, %v408
        %v410 = vpop.f32.mrf.mxu0
        %v411 = vpop.f32.mrf.mxu0
        %v412 = vadd.f32 %v233, %v411
        %v413 = vpop.f32.mrf.mxu0
        %414 = vmatprep.mubr.bf16.mxu0 0
        %415 = vmatmul.mubr.bf16.gmra.mxu0 %v278
        %v416 = vpop.f32.mrf.mxu0
        %v417 = vadd.f32 %v233, %v416
        %v418 = vpop.f32.mrf.mxu0
        %v419 = vpop.f32.mrf.mxu0
        %v420 = vadd.f32 %v233, %v419
        %v421 = vpop.f32.mrf.mxu0
        %422 = vmatprep.mubr.bf16.mxu0 0
        %423 = vmatmul.mubr.bf16.gmra.mxu0 %v281
        %v424 = vpop.f32.mrf.mxu0
        %v425 = vadd.f32 %v233, %v424
        %v426 = vpop.f32.mrf.mxu0
        %v427 = vpop.f32.mrf.mxu0
        %v428 = vadd.f32 %v233, %v427
        %v429 = vpop.f32.mrf.mxu0
        %430 = vdwg.mxu0
        %v431 = vmul.f32 %v328, %v328
        %v432 = vmul.f32 %v330, %v330
        %v433 = vmul.f32 %v401, %v401
        %v434 = vmul.f32 %v332, %v332
        %v435 = vmul.f32 %v334, %v334
        %v436 = vmul.f32 %v404, %v404
        %v437 = vmul.f32 %v338, %v338
        %v438 = vmul.f32 %v340, %v340
        %v439 = vmul.f32 %v409, %v409
        %v440 = vmul.f32 %v342, %v342
        %v441 = vmul.f32 %v344, %v344
        %v442 = vmul.f32 %v412, %v412
        %v443 = vmul.f32 %v348, %v348
        %v444 = vmul.f32 %v350, %v350
        %v445 = vmul.f32 %v417, %v417
        %v446 = vmul.f32 %v352, %v352
        %v447 = vmul.f32 %v354, %v354
        %v448 = vmul.f32 %v420, %v420
        %v449 = vmul.f32 %v358, %v358
        %v450 = vmul.f32 %v360, %v360
        %v451 = vmul.f32 %v425, %v425
        %v452 = vmul.f32 %v362, %v362
        %v453 = vmul.f32 %v364, %v364
        %v454 = vmul.f32 %v428, %v428
        %v455 = vadd.f32 %v431, %v432
        %v456 = vadd.f32 %v455, %v433
        %457 = vadd.xlane.f32.xlu0 %v456
        %v458 = vpop.xlane.xlu0 %457
        %v459 = vadd.f32 %v434, %v435
        %v460 = vadd.f32 %v459, %v436
        %461 = vadd.xlane.f32.xlu0 %v460
        %v462 = vpop.xlane.xlu0 %461
        %v463 = vadd.f32 %v437, %v438
        %v464 = vadd.f32 %v463, %v439
        %465 = vadd.xlane.f32.xlu0 %v464
        %v466 = vpop.xlane.xlu0 %465
        %v467 = vadd.f32 %v440, %v441
        %v468 = vadd.f32 %v467, %v442
        %469 = vadd.xlane.f32.xlu0 %v468
        %v470 = vpop.xlane.xlu0 %469
        %v471 = vadd.f32 %v443, %v444
        %v472 = vadd.f32 %v471, %v445
        %473 = vadd.xlane.f32.xlu0 %v472
        %v474 = vpop.xlane.xlu0 %473
        %v475 = vadd.f32 %v446, %v447
        %v476 = vadd.f32 %v475, %v448
        %477 = vadd.xlane.f32.xlu0 %v476
        %v478 = vpop.xlane.xlu0 %477
        %v479 = vadd.f32 %v449, %v450
        %v480 = vadd.f32 %v479, %v451
        %481 = vadd.xlane.f32.xlu0 %v480
        %v482 = vpop.xlane.xlu0 %481
        %v483 = vadd.f32 %v452, %v453
        %v484 = vadd.f32 %v483, %v454
        %485 = vadd.xlane.f32.xlu0 %v484
        %v486 = vpop.xlane.xlu0 %485
        %v487 = vmax.f32 %v458, 1e-24
        %v488 = vmax.f32 %v462, 1e-24
        %v489 = vmax.f32 %v466, 1e-24
        %v490 = vmax.f32 %v470, 1e-24
        %v491 = vmax.f32 %v474, 1e-24
        %v492 = vmax.f32 %v478, 1e-24
        %v493 = vmax.f32 %v482, 1e-24
        %v494 = vmax.f32 %v486, 1e-24
        %v495 = vrsqrt.pop %v487
        %v496 = vrsqrt.pop %v488
        %v497 = vrsqrt.pop %v489
        %v498 = vrsqrt.pop %v490
        %v499 = vrsqrt.pop %v491
        %v500 = vrsqrt.pop %v492
        %v501 = vrsqrt.pop %v493
        %v502 = vrsqrt.pop %v494
        %v503 = vmul.f32 %v328, %v495
        %v504 = vmul.f32 %v330, %v495
        %v505 = vmul.f32 %v401, %v495
        %v506 = vmul.f32 %v332, %v496
        %v507 = vmul.f32 %v334, %v496
        %v508 = vmul.f32 %v404, %v496
        %v509 = vmul.f32 %v338, %v497
        %v510 = vmul.f32 %v340, %v497
        %v511 = vmul.f32 %v409, %v497
        %v512 = vmul.f32 %v342, %v498
        %v513 = vmul.f32 %v344, %v498
        %v514 = vmul.f32 %v412, %v498
        %v515 = vmul.f32 %v348, %v499
        %v516 = vmul.f32 %v350, %v499
        %v517 = vmul.f32 %v417, %v499
        %v518 = vmul.f32 %v352, %v500
        %v519 = vmul.f32 %v354, %v500
        %v520 = vmul.f32 %v420, %v500
        %v521 = vmul.f32 %v358, %v501
        %v522 = vmul.f32 %v360, %v501
        %v523 = vmul.f32 %v425, %v501
        %v524 = vmul.f32 %v362, %v502
        %v525 = vmul.f32 %v364, %v502
        %v526 = vmul.f32 %v428, %v502
        %v527 = vmax.f32 %v503, 1e-06
        %v528 = vmax.f32 %v504, 1e-06
        %v529 = vmax.f32 %v505, 1e-06
        %v530 = vmax.f32 %v506, 1e-06
        %v531 = vmax.f32 %v507, 1e-06
        %v532 = vmax.f32 %v508, 1e-06
        %v533 = vmax.f32 %v509, 1e-06
        %v534 = vmax.f32 %v510, 1e-06
        %v535 = vmax.f32 %v511, 1e-06
        %v536 = vmax.f32 %v512, 1e-06
        %v537 = vmax.f32 %v513, 1e-06
        %v538 = vmax.f32 %v514, 1e-06
        %v539 = vmax.f32 %v515, 1e-06
        %v540 = vmax.f32 %v516, 1e-06
        %v541 = vmax.f32 %v517, 1e-06
        %v542 = vmax.f32 %v518, 1e-06
        %v543 = vmax.f32 %v519, 1e-06
        %v544 = vmax.f32 %v520, 1e-06
        %v545 = vmax.f32 %v521, 1e-06
        %v546 = vmax.f32 %v522, 1e-06
        %v547 = vmax.f32 %v523, 1e-06
        %v548 = vmax.f32 %v524, 1e-06
        %v549 = vmax.f32 %v525, 1e-06
        %v550 = vmax.f32 %v526, 1e-06
        %v551 = vmul.f32 %v527, %v527
        %v552 = vmul.f32 %v528, %v528
        %v553 = vmul.f32 %v529, %v529
        %v554 = vmul.f32 %v530, %v530
        %v555 = vmul.f32 %v531, %v531
        %v556 = vmul.f32 %v532, %v532
        %v557 = vmul.f32 %v533, %v533
        %v558 = vmul.f32 %v534, %v534
        %v559 = vmul.f32 %v535, %v535
        %v560 = vmul.f32 %v536, %v536
        %v561 = vmul.f32 %v537, %v537
        %v562 = vmul.f32 %v538, %v538
        %v563 = vmul.f32 %v539, %v539
        %v564 = vmul.f32 %v540, %v540
        %v565 = vmul.f32 %v541, %v541
        %v566 = vmul.f32 %v542, %v542
        %v567 = vmul.f32 %v543, %v543
        %v568 = vmul.f32 %v544, %v544
        %v569 = vmul.f32 %v545, %v545
        %v570 = vmul.f32 %v546, %v546
        %v571 = vmul.f32 %v547, %v547
        %v572 = vmul.f32 %v548, %v548
        %v573 = vmul.f32 %v549, %v549
        %v574 = vmul.f32 %v550, %v550
        %v575 = vmul.f32 %v551, %v527
        %v576 = vmul.f32 %v552, %v528
        %v577 = vmul.f32 %v553, %v529
        %v578 = vmul.f32 %v554, %v530
        %v579 = vmul.f32 %v555, %v531
        %v580 = vmul.f32 %v556, %v532
        %v581 = vmul.f32 %v557, %v533
        %v582 = vmul.f32 %v558, %v534
        %v583 = vmul.f32 %v559, %v535
        %v584 = vmul.f32 %v560, %v536
        %v585 = vmul.f32 %v561, %v537
        %v586 = vmul.f32 %v562, %v538
        %v587 = vmul.f32 %v563, %v539
        %v588 = vmul.f32 %v564, %v540
        %v589 = vmul.f32 %v565, %v541
        %v590 = vmul.f32 %v566, %v542
        %v591 = vmul.f32 %v567, %v543
        %v592 = vmul.f32 %v568, %v544
        %v593 = vmul.f32 %v569, %v545
        %v594 = vmul.f32 %v570, %v546
        %v595 = vmul.f32 %v571, %v547
        %v596 = vmul.f32 %v572, %v548
        %v597 = vmul.f32 %v573, %v549
        %v598 = vmul.f32 %v574, %v550
        %v599 = vadd.f32 %v575, %v578
        %v600 = vadd.f32 %v599, %v581
        %v601 = vadd.f32 %v600, %v584
        %v602 = vadd.f32 %v601, %v587
        %v603 = vadd.f32 %v602, %v590
        %v604 = vadd.f32 %v603, %v593
        %v605 = vadd.f32 %v604, %v596
        %v606 = vrot.slane %v605, 4
        %v607 = vadd.f32 %v605, %v606
        %v608 = vrot.slane %v607, 2
        %v609 = vadd.f32 %v607, %v608
        %v610 = vrot.slane %v609, 1
        %v611 = vadd.f32 %v609, %v610
        %v612 = vadd.f32 %v576, %v579
        %v613 = vadd.f32 %v612, %v582
        %v614 = vadd.f32 %v613, %v585
        %v615 = vadd.f32 %v614, %v588
        %v616 = vadd.f32 %v615, %v591
        %v617 = vadd.f32 %v616, %v594
        %v618 = vadd.f32 %v617, %v597
        %v619 = vrot.slane %v618, 4
        %v620 = vadd.f32 %v618, %v619
        %v621 = vrot.slane %v620, 2
        %v622 = vadd.f32 %v620, %v621
        %v623 = vrot.slane %v622, 1
        %v624 = vadd.f32 %v622, %v623
        %v625 = vadd.f32 %v577, %v580
        %v626 = vadd.f32 %v625, %v583
        %v627 = vadd.f32 %v626, %v586
        %v628 = vadd.f32 %v627, %v589
        %v629 = vadd.f32 %v628, %v592
        %v630 = vadd.f32 %v629, %v595
        %v631 = vadd.f32 %v630, %v598
        %v632 = vrot.slane %v631, 4
        %v633 = vadd.f32 %v631, %v632
        %v634 = vrot.slane %v633, 2
        %v635 = vadd.f32 %v633, %v634
        %v636 = vrot.slane %v635, 1
        %v637 = vadd.f32 %v635, %v636
        %v638 = vld [vmem:[%s202 + $0x20] sm:$0xf]
        %v639 = vld [vmem:[%s202 + $0x24] sm:$0xf]
        %v640 = vld [vmem:[%s202 + $0x28] sm:$0xf]
        %v641 = vld [vmem:[%s202 + $0x2c] sm:$0xf]
        %v642 = vld [vmem:[%s202 + $0x30] sm:$0xf]
        %v643 = vld [vmem:[%s202 + $0x34] sm:$0xf]
        %v644 = vld [vmem:[%s202 + $0x38] sm:$0xf]
        %v645 = vld [vmem:[%s202 + $0x3c] sm:$0xf]
        %v654 = vunpack.c.l.b16 %v638
        %v655 = vunpack.c.l.b16 %v639
        %v656 = vunpack.c.l.b16 %v640
        %v657 = vunpack.c.l.b16 %v641
        %v658 = vunpack.c.l.b16 %v642
        %v659 = vunpack.c.l.b16 %v643
        %v660 = vunpack.c.l.b16 %v644
        %v661 = vunpack.c.l.b16 %v645
        %v662 = vpack.c.b16 %v655, %v654
        %v663 = vpack.c.b16 %v657, %v656
        %v664 = vpack.c.b16 %v659, %v658
        %v665 = vpack.c.b16 %v661, %v660
        %v667 = vsel %vm270, %v662, 0
        %v670 = vsel %vm270, %v663, 0
        %v673 = vsel %vm270, %v664, 0
        %v676 = vsel %vm270, %v665, 0
        %678 = vmatprep.subr.bf16.mxu0 0
        %679 = vmatpush1.bf16.msra.mxu0 0
        %680 = vmatprep.subr.bf16.mxu0 0
        %681 = vmatpush1.bf16.msra.mxu0 0
        %682 = vmatprep.subr.bf16.mxu0 0
        %683 = vmatpush1.bf16.msra.mxu0 0
        %684 = vmatprep.subr.bf16.mxu0 0
        %685 = vmatpush1.bf16.msra.mxu0 0
        %686 = vmatprep.subr.bf16.mxu0 0
        %687 = vmatpush1.bf16.msra.mxu0 0
        %688 = vmatprep.subr.bf16.mxu0 0
        %689 = vmatpush1.bf16.msra.mxu0 0
        %690 = vmatprep.subr.bf16.mxu0 0
        %691 = vmatpush1.bf16.msra.mxu0 0
        %692 = vmatprep.subr.bf16.mxu0 %v288
        %693 = vmatpush1.bf16.msra.mxu0 %v285
        %694 = vmatprep.subr.bf16.mxu0 0
        %695 = vmatpush2.bf16.msra.mxu0 0
        %696 = vmatprep.subr.bf16.mxu0 0
        %697 = vmatpush2.bf16.msra.mxu0 0
        %698 = vmatprep.subr.bf16.mxu0 0
        %699 = vmatpush2.bf16.msra.mxu0 0
        %700 = vmatprep.subr.bf16.mxu0 0
        %701 = vmatpush2.bf16.msra.mxu0 0
        %702 = vmatprep.subr.bf16.mxu0 0
        %703 = vmatpush2.bf16.msra.mxu0 0
        %704 = vmatprep.subr.bf16.mxu0 0
        %705 = vmatpush2.bf16.msra.mxu0 0
        %706 = vmatprep.subr.bf16.mxu0 0
        %707 = vmatpush2.bf16.msra.mxu0 0
        %708 = vmatprep.subr.bf16.mxu0 0
        %709 = vmatpush2.bf16.msra.mxu0 0
        %710 = vmatprep.mubr.bf16.mxu0 0
        %711 = vmatmul.mubr.bf16.gmra.mxu0 %v667
        %v712 = vpop.f32.mrf.mxu0
        %v713 = vadd.f32 %v225, %v712
        %v714 = vpop.f32.mrf.mxu0
        %v715 = vadd.f32 %v229, %v714
        %v716 = vpop.f32.mrf.mxu0
        %v717 = vadd.f32 %v225, %v716
        %v718 = vpop.f32.mrf.mxu0
        %v719 = vadd.f32 %v229, %v718
        %720 = vmatprep.mubr.bf16.mxu0 0
        %721 = vmatmul.mubr.bf16.gmra.mxu0 %v670
        %v722 = vpop.f32.mrf.mxu0
        %v723 = vadd.f32 %v225, %v722
        %v724 = vpop.f32.mrf.mxu0
        %v725 = vadd.f32 %v229, %v724
        %v726 = vpop.f32.mrf.mxu0
        %v727 = vadd.f32 %v225, %v726
        %v728 = vpop.f32.mrf.mxu0
        %v729 = vadd.f32 %v229, %v728
        %730 = vmatprep.mubr.bf16.mxu0 0
        %731 = vmatmul.mubr.bf16.gmra.mxu0 %v673
        %v732 = vpop.f32.mrf.mxu0
        %v733 = vadd.f32 %v225, %v732
        %v734 = vpop.f32.mrf.mxu0
        %v735 = vadd.f32 %v229, %v734
        %v736 = vpop.f32.mrf.mxu0
        %v737 = vadd.f32 %v225, %v736
        %v738 = vpop.f32.mrf.mxu0
        %v739 = vadd.f32 %v229, %v738
        %740 = vmatprep.mubr.bf16.mxu0 0
        %741 = vmatmul.mubr.bf16.gmra.mxu0 %v676
        %v742 = vpop.f32.mrf.mxu0
        %v743 = vadd.f32 %v225, %v742
        %v744 = vpop.f32.mrf.mxu0
        %v745 = vadd.f32 %v229, %v744
        %v746 = vpop.f32.mrf.mxu0
        %v747 = vadd.f32 %v225, %v746
        %v748 = vpop.f32.mrf.mxu0
        %v749 = vadd.f32 %v229, %v748
        %750 = vdwg.mxu0
        %751 = vmatprep.subr.bf16.mxu0 0
        %752 = vmatpush1.bf16.msra.mxu0 0
        %753 = vmatprep.subr.bf16.mxu0 0
        %754 = vmatpush1.bf16.msra.mxu0 0
        %755 = vmatprep.subr.bf16.mxu0 0
        %756 = vmatpush1.bf16.msra.mxu0 0
        %757 = vmatprep.subr.bf16.mxu0 0
        %758 = vmatpush1.bf16.msra.mxu0 0
        %759 = vmatprep.subr.bf16.mxu0 0
        %760 = vmatpush1.bf16.msra.mxu0 0
        %761 = vmatprep.subr.bf16.mxu0 0
        %762 = vmatpush1.bf16.msra.mxu0 0
        %763 = vmatprep.subr.bf16.mxu0 0
        %764 = vmatpush1.bf16.msra.mxu0 0
        %765 = vmatprep.subr.bf16.mxu0 0
        %766 = vmatpush1.bf16.msra.mxu0 %v291
        %767 = vmatprep.subr.bf16.mxu0 0
        %768 = vmatpush2.bf16.msra.mxu0 0
        %769 = vmatprep.subr.bf16.mxu0 0
        %770 = vmatpush2.bf16.msra.mxu0 0
        %771 = vmatprep.subr.bf16.mxu0 0
        %772 = vmatpush2.bf16.msra.mxu0 0
        %773 = vmatprep.subr.bf16.mxu0 0
        %774 = vmatpush2.bf16.msra.mxu0 0
        %775 = vmatprep.subr.bf16.mxu0 0
        %776 = vmatpush2.bf16.msra.mxu0 0
        %777 = vmatprep.subr.bf16.mxu0 0
        %778 = vmatpush2.bf16.msra.mxu0 0
        %779 = vmatprep.subr.bf16.mxu0 0
        %780 = vmatpush2.bf16.msra.mxu0 0
        %781 = vmatprep.subr.bf16.mxu0 0
        %782 = vmatpush2.bf16.msra.mxu0 0
        %783 = vmatprep.mubr.bf16.mxu0 0
        %784 = vmatmul.mubr.bf16.gmra.mxu0 %v667
        %v785 = vpop.f32.mrf.mxu0
        %v786 = vadd.f32 %v233, %v785
        %v787 = vpop.f32.mrf.mxu0
        %v788 = vpop.f32.mrf.mxu0
        %v789 = vadd.f32 %v233, %v788
        %v790 = vpop.f32.mrf.mxu0
        %791 = vmatprep.mubr.bf16.mxu0 0
        %792 = vmatmul.mubr.bf16.gmra.mxu0 %v670
        %v793 = vpop.f32.mrf.mxu0
        %v794 = vadd.f32 %v233, %v793
        %v795 = vpop.f32.mrf.mxu0
        %v796 = vpop.f32.mrf.mxu0
        %v797 = vadd.f32 %v233, %v796
        %v798 = vpop.f32.mrf.mxu0
        %799 = vmatprep.mubr.bf16.mxu0 0
        %800 = vmatmul.mubr.bf16.gmra.mxu0 %v673
        %v801 = vpop.f32.mrf.mxu0
        %v802 = vadd.f32 %v233, %v801
        %v803 = vpop.f32.mrf.mxu0
        %v804 = vpop.f32.mrf.mxu0
        %v805 = vadd.f32 %v233, %v804
        %v806 = vpop.f32.mrf.mxu0
        %807 = vmatprep.mubr.bf16.mxu0 0
        %808 = vmatmul.mubr.bf16.gmra.mxu0 %v676
        %v809 = vpop.f32.mrf.mxu0
        %v810 = vadd.f32 %v233, %v809
        %v811 = vpop.f32.mrf.mxu0
        %v812 = vpop.f32.mrf.mxu0
        %v813 = vadd.f32 %v233, %v812
        %v814 = vpop.f32.mrf.mxu0
        %815 = vdwg.mxu0
        %v816 = vmax.f32 %v328, %v713
        %v817 = vmax.f32 %v330, %v715
        %v818 = vmax.f32 %v401, %v786
        %v819 = vmax.f32 %v332, %v717
        %v820 = vmax.f32 %v334, %v719
        %v821 = vmax.f32 %v404, %v789
        %v822 = vmax.f32 %v338, %v723
        %v823 = vmax.f32 %v340, %v725
        %v824 = vmax.f32 %v409, %v794
        %v825 = vmax.f32 %v342, %v727
        %v826 = vmax.f32 %v344, %v729
        %v827 = vmax.f32 %v412, %v797
        %v828 = vmax.f32 %v348, %v733
        %v829 = vmax.f32 %v350, %v735
        %v830 = vmax.f32 %v417, %v802
        %v831 = vmax.f32 %v352, %v737
        %v832 = vmax.f32 %v354, %v739
        %v833 = vmax.f32 %v420, %v805
        %v834 = vmax.f32 %v358, %v743
        %v835 = vmax.f32 %v360, %v745
        %v836 = vmax.f32 %v425, %v810
        %v837 = vmax.f32 %v362, %v747
        %v838 = vmax.f32 %v364, %v749
        %v839 = vmax.f32 %v428, %v813
        %v840 = vmul.f32 %v713, %v713
        %v841 = vmul.f32 %v715, %v715
        %v842 = vmul.f32 %v786, %v786
        %v843 = vmul.f32 %v717, %v717
        %v844 = vmul.f32 %v719, %v719
        %v845 = vmul.f32 %v789, %v789
        %v846 = vmul.f32 %v723, %v723
        %v847 = vmul.f32 %v725, %v725
        %v848 = vmul.f32 %v794, %v794
        %v849 = vmul.f32 %v727, %v727
        %v850 = vmul.f32 %v729, %v729
        %v851 = vmul.f32 %v797, %v797
        %v852 = vmul.f32 %v733, %v733
        %v853 = vmul.f32 %v735, %v735
        %v854 = vmul.f32 %v802, %v802
        %v855 = vmul.f32 %v737, %v737
        %v856 = vmul.f32 %v739, %v739
        %v857 = vmul.f32 %v805, %v805
        %v858 = vmul.f32 %v743, %v743
        %v859 = vmul.f32 %v745, %v745
        %v860 = vmul.f32 %v810, %v810
        %v861 = vmul.f32 %v747, %v747
        %v862 = vmul.f32 %v749, %v749
        %v863 = vmul.f32 %v813, %v813
        %v864 = vadd.f32 %v840, %v841
        %v865 = vadd.f32 %v864, %v842
        %866 = vadd.xlane.f32.xlu0 %v865
        %v867 = vpop.xlane.xlu0 %866
        %v868 = vadd.f32 %v843, %v844
        %v869 = vadd.f32 %v868, %v845
        %870 = vadd.xlane.f32.xlu0 %v869
        %v871 = vpop.xlane.xlu0 %870
        %v872 = vadd.f32 %v846, %v847
        %v873 = vadd.f32 %v872, %v848
        %874 = vadd.xlane.f32.xlu0 %v873
        %v875 = vpop.xlane.xlu0 %874
        %v876 = vadd.f32 %v849, %v850
        %v877 = vadd.f32 %v876, %v851
        %878 = vadd.xlane.f32.xlu0 %v877
        %v879 = vpop.xlane.xlu0 %878
        %v880 = vadd.f32 %v852, %v853
        %v881 = vadd.f32 %v880, %v854
        %882 = vadd.xlane.f32.xlu0 %v881
        %v883 = vpop.xlane.xlu0 %882
        %v884 = vadd.f32 %v855, %v856
        %v885 = vadd.f32 %v884, %v857
        %886 = vadd.xlane.f32.xlu0 %v885
        %v887 = vpop.xlane.xlu0 %886
        %v888 = vadd.f32 %v858, %v859
        %v889 = vadd.f32 %v888, %v860
        %890 = vadd.xlane.f32.xlu0 %v889
        %v891 = vpop.xlane.xlu0 %890
        %v892 = vadd.f32 %v861, %v862
        %v893 = vadd.f32 %v892, %v863
        %894 = vadd.xlane.f32.xlu0 %v893
        %v895 = vpop.xlane.xlu0 %894
        %v896 = vmax.f32 %v867, 1e-24
        %v897 = vmax.f32 %v871, 1e-24
        %v898 = vmax.f32 %v875, 1e-24
        %v899 = vmax.f32 %v879, 1e-24
        %v900 = vmax.f32 %v883, 1e-24
        %v901 = vmax.f32 %v887, 1e-24
        %v902 = vmax.f32 %v891, 1e-24
        %v903 = vmax.f32 %v895, 1e-24
        %v904 = vrsqrt.pop %v896
        %v905 = vrsqrt.pop %v897
        %v906 = vrsqrt.pop %v898
        %v907 = vrsqrt.pop %v899
        %v908 = vrsqrt.pop %v900
        %v909 = vrsqrt.pop %v901
        %v910 = vrsqrt.pop %v902
        %v911 = vrsqrt.pop %v903
        %v912 = vmul.f32 %v713, %v904
        %v913 = vmul.f32 %v715, %v904
        %v914 = vmul.f32 %v786, %v904
        %v915 = vmul.f32 %v717, %v905
        %v916 = vmul.f32 %v719, %v905
        %v917 = vmul.f32 %v789, %v905
        %v918 = vmul.f32 %v723, %v906
        %v919 = vmul.f32 %v725, %v906
        %v920 = vmul.f32 %v794, %v906
        %v921 = vmul.f32 %v727, %v907
        %v922 = vmul.f32 %v729, %v907
        %v923 = vmul.f32 %v797, %v907
        %v924 = vmul.f32 %v733, %v908
        %v925 = vmul.f32 %v735, %v908
        %v926 = vmul.f32 %v802, %v908
        %v927 = vmul.f32 %v737, %v909
        %v928 = vmul.f32 %v739, %v909
        %v929 = vmul.f32 %v805, %v909
        %v930 = vmul.f32 %v743, %v910
        %v931 = vmul.f32 %v745, %v910
        %v932 = vmul.f32 %v810, %v910
        %v933 = vmul.f32 %v747, %v911
        %v934 = vmul.f32 %v749, %v911
        %v935 = vmul.f32 %v813, %v911
        %v936 = vmax.f32 %v912, 1e-06
        %v937 = vmax.f32 %v913, 1e-06
        %v938 = vmax.f32 %v914, 1e-06
        %v939 = vmax.f32 %v915, 1e-06
        %v940 = vmax.f32 %v916, 1e-06
        %v941 = vmax.f32 %v917, 1e-06
        %v942 = vmax.f32 %v918, 1e-06
        %v943 = vmax.f32 %v919, 1e-06
        %v944 = vmax.f32 %v920, 1e-06
        %v945 = vmax.f32 %v921, 1e-06
        %v946 = vmax.f32 %v922, 1e-06
        %v947 = vmax.f32 %v923, 1e-06
        %v948 = vmax.f32 %v924, 1e-06
        %v949 = vmax.f32 %v925, 1e-06
        %v950 = vmax.f32 %v926, 1e-06
        %v951 = vmax.f32 %v927, 1e-06
        %v952 = vmax.f32 %v928, 1e-06
        %v953 = vmax.f32 %v929, 1e-06
        %v954 = vmax.f32 %v930, 1e-06
        %v955 = vmax.f32 %v931, 1e-06
        %v956 = vmax.f32 %v932, 1e-06
        %v957 = vmax.f32 %v933, 1e-06
        %v958 = vmax.f32 %v934, 1e-06
        %v959 = vmax.f32 %v935, 1e-06
        %v960 = vmul.f32 %v936, %v936
        %v961 = vmul.f32 %v937, %v937
        %v962 = vmul.f32 %v938, %v938
        %v963 = vmul.f32 %v939, %v939
        %v964 = vmul.f32 %v940, %v940
        %v965 = vmul.f32 %v941, %v941
        %v966 = vmul.f32 %v942, %v942
        %v967 = vmul.f32 %v943, %v943
        %v968 = vmul.f32 %v944, %v944
        %v969 = vmul.f32 %v945, %v945
        %v970 = vmul.f32 %v946, %v946
        %v971 = vmul.f32 %v947, %v947
        %v972 = vmul.f32 %v948, %v948
        %v973 = vmul.f32 %v949, %v949
        %v974 = vmul.f32 %v950, %v950
        %v975 = vmul.f32 %v951, %v951
        %v976 = vmul.f32 %v952, %v952
        %v977 = vmul.f32 %v953, %v953
        %v978 = vmul.f32 %v954, %v954
        %v979 = vmul.f32 %v955, %v955
        %v980 = vmul.f32 %v956, %v956
        %v981 = vmul.f32 %v957, %v957
        %v982 = vmul.f32 %v958, %v958
        %v983 = vmul.f32 %v959, %v959
        %v984 = vmul.f32 %v960, %v936
        %v985 = vmul.f32 %v961, %v937
        %v986 = vmul.f32 %v962, %v938
        %v987 = vmul.f32 %v963, %v939
        %v988 = vmul.f32 %v964, %v940
        %v989 = vmul.f32 %v965, %v941
        %v990 = vmul.f32 %v966, %v942
        %v991 = vmul.f32 %v967, %v943
        %v992 = vmul.f32 %v968, %v944
        %v993 = vmul.f32 %v969, %v945
        %v994 = vmul.f32 %v970, %v946
        %v995 = vmul.f32 %v971, %v947
        %v996 = vmul.f32 %v972, %v948
        %v997 = vmul.f32 %v973, %v949
        %v998 = vmul.f32 %v974, %v950
        %v999 = vmul.f32 %v975, %v951
        %v1000 = vmul.f32 %v976, %v952
        %v1001 = vmul.f32 %v977, %v953
        %v1002 = vmul.f32 %v978, %v954
        %v1003 = vmul.f32 %v979, %v955
        %v1004 = vmul.f32 %v980, %v956
        %v1005 = vmul.f32 %v981, %v957
        %v1006 = vmul.f32 %v982, %v958
        %v1007 = vmul.f32 %v983, %v959
        %v1008 = vadd.f32 %v984, %v987
        %v1009 = vadd.f32 %v1008, %v990
        %v1010 = vadd.f32 %v1009, %v993
        %v1011 = vadd.f32 %v1010, %v996
        %v1012 = vadd.f32 %v1011, %v999
        %v1013 = vadd.f32 %v1012, %v1002
        %v1014 = vadd.f32 %v1013, %v1005
        %v1015 = vrot.slane %v1014, 4
        %v1016 = vadd.f32 %v1014, %v1015
        %v1017 = vrot.slane %v1016, 2
        %v1018 = vadd.f32 %v1016, %v1017
        %v1019 = vrot.slane %v1018, 1
        %v1020 = vadd.f32 %v1018, %v1019
        %v1021 = vadd.f32 %v985, %v988
        %v1022 = vadd.f32 %v1021, %v991
        %v1023 = vadd.f32 %v1022, %v994
        %v1024 = vadd.f32 %v1023, %v997
        %v1025 = vadd.f32 %v1024, %v1000
        %v1026 = vadd.f32 %v1025, %v1003
        %v1027 = vadd.f32 %v1026, %v1006
        %v1028 = vrot.slane %v1027, 4
        %v1029 = vadd.f32 %v1027, %v1028
        %v1030 = vrot.slane %v1029, 2
        %v1031 = vadd.f32 %v1029, %v1030
        %v1032 = vrot.slane %v1031, 1
        %v1033 = vadd.f32 %v1031, %v1032
        %v1034 = vadd.f32 %v986, %v989
        %v1035 = vadd.f32 %v1034, %v992
        %v1036 = vadd.f32 %v1035, %v995
        %v1037 = vadd.f32 %v1036, %v998
        %v1038 = vadd.f32 %v1037, %v1001
        %v1039 = vadd.f32 %v1038, %v1004
        %v1040 = vadd.f32 %v1039, %v1007
        %v1041 = vrot.slane %v1040, 4
        %v1042 = vadd.f32 %v1040, %v1041
        %v1043 = vrot.slane %v1042, 2
        %v1044 = vadd.f32 %v1042, %v1043
        %v1045 = vrot.slane %v1044, 1
        %v1046 = vadd.f32 %v1044, %v1045
        %v1047 = vadd.f32 %v611, %v1020
        %v1048 = vadd.f32 %v624, %v1033
        %v1049 = vadd.f32 %v637, %v1046
        %v1050 = vld [vmem:[%s202 + $0x40] sm:$0xf]
        %v1051 = vld [vmem:[%s202 + $0x44] sm:$0xf]
        %v1052 = vld [vmem:[%s202 + $0x48] sm:$0xf]
        %v1053 = vld [vmem:[%s202 + $0x4c] sm:$0xf]
        %v1054 = vld [vmem:[%s202 + $0x50] sm:$0xf]
        %v1055 = vld [vmem:[%s202 + $0x54] sm:$0xf]
        %v1056 = vld [vmem:[%s202 + $0x58] sm:$0xf]
        %v1057 = vld [vmem:[%s202 + $0x5c] sm:$0xf]
        %v1066 = vunpack.c.l.b16 %v1050
        %v1067 = vunpack.c.l.b16 %v1051
        %v1068 = vunpack.c.l.b16 %v1052
        %v1069 = vunpack.c.l.b16 %v1053
        %v1070 = vunpack.c.l.b16 %v1054
        %v1071 = vunpack.c.l.b16 %v1055
        %v1072 = vunpack.c.l.b16 %v1056
        %v1073 = vunpack.c.l.b16 %v1057
        %v1074 = vpack.c.b16 %v1067, %v1066
        %v1075 = vpack.c.b16 %v1069, %v1068
        %v1076 = vpack.c.b16 %v1071, %v1070
        %v1077 = vpack.c.b16 %v1073, %v1072
        %v1079 = vsel %vm270, %v1074, 0
        %v1082 = vsel %vm270, %v1075, 0
        %v1085 = vsel %vm270, %v1076, 0
        %v1088 = vsel %vm270, %v1077, 0
        %1090 = vmatprep.subr.bf16.mxu0 0
        %1091 = vmatpush1.bf16.msra.mxu0 0
        %1092 = vmatprep.subr.bf16.mxu0 0
        %1093 = vmatpush1.bf16.msra.mxu0 0
        %1094 = vmatprep.subr.bf16.mxu0 0
        %1095 = vmatpush1.bf16.msra.mxu0 0
        %1096 = vmatprep.subr.bf16.mxu0 0
        %1097 = vmatpush1.bf16.msra.mxu0 0
        %1098 = vmatprep.subr.bf16.mxu0 0
        %1099 = vmatpush1.bf16.msra.mxu0 0
        %1100 = vmatprep.subr.bf16.mxu0 0
        %1101 = vmatpush1.bf16.msra.mxu0 0
        %1102 = vmatprep.subr.bf16.mxu0 0
        %1103 = vmatpush1.bf16.msra.mxu0 0
        %1104 = vmatprep.subr.bf16.mxu0 %v288
        %1105 = vmatpush1.bf16.msra.mxu0 %v285
        %1106 = vmatprep.subr.bf16.mxu0 0
        %1107 = vmatpush2.bf16.msra.mxu0 0
        %1108 = vmatprep.subr.bf16.mxu0 0
        %1109 = vmatpush2.bf16.msra.mxu0 0
        %1110 = vmatprep.subr.bf16.mxu0 0
        %1111 = vmatpush2.bf16.msra.mxu0 0
        %1112 = vmatprep.subr.bf16.mxu0 0
        %1113 = vmatpush2.bf16.msra.mxu0 0
        %1114 = vmatprep.subr.bf16.mxu0 0
        %1115 = vmatpush2.bf16.msra.mxu0 0
        %1116 = vmatprep.subr.bf16.mxu0 0
        %1117 = vmatpush2.bf16.msra.mxu0 0
        %1118 = vmatprep.subr.bf16.mxu0 0
        %1119 = vmatpush2.bf16.msra.mxu0 0
        %1120 = vmatprep.subr.bf16.mxu0 0
        %1121 = vmatpush2.bf16.msra.mxu0 0
        %1122 = vmatprep.mubr.bf16.mxu0 0
        %1123 = vmatmul.mubr.bf16.gmra.mxu0 %v1079
        %v1124 = vpop.f32.mrf.mxu0
        %v1125 = vadd.f32 %v225, %v1124
        %v1126 = vpop.f32.mrf.mxu0
        %v1127 = vadd.f32 %v229, %v1126
        %v1128 = vpop.f32.mrf.mxu0
        %v1129 = vadd.f32 %v225, %v1128
        %v1130 = vpop.f32.mrf.mxu0
        %v1131 = vadd.f32 %v229, %v1130
        %1132 = vmatprep.mubr.bf16.mxu0 0
        %1133 = vmatmul.mubr.bf16.gmra.mxu0 %v1082
        %v1134 = vpop.f32.mrf.mxu0
        %v1135 = vadd.f32 %v225, %v1134
        %v1136 = vpop.f32.mrf.mxu0
        %v1137 = vadd.f32 %v229, %v1136
        %v1138 = vpop.f32.mrf.mxu0
        %v1139 = vadd.f32 %v225, %v1138
        %v1140 = vpop.f32.mrf.mxu0
        %v1141 = vadd.f32 %v229, %v1140
        %1142 = vmatprep.mubr.bf16.mxu0 0
        %1143 = vmatmul.mubr.bf16.gmra.mxu0 %v1085
        %v1144 = vpop.f32.mrf.mxu0
        %v1145 = vadd.f32 %v225, %v1144
        %v1146 = vpop.f32.mrf.mxu0
        %v1147 = vadd.f32 %v229, %v1146
        %v1148 = vpop.f32.mrf.mxu0
        %v1149 = vadd.f32 %v225, %v1148
        %v1150 = vpop.f32.mrf.mxu0
        %v1151 = vadd.f32 %v229, %v1150
        %1152 = vmatprep.mubr.bf16.mxu0 0
        %1153 = vmatmul.mubr.bf16.gmra.mxu0 %v1088
        %v1154 = vpop.f32.mrf.mxu0
        %v1155 = vadd.f32 %v225, %v1154
        %v1156 = vpop.f32.mrf.mxu0
        %v1157 = vadd.f32 %v229, %v1156
        %v1158 = vpop.f32.mrf.mxu0
        %v1159 = vadd.f32 %v225, %v1158
        %v1160 = vpop.f32.mrf.mxu0
        %v1161 = vadd.f32 %v229, %v1160
        %1162 = vdwg.mxu0
        %1163 = vmatprep.subr.bf16.mxu0 0
        %1164 = vmatpush1.bf16.msra.mxu0 0
        %1165 = vmatprep.subr.bf16.mxu0 0
        %1166 = vmatpush1.bf16.msra.mxu0 0
        %1167 = vmatprep.subr.bf16.mxu0 0
        %1168 = vmatpush1.bf16.msra.mxu0 0
        %1169 = vmatprep.subr.bf16.mxu0 0
        %1170 = vmatpush1.bf16.msra.mxu0 0
        %1171 = vmatprep.subr.bf16.mxu0 0
        %1172 = vmatpush1.bf16.msra.mxu0 0
        %1173 = vmatprep.subr.bf16.mxu0 0
        %1174 = vmatpush1.bf16.msra.mxu0 0
        %1175 = vmatprep.subr.bf16.mxu0 0
        %1176 = vmatpush1.bf16.msra.mxu0 0
        %1177 = vmatprep.subr.bf16.mxu0 0
        %1178 = vmatpush1.bf16.msra.mxu0 %v291
        %1179 = vmatprep.subr.bf16.mxu0 0
        %1180 = vmatpush2.bf16.msra.mxu0 0
        %1181 = vmatprep.subr.bf16.mxu0 0
        %1182 = vmatpush2.bf16.msra.mxu0 0
        %1183 = vmatprep.subr.bf16.mxu0 0
        %1184 = vmatpush2.bf16.msra.mxu0 0
        %1185 = vmatprep.subr.bf16.mxu0 0
        %1186 = vmatpush2.bf16.msra.mxu0 0
        %1187 = vmatprep.subr.bf16.mxu0 0
        %1188 = vmatpush2.bf16.msra.mxu0 0
        %1189 = vmatprep.subr.bf16.mxu0 0
        %1190 = vmatpush2.bf16.msra.mxu0 0
        %1191 = vmatprep.subr.bf16.mxu0 0
        %1192 = vmatpush2.bf16.msra.mxu0 0
        %1193 = vmatprep.subr.bf16.mxu0 0
        %1194 = vmatpush2.bf16.msra.mxu0 0
        %1195 = vmatprep.mubr.bf16.mxu0 0
        %1196 = vmatmul.mubr.bf16.gmra.mxu0 %v1079
        %v1197 = vpop.f32.mrf.mxu0
        %v1198 = vadd.f32 %v233, %v1197
        %v1199 = vpop.f32.mrf.mxu0
        %v1200 = vpop.f32.mrf.mxu0
        %v1201 = vadd.f32 %v233, %v1200
        %v1202 = vpop.f32.mrf.mxu0
        %1203 = vmatprep.mubr.bf16.mxu0 0
        %1204 = vmatmul.mubr.bf16.gmra.mxu0 %v1082
        %v1205 = vpop.f32.mrf.mxu0
        %v1206 = vadd.f32 %v233, %v1205
        %v1207 = vpop.f32.mrf.mxu0
        %v1208 = vpop.f32.mrf.mxu0
        %v1209 = vadd.f32 %v233, %v1208
        %v1210 = vpop.f32.mrf.mxu0
        %1211 = vmatprep.mubr.bf16.mxu0 0
        %1212 = vmatmul.mubr.bf16.gmra.mxu0 %v1085
        %v1213 = vpop.f32.mrf.mxu0
        %v1214 = vadd.f32 %v233, %v1213
        %v1215 = vpop.f32.mrf.mxu0
        %v1216 = vpop.f32.mrf.mxu0
        %v1217 = vadd.f32 %v233, %v1216
        %v1218 = vpop.f32.mrf.mxu0
        %1219 = vmatprep.mubr.bf16.mxu0 0
        %1220 = vmatmul.mubr.bf16.gmra.mxu0 %v1088
        %v1221 = vpop.f32.mrf.mxu0
        %v1222 = vadd.f32 %v233, %v1221
        %v1223 = vpop.f32.mrf.mxu0
        %v1224 = vpop.f32.mrf.mxu0
        %v1225 = vadd.f32 %v233, %v1224
        %v1226 = vpop.f32.mrf.mxu0
        %1227 = vdwg.mxu0
        %v1228 = vmax.f32 %v816, %v1125
        %v1229 = vmax.f32 %v817, %v1127
        %v1230 = vmax.f32 %v818, %v1198
        %v1231 = vmax.f32 %v819, %v1129
        %v1232 = vmax.f32 %v820, %v1131
        %v1233 = vmax.f32 %v821, %v1201
        %v1234 = vmax.f32 %v822, %v1135
        %v1235 = vmax.f32 %v823, %v1137
        %v1236 = vmax.f32 %v824, %v1206
        %v1237 = vmax.f32 %v825, %v1139
        %v1238 = vmax.f32 %v826, %v1141
        %v1239 = vmax.f32 %v827, %v1209
        %v1240 = vmax.f32 %v828, %v1145
        %v1241 = vmax.f32 %v829, %v1147
        %v1242 = vmax.f32 %v830, %v1214
        %v1243 = vmax.f32 %v831, %v1149
        %v1244 = vmax.f32 %v832, %v1151
        %v1245 = vmax.f32 %v833, %v1217
        %v1246 = vmax.f32 %v834, %v1155
        %v1247 = vmax.f32 %v835, %v1157
        %v1248 = vmax.f32 %v836, %v1222
        %v1249 = vmax.f32 %v837, %v1159
        %v1250 = vmax.f32 %v838, %v1161
        %v1251 = vmax.f32 %v839, %v1225
        %v1252 = vmul.f32 %v1125, %v1125
        %v1253 = vmul.f32 %v1127, %v1127
        %v1254 = vmul.f32 %v1198, %v1198
        %v1255 = vmul.f32 %v1129, %v1129
        %v1256 = vmul.f32 %v1131, %v1131
        %v1257 = vmul.f32 %v1201, %v1201
        %v1258 = vmul.f32 %v1135, %v1135
        %v1259 = vmul.f32 %v1137, %v1137
        %v1260 = vmul.f32 %v1206, %v1206
        %v1261 = vmul.f32 %v1139, %v1139
        %v1262 = vmul.f32 %v1141, %v1141
        %v1263 = vmul.f32 %v1209, %v1209
        %v1264 = vmul.f32 %v1145, %v1145
        %v1265 = vmul.f32 %v1147, %v1147
        %v1266 = vmul.f32 %v1214, %v1214
        %v1267 = vmul.f32 %v1149, %v1149
        %v1268 = vmul.f32 %v1151, %v1151
        %v1269 = vmul.f32 %v1217, %v1217
        %v1270 = vmul.f32 %v1155, %v1155
        %v1271 = vmul.f32 %v1157, %v1157
        %v1272 = vmul.f32 %v1222, %v1222
        %v1273 = vmul.f32 %v1159, %v1159
        %v1274 = vmul.f32 %v1161, %v1161
        %v1275 = vmul.f32 %v1225, %v1225
        %v1276 = vadd.f32 %v1252, %v1253
        %v1277 = vadd.f32 %v1276, %v1254
        %1278 = vadd.xlane.f32.xlu0 %v1277
        %v1279 = vpop.xlane.xlu0 %1278
        %v1280 = vadd.f32 %v1255, %v1256
        %v1281 = vadd.f32 %v1280, %v1257
        %1282 = vadd.xlane.f32.xlu0 %v1281
        %v1283 = vpop.xlane.xlu0 %1282
        %v1284 = vadd.f32 %v1258, %v1259
        %v1285 = vadd.f32 %v1284, %v1260
        %1286 = vadd.xlane.f32.xlu0 %v1285
        %v1287 = vpop.xlane.xlu0 %1286
        %v1288 = vadd.f32 %v1261, %v1262
        %v1289 = vadd.f32 %v1288, %v1263
        %1290 = vadd.xlane.f32.xlu0 %v1289
        %v1291 = vpop.xlane.xlu0 %1290
        %v1292 = vadd.f32 %v1264, %v1265
        %v1293 = vadd.f32 %v1292, %v1266
        %1294 = vadd.xlane.f32.xlu0 %v1293
        %v1295 = vpop.xlane.xlu0 %1294
        %v1296 = vadd.f32 %v1267, %v1268
        %v1297 = vadd.f32 %v1296, %v1269
        %1298 = vadd.xlane.f32.xlu0 %v1297
        %v1299 = vpop.xlane.xlu0 %1298
        %v1300 = vadd.f32 %v1270, %v1271
        %v1301 = vadd.f32 %v1300, %v1272
        %1302 = vadd.xlane.f32.xlu0 %v1301
        %v1303 = vpop.xlane.xlu0 %1302
        %v1304 = vadd.f32 %v1273, %v1274
        %v1305 = vadd.f32 %v1304, %v1275
        %1306 = vadd.xlane.f32.xlu0 %v1305
        %v1307 = vpop.xlane.xlu0 %1306
        %v1308 = vmax.f32 %v1279, 1e-24
        %v1309 = vmax.f32 %v1283, 1e-24
        %v1310 = vmax.f32 %v1287, 1e-24
        %v1311 = vmax.f32 %v1291, 1e-24
        %v1312 = vmax.f32 %v1295, 1e-24
        %v1313 = vmax.f32 %v1299, 1e-24
        %v1314 = vmax.f32 %v1303, 1e-24
        %v1315 = vmax.f32 %v1307, 1e-24
        %v1316 = vrsqrt.pop %v1308
        %v1317 = vrsqrt.pop %v1309
        %v1318 = vrsqrt.pop %v1310
        %v1319 = vrsqrt.pop %v1311
        %v1320 = vrsqrt.pop %v1312
        %v1321 = vrsqrt.pop %v1313
        %v1322 = vrsqrt.pop %v1314
        %v1323 = vrsqrt.pop %v1315
        %v1324 = vmul.f32 %v1125, %v1316
        %v1325 = vmul.f32 %v1127, %v1316
        %v1326 = vmul.f32 %v1198, %v1316
        %v1327 = vmul.f32 %v1129, %v1317
        %v1328 = vmul.f32 %v1131, %v1317
        %v1329 = vmul.f32 %v1201, %v1317
        %v1330 = vmul.f32 %v1135, %v1318
        %v1331 = vmul.f32 %v1137, %v1318
        %v1332 = vmul.f32 %v1206, %v1318
        %v1333 = vmul.f32 %v1139, %v1319
        %v1334 = vmul.f32 %v1141, %v1319
        %v1335 = vmul.f32 %v1209, %v1319
        %v1336 = vmul.f32 %v1145, %v1320
        %v1337 = vmul.f32 %v1147, %v1320
        %v1338 = vmul.f32 %v1214, %v1320
        %v1339 = vmul.f32 %v1149, %v1321
        %v1340 = vmul.f32 %v1151, %v1321
        %v1341 = vmul.f32 %v1217, %v1321
        %v1342 = vmul.f32 %v1155, %v1322
        %v1343 = vmul.f32 %v1157, %v1322
        %v1344 = vmul.f32 %v1222, %v1322
        %v1345 = vmul.f32 %v1159, %v1323
        %v1346 = vmul.f32 %v1161, %v1323
        %v1347 = vmul.f32 %v1225, %v1323
        %v1348 = vmax.f32 %v1324, 1e-06
        %v1349 = vmax.f32 %v1325, 1e-06
        %v1350 = vmax.f32 %v1326, 1e-06
        %v1351 = vmax.f32 %v1327, 1e-06
        %v1352 = vmax.f32 %v1328, 1e-06
        %v1353 = vmax.f32 %v1329, 1e-06
        %v1354 = vmax.f32 %v1330, 1e-06
        %v1355 = vmax.f32 %v1331, 1e-06
        %v1356 = vmax.f32 %v1332, 1e-06
        %v1357 = vmax.f32 %v1333, 1e-06
        %v1358 = vmax.f32 %v1334, 1e-06
        %v1359 = vmax.f32 %v1335, 1e-06
        %v1360 = vmax.f32 %v1336, 1e-06
        %v1361 = vmax.f32 %v1337, 1e-06
        %v1362 = vmax.f32 %v1338, 1e-06
        %v1363 = vmax.f32 %v1339, 1e-06
        %v1364 = vmax.f32 %v1340, 1e-06
        %v1365 = vmax.f32 %v1341, 1e-06
        %v1366 = vmax.f32 %v1342, 1e-06
        %v1367 = vmax.f32 %v1343, 1e-06
        %v1368 = vmax.f32 %v1344, 1e-06
        %v1369 = vmax.f32 %v1345, 1e-06
        %v1370 = vmax.f32 %v1346, 1e-06
        %v1371 = vmax.f32 %v1347, 1e-06
        %v1372 = vmul.f32 %v1348, %v1348
        %v1373 = vmul.f32 %v1349, %v1349
        %v1374 = vmul.f32 %v1350, %v1350
        %v1375 = vmul.f32 %v1351, %v1351
        %v1376 = vmul.f32 %v1352, %v1352
        %v1377 = vmul.f32 %v1353, %v1353
        %v1378 = vmul.f32 %v1354, %v1354
        %v1379 = vmul.f32 %v1355, %v1355
        %v1380 = vmul.f32 %v1356, %v1356
        %v1381 = vmul.f32 %v1357, %v1357
        %v1382 = vmul.f32 %v1358, %v1358
        %v1383 = vmul.f32 %v1359, %v1359
        %v1384 = vmul.f32 %v1360, %v1360
        %v1385 = vmul.f32 %v1361, %v1361
        %v1386 = vmul.f32 %v1362, %v1362
        %v1387 = vmul.f32 %v1363, %v1363
        %v1388 = vmul.f32 %v1364, %v1364
        %v1389 = vmul.f32 %v1365, %v1365
        %v1390 = vmul.f32 %v1366, %v1366
        %v1391 = vmul.f32 %v1367, %v1367
        %v1392 = vmul.f32 %v1368, %v1368
        %v1393 = vmul.f32 %v1369, %v1369
        %v1394 = vmul.f32 %v1370, %v1370
        %v1395 = vmul.f32 %v1371, %v1371
        %v1396 = vmul.f32 %v1372, %v1348
        %v1397 = vmul.f32 %v1373, %v1349
        %v1398 = vmul.f32 %v1374, %v1350
        %v1399 = vmul.f32 %v1375, %v1351
        %v1400 = vmul.f32 %v1376, %v1352
        %v1401 = vmul.f32 %v1377, %v1353
        %v1402 = vmul.f32 %v1378, %v1354
        %v1403 = vmul.f32 %v1379, %v1355
        %v1404 = vmul.f32 %v1380, %v1356
        %v1405 = vmul.f32 %v1381, %v1357
        %v1406 = vmul.f32 %v1382, %v1358
        %v1407 = vmul.f32 %v1383, %v1359
        %v1408 = vmul.f32 %v1384, %v1360
        %v1409 = vmul.f32 %v1385, %v1361
        %v1410 = vmul.f32 %v1386, %v1362
        %v1411 = vmul.f32 %v1387, %v1363
        %v1412 = vmul.f32 %v1388, %v1364
        %v1413 = vmul.f32 %v1389, %v1365
        %v1414 = vmul.f32 %v1390, %v1366
        %v1415 = vmul.f32 %v1391, %v1367
        %v1416 = vmul.f32 %v1392, %v1368
        %v1417 = vmul.f32 %v1393, %v1369
        %v1418 = vmul.f32 %v1394, %v1370
        %v1419 = vmul.f32 %v1395, %v1371
        %v1420 = vadd.f32 %v1396, %v1399
        %v1421 = vadd.f32 %v1420, %v1402
        %v1422 = vadd.f32 %v1421, %v1405
        %v1423 = vadd.f32 %v1422, %v1408
        %v1424 = vadd.f32 %v1423, %v1411
        %v1425 = vadd.f32 %v1424, %v1414
        %v1426 = vadd.f32 %v1425, %v1417
        %v1427 = vrot.slane %v1426, 4
        %v1428 = vadd.f32 %v1426, %v1427
        %v1429 = vrot.slane %v1428, 2
        %v1430 = vadd.f32 %v1428, %v1429
        %v1431 = vrot.slane %v1430, 1
        %v1432 = vadd.f32 %v1430, %v1431
        %v1433 = vadd.f32 %v1397, %v1400
        %v1434 = vadd.f32 %v1433, %v1403
        %v1435 = vadd.f32 %v1434, %v1406
        %v1436 = vadd.f32 %v1435, %v1409
        %v1437 = vadd.f32 %v1436, %v1412
        %v1438 = vadd.f32 %v1437, %v1415
        %v1439 = vadd.f32 %v1438, %v1418
        %v1440 = vrot.slane %v1439, 4
        %v1441 = vadd.f32 %v1439, %v1440
        %v1442 = vrot.slane %v1441, 2
        %v1443 = vadd.f32 %v1441, %v1442
        %v1444 = vrot.slane %v1443, 1
        %v1445 = vadd.f32 %v1443, %v1444
        %v1446 = vadd.f32 %v1398, %v1401
        %v1447 = vadd.f32 %v1446, %v1404
        %v1448 = vadd.f32 %v1447, %v1407
        %v1449 = vadd.f32 %v1448, %v1410
        %v1450 = vadd.f32 %v1449, %v1413
        %v1451 = vadd.f32 %v1450, %v1416
        %v1452 = vadd.f32 %v1451, %v1419
        %v1453 = vrot.slane %v1452, 4
        %v1454 = vadd.f32 %v1452, %v1453
        %v1455 = vrot.slane %v1454, 2
        %v1456 = vadd.f32 %v1454, %v1455
        %v1457 = vrot.slane %v1456, 1
        %v1458 = vadd.f32 %v1456, %v1457
        %v1459 = vadd.f32 %v1047, %v1432
        %v1460 = vadd.f32 %v1048, %v1445
        %v1461 = vadd.f32 %v1049, %v1458
        %v1462 = vld [vmem:[%s202 + $0x60] sm:$0xf]
        %v1463 = vld [vmem:[%s202 + $0x64] sm:$0xf]
        %v1464 = vld [vmem:[%s202 + $0x68] sm:$0xf]
        %v1465 = vld [vmem:[%s202 + $0x6c] sm:$0xf]
        %v1466 = vld [vmem:[%s202 + $0x70] sm:$0xf]
        %v1467 = vld [vmem:[%s202 + $0x74] sm:$0xf]
        %v1468 = vld [vmem:[%s202 + $0x78] sm:$0xf]
        %v1469 = vld [vmem:[%s202 + $0x7c] sm:$0xf]
        %v1478 = vunpack.c.l.b16 %v1462
        %v1479 = vunpack.c.l.b16 %v1463
        %v1480 = vunpack.c.l.b16 %v1464
        %v1481 = vunpack.c.l.b16 %v1465
        %v1482 = vunpack.c.l.b16 %v1466
        %v1483 = vunpack.c.l.b16 %v1467
        %v1484 = vunpack.c.l.b16 %v1468
        %v1485 = vunpack.c.l.b16 %v1469
        %v1486 = vpack.c.b16 %v1479, %v1478
        %v1487 = vpack.c.b16 %v1481, %v1480
        %v1488 = vpack.c.b16 %v1483, %v1482
        %v1489 = vpack.c.b16 %v1485, %v1484
        %v1491 = vsel %vm270, %v1486, 0
        %v1494 = vsel %vm270, %v1487, 0
        %v1497 = vsel %vm270, %v1488, 0
        %v1500 = vsel %vm270, %v1489, 0
        %1502 = vmatprep.subr.bf16.mxu0 0
        %1503 = vmatpush1.bf16.msra.mxu0 0
        %1504 = vmatprep.subr.bf16.mxu0 0
        %1505 = vmatpush1.bf16.msra.mxu0 0
        %1506 = vmatprep.subr.bf16.mxu0 0
        %1507 = vmatpush1.bf16.msra.mxu0 0
        %1508 = vmatprep.subr.bf16.mxu0 0
        %1509 = vmatpush1.bf16.msra.mxu0 0
        %1510 = vmatprep.subr.bf16.mxu0 0
        %1511 = vmatpush1.bf16.msra.mxu0 0
        %1512 = vmatprep.subr.bf16.mxu0 0
        %1513 = vmatpush1.bf16.msra.mxu0 0
        %1514 = vmatprep.subr.bf16.mxu0 0
        %1515 = vmatpush1.bf16.msra.mxu0 0
        %1516 = vmatprep.subr.bf16.mxu0 %v288
        %1517 = vmatpush1.bf16.msra.mxu0 %v285
        %1518 = vmatprep.subr.bf16.mxu0 0
        %1519 = vmatpush2.bf16.msra.mxu0 0
        %1520 = vmatprep.subr.bf16.mxu0 0
        %1521 = vmatpush2.bf16.msra.mxu0 0
        %1522 = vmatprep.subr.bf16.mxu0 0
        %1523 = vmatpush2.bf16.msra.mxu0 0
        %1524 = vmatprep.subr.bf16.mxu0 0
        %1525 = vmatpush2.bf16.msra.mxu0 0
        %1526 = vmatprep.subr.bf16.mxu0 0
        %1527 = vmatpush2.bf16.msra.mxu0 0
        %1528 = vmatprep.subr.bf16.mxu0 0
        %1529 = vmatpush2.bf16.msra.mxu0 0
        %1530 = vmatprep.subr.bf16.mxu0 0
        %1531 = vmatpush2.bf16.msra.mxu0 0
        %1532 = vmatprep.subr.bf16.mxu0 0
        %1533 = vmatpush2.bf16.msra.mxu0 0
        %1534 = vmatprep.mubr.bf16.mxu0 0
        %1535 = vmatmul.mubr.bf16.gmra.mxu0 %v1491
        %v1536 = vpop.f32.mrf.mxu0
        %v1537 = vadd.f32 %v225, %v1536
        %v1538 = vpop.f32.mrf.mxu0
        %v1539 = vadd.f32 %v229, %v1538
        %v1540 = vpop.f32.mrf.mxu0
        %v1541 = vadd.f32 %v225, %v1540
        %v1542 = vpop.f32.mrf.mxu0
        %v1543 = vadd.f32 %v229, %v1542
        %1544 = vmatprep.mubr.bf16.mxu0 0
        %1545 = vmatmul.mubr.bf16.gmra.mxu0 %v1494
        %v1546 = vpop.f32.mrf.mxu0
        %v1547 = vadd.f32 %v225, %v1546
        %v1548 = vpop.f32.mrf.mxu0
        %v1549 = vadd.f32 %v229, %v1548
        %v1550 = vpop.f32.mrf.mxu0
        %v1551 = vadd.f32 %v225, %v1550
        %v1552 = vpop.f32.mrf.mxu0
        %v1553 = vadd.f32 %v229, %v1552
        %1554 = vmatprep.mubr.bf16.mxu0 0
        %1555 = vmatmul.mubr.bf16.gmra.mxu0 %v1497
        %v1556 = vpop.f32.mrf.mxu0
        %v1557 = vadd.f32 %v225, %v1556
        %v1558 = vpop.f32.mrf.mxu0
        %v1559 = vadd.f32 %v229, %v1558
        %v1560 = vpop.f32.mrf.mxu0
        %v1561 = vadd.f32 %v225, %v1560
        %v1562 = vpop.f32.mrf.mxu0
        %v1563 = vadd.f32 %v229, %v1562
        %1564 = vmatprep.mubr.bf16.mxu0 0
        %1565 = vmatmul.mubr.bf16.gmra.mxu0 %v1500
        %v1566 = vpop.f32.mrf.mxu0
        %v1567 = vadd.f32 %v225, %v1566
        %v1568 = vpop.f32.mrf.mxu0
        %v1569 = vadd.f32 %v229, %v1568
        %v1570 = vpop.f32.mrf.mxu0
        %v1571 = vadd.f32 %v225, %v1570
        %v1572 = vpop.f32.mrf.mxu0
        %v1573 = vadd.f32 %v229, %v1572
        %1574 = vdwg.mxu0
        %1575 = vmatprep.subr.bf16.mxu0 0
        %1576 = vmatpush1.bf16.msra.mxu0 0
        %1577 = vmatprep.subr.bf16.mxu0 0
        %1578 = vmatpush1.bf16.msra.mxu0 0
        %1579 = vmatprep.subr.bf16.mxu0 0
        %1580 = vmatpush1.bf16.msra.mxu0 0
        %1581 = vmatprep.subr.bf16.mxu0 0
        %1582 = vmatpush1.bf16.msra.mxu0 0
        %1583 = vmatprep.subr.bf16.mxu0 0
        %1584 = vmatpush1.bf16.msra.mxu0 0
        %1585 = vmatprep.subr.bf16.mxu0 0
        %1586 = vmatpush1.bf16.msra.mxu0 0
        %1587 = vmatprep.subr.bf16.mxu0 0
        %1588 = vmatpush1.bf16.msra.mxu0 0
        %1589 = vmatprep.subr.bf16.mxu0 0
        %1590 = vmatpush1.bf16.msra.mxu0 %v291
        %1591 = vmatprep.subr.bf16.mxu0 0
        %1592 = vmatpush2.bf16.msra.mxu0 0
        %1593 = vmatprep.subr.bf16.mxu0 0
        %1594 = vmatpush2.bf16.msra.mxu0 0
        %1595 = vmatprep.subr.bf16.mxu0 0
        %1596 = vmatpush2.bf16.msra.mxu0 0
        %1597 = vmatprep.subr.bf16.mxu0 0
        %1598 = vmatpush2.bf16.msra.mxu0 0
        %1599 = vmatprep.subr.bf16.mxu0 0
        %1600 = vmatpush2.bf16.msra.mxu0 0
        %1601 = vmatprep.subr.bf16.mxu0 0
        %1602 = vmatpush2.bf16.msra.mxu0 0
        %1603 = vmatprep.subr.bf16.mxu0 0
        %1604 = vmatpush2.bf16.msra.mxu0 0
        %1605 = vmatprep.subr.bf16.mxu0 0
        %1606 = vmatpush2.bf16.msra.mxu0 0
        %1607 = vmatprep.mubr.bf16.mxu0 0
        %1608 = vmatmul.mubr.bf16.gmra.mxu0 %v1491
        %v1609 = vpop.f32.mrf.mxu0
        %v1610 = vadd.f32 %v233, %v1609
        %v1611 = vpop.f32.mrf.mxu0
        %v1612 = vpop.f32.mrf.mxu0
        %v1613 = vadd.f32 %v233, %v1612
        %v1614 = vpop.f32.mrf.mxu0
        %1615 = vmatprep.mubr.bf16.mxu0 0
        %1616 = vmatmul.mubr.bf16.gmra.mxu0 %v1494
        %v1617 = vpop.f32.mrf.mxu0
        %v1618 = vadd.f32 %v233, %v1617
        %v1619 = vpop.f32.mrf.mxu0
        %v1620 = vpop.f32.mrf.mxu0
        %v1621 = vadd.f32 %v233, %v1620
        %v1622 = vpop.f32.mrf.mxu0
        %1623 = vmatprep.mubr.bf16.mxu0 0
        %1624 = vmatmul.mubr.bf16.gmra.mxu0 %v1497
        %v1625 = vpop.f32.mrf.mxu0
        %v1626 = vadd.f32 %v233, %v1625
        %v1627 = vpop.f32.mrf.mxu0
        %v1628 = vpop.f32.mrf.mxu0
        %v1629 = vadd.f32 %v233, %v1628
        %v1630 = vpop.f32.mrf.mxu0
        %1631 = vmatprep.mubr.bf16.mxu0 0
        %1632 = vmatmul.mubr.bf16.gmra.mxu0 %v1500
        %v1633 = vpop.f32.mrf.mxu0
        %v1634 = vadd.f32 %v233, %v1633
        %v1635 = vpop.f32.mrf.mxu0
        %v1636 = vpop.f32.mrf.mxu0
        %v1637 = vadd.f32 %v233, %v1636
        %v1638 = vpop.f32.mrf.mxu0
        %1639 = vdwg.mxu0
        %v1640 = vmax.f32 %v1228, %v1537
        %v1641 = vmax.f32 %v1229, %v1539
        %v1642 = vmax.f32 %v1230, %v1610
        %v1643 = vmax.f32 %v1231, %v1541
        %v1644 = vmax.f32 %v1232, %v1543
        %v1645 = vmax.f32 %v1233, %v1613
        %v1646 = vmax.f32 %v1234, %v1547
        %v1647 = vmax.f32 %v1235, %v1549
        %v1648 = vmax.f32 %v1236, %v1618
        %v1649 = vmax.f32 %v1237, %v1551
        %v1650 = vmax.f32 %v1238, %v1553
        %v1651 = vmax.f32 %v1239, %v1621
        %v1652 = vmax.f32 %v1240, %v1557
        %v1653 = vmax.f32 %v1241, %v1559
        %v1654 = vmax.f32 %v1242, %v1626
        %v1655 = vmax.f32 %v1243, %v1561
        %v1656 = vmax.f32 %v1244, %v1563
        %v1657 = vmax.f32 %v1245, %v1629
        %v1658 = vmax.f32 %v1246, %v1567
        %v1659 = vmax.f32 %v1247, %v1569
        %v1660 = vmax.f32 %v1248, %v1634
        %v1661 = vmax.f32 %v1249, %v1571
        %v1662 = vmax.f32 %v1250, %v1573
        %v1663 = vmax.f32 %v1251, %v1637
        %v1664 = vmul.f32 %v1537, %v1537
        %v1665 = vmul.f32 %v1539, %v1539
        %v1666 = vmul.f32 %v1610, %v1610
        %v1667 = vmul.f32 %v1541, %v1541
        %v1668 = vmul.f32 %v1543, %v1543
        %v1669 = vmul.f32 %v1613, %v1613
        %v1670 = vmul.f32 %v1547, %v1547
        %v1671 = vmul.f32 %v1549, %v1549
        %v1672 = vmul.f32 %v1618, %v1618
        %v1673 = vmul.f32 %v1551, %v1551
        %v1674 = vmul.f32 %v1553, %v1553
        %v1675 = vmul.f32 %v1621, %v1621
        %v1676 = vmul.f32 %v1557, %v1557
        %v1677 = vmul.f32 %v1559, %v1559
        %v1678 = vmul.f32 %v1626, %v1626
        %v1679 = vmul.f32 %v1561, %v1561
        %v1680 = vmul.f32 %v1563, %v1563
        %v1681 = vmul.f32 %v1629, %v1629
        %v1682 = vmul.f32 %v1567, %v1567
        %v1683 = vmul.f32 %v1569, %v1569
        %v1684 = vmul.f32 %v1634, %v1634
        %v1685 = vmul.f32 %v1571, %v1571
        %v1686 = vmul.f32 %v1573, %v1573
        %v1687 = vmul.f32 %v1637, %v1637
        %v1688 = vadd.f32 %v1664, %v1665
        %v1689 = vadd.f32 %v1688, %v1666
        %1690 = vadd.xlane.f32.xlu0 %v1689
        %v1691 = vpop.xlane.xlu0 %1690
        %v1692 = vadd.f32 %v1667, %v1668
        %v1693 = vadd.f32 %v1692, %v1669
        %1694 = vadd.xlane.f32.xlu0 %v1693
        %v1695 = vpop.xlane.xlu0 %1694
        %v1696 = vadd.f32 %v1670, %v1671
        %v1697 = vadd.f32 %v1696, %v1672
        %1698 = vadd.xlane.f32.xlu0 %v1697
        %v1699 = vpop.xlane.xlu0 %1698
        %v1700 = vadd.f32 %v1673, %v1674
        %v1701 = vadd.f32 %v1700, %v1675
        %1702 = vadd.xlane.f32.xlu0 %v1701
        %v1703 = vpop.xlane.xlu0 %1702
        %v1704 = vadd.f32 %v1676, %v1677
        %v1705 = vadd.f32 %v1704, %v1678
        %1706 = vadd.xlane.f32.xlu0 %v1705
        %v1707 = vpop.xlane.xlu0 %1706
        %v1708 = vadd.f32 %v1679, %v1680
        %v1709 = vadd.f32 %v1708, %v1681
        %1710 = vadd.xlane.f32.xlu0 %v1709
        %v1711 = vpop.xlane.xlu0 %1710
        %v1712 = vadd.f32 %v1682, %v1683
        %v1713 = vadd.f32 %v1712, %v1684
        %1714 = vadd.xlane.f32.xlu0 %v1713
        %v1715 = vpop.xlane.xlu0 %1714
        %v1716 = vadd.f32 %v1685, %v1686
        %v1717 = vadd.f32 %v1716, %v1687
        %1718 = vadd.xlane.f32.xlu0 %v1717
        %v1719 = vpop.xlane.xlu0 %1718
        %v1720 = vmax.f32 %v1691, 1e-24
        %v1721 = vmax.f32 %v1695, 1e-24
        %v1722 = vmax.f32 %v1699, 1e-24
        %v1723 = vmax.f32 %v1703, 1e-24
        %v1724 = vmax.f32 %v1707, 1e-24
        %v1725 = vmax.f32 %v1711, 1e-24
        %v1726 = vmax.f32 %v1715, 1e-24
        %v1727 = vmax.f32 %v1719, 1e-24
        %v1728 = vrsqrt.pop %v1720
        %v1729 = vrsqrt.pop %v1721
        %v1730 = vrsqrt.pop %v1722
        %v1731 = vrsqrt.pop %v1723
        %v1732 = vrsqrt.pop %v1724
        %v1733 = vrsqrt.pop %v1725
        %v1734 = vrsqrt.pop %v1726
        %v1735 = vrsqrt.pop %v1727
        %v1736 = vmul.f32 %v1537, %v1728
        %v1737 = vmul.f32 %v1539, %v1728
        %v1738 = vmul.f32 %v1610, %v1728
        %v1739 = vmul.f32 %v1541, %v1729
        %v1740 = vmul.f32 %v1543, %v1729
        %v1741 = vmul.f32 %v1613, %v1729
        %v1742 = vmul.f32 %v1547, %v1730
        %v1743 = vmul.f32 %v1549, %v1730
        %v1744 = vmul.f32 %v1618, %v1730
        %v1745 = vmul.f32 %v1551, %v1731
        %v1746 = vmul.f32 %v1553, %v1731
        %v1747 = vmul.f32 %v1621, %v1731
        %v1748 = vmul.f32 %v1557, %v1732
        %v1749 = vmul.f32 %v1559, %v1732
        %v1750 = vmul.f32 %v1626, %v1732
        %v1751 = vmul.f32 %v1561, %v1733
        %v1752 = vmul.f32 %v1563, %v1733
        %v1753 = vmul.f32 %v1629, %v1733
        %v1754 = vmul.f32 %v1567, %v1734
        %v1755 = vmul.f32 %v1569, %v1734
        %v1756 = vmul.f32 %v1634, %v1734
        %v1757 = vmul.f32 %v1571, %v1735
        %v1758 = vmul.f32 %v1573, %v1735
        %v1759 = vmul.f32 %v1637, %v1735
        %v1760 = vmax.f32 %v1736, 1e-06
        %v1761 = vmax.f32 %v1737, 1e-06
        %v1762 = vmax.f32 %v1738, 1e-06
        %v1763 = vmax.f32 %v1739, 1e-06
        %v1764 = vmax.f32 %v1740, 1e-06
        %v1765 = vmax.f32 %v1741, 1e-06
        %v1766 = vmax.f32 %v1742, 1e-06
        %v1767 = vmax.f32 %v1743, 1e-06
        %v1768 = vmax.f32 %v1744, 1e-06
        %v1769 = vmax.f32 %v1745, 1e-06
        %v1770 = vmax.f32 %v1746, 1e-06
        %v1771 = vmax.f32 %v1747, 1e-06
        %v1772 = vmax.f32 %v1748, 1e-06
        %v1773 = vmax.f32 %v1749, 1e-06
        %v1774 = vmax.f32 %v1750, 1e-06
        %v1775 = vmax.f32 %v1751, 1e-06
        %v1776 = vmax.f32 %v1752, 1e-06
        %v1777 = vmax.f32 %v1753, 1e-06
        %v1778 = vmax.f32 %v1754, 1e-06
        %v1779 = vmax.f32 %v1755, 1e-06
        %v1780 = vmax.f32 %v1756, 1e-06
        %v1781 = vmax.f32 %v1757, 1e-06
        %v1782 = vmax.f32 %v1758, 1e-06
        %v1783 = vmax.f32 %v1759, 1e-06
        %v1784 = vmul.f32 %v1760, %v1760
        %v1785 = vmul.f32 %v1761, %v1761
        %v1786 = vmul.f32 %v1762, %v1762
        %v1787 = vmul.f32 %v1763, %v1763
        %v1788 = vmul.f32 %v1764, %v1764
        %v1789 = vmul.f32 %v1765, %v1765
        %v1790 = vmul.f32 %v1766, %v1766
        %v1791 = vmul.f32 %v1767, %v1767
        %v1792 = vmul.f32 %v1768, %v1768
        %v1793 = vmul.f32 %v1769, %v1769
        %v1794 = vmul.f32 %v1770, %v1770
        %v1795 = vmul.f32 %v1771, %v1771
        %v1796 = vmul.f32 %v1772, %v1772
        %v1797 = vmul.f32 %v1773, %v1773
        %v1798 = vmul.f32 %v1774, %v1774
        %v1799 = vmul.f32 %v1775, %v1775
        %v1800 = vmul.f32 %v1776, %v1776
        %v1801 = vmul.f32 %v1777, %v1777
        %v1802 = vmul.f32 %v1778, %v1778
        %v1803 = vmul.f32 %v1779, %v1779
        %v1804 = vmul.f32 %v1780, %v1780
        %v1805 = vmul.f32 %v1781, %v1781
        %v1806 = vmul.f32 %v1782, %v1782
        %v1807 = vmul.f32 %v1783, %v1783
        %v1808 = vmul.f32 %v1784, %v1760
        %v1809 = vmul.f32 %v1785, %v1761
        %v1810 = vmul.f32 %v1786, %v1762
        %v1811 = vmul.f32 %v1787, %v1763
        %v1812 = vmul.f32 %v1788, %v1764
        %v1813 = vmul.f32 %v1789, %v1765
        %v1814 = vmul.f32 %v1790, %v1766
        %v1815 = vmul.f32 %v1791, %v1767
        %v1816 = vmul.f32 %v1792, %v1768
        %v1817 = vmul.f32 %v1793, %v1769
        %v1818 = vmul.f32 %v1794, %v1770
        %v1819 = vmul.f32 %v1795, %v1771
        %v1820 = vmul.f32 %v1796, %v1772
        %v1821 = vmul.f32 %v1797, %v1773
        %v1822 = vmul.f32 %v1798, %v1774
        %v1823 = vmul.f32 %v1799, %v1775
        %v1824 = vmul.f32 %v1800, %v1776
        %v1825 = vmul.f32 %v1801, %v1777
        %v1826 = vmul.f32 %v1802, %v1778
        %v1827 = vmul.f32 %v1803, %v1779
        %v1828 = vmul.f32 %v1804, %v1780
        %v1829 = vmul.f32 %v1805, %v1781
        %v1830 = vmul.f32 %v1806, %v1782
        %v1831 = vmul.f32 %v1807, %v1783
        %v1832 = vadd.f32 %v1808, %v1811
        %v1833 = vadd.f32 %v1832, %v1814
        %v1834 = vadd.f32 %v1833, %v1817
        %v1835 = vadd.f32 %v1834, %v1820
        %v1836 = vadd.f32 %v1835, %v1823
        %v1837 = vadd.f32 %v1836, %v1826
        %v1838 = vadd.f32 %v1837, %v1829
        %v1839 = vrot.slane %v1838, 4
        %v1840 = vadd.f32 %v1838, %v1839
        %v1841 = vrot.slane %v1840, 2
        %v1842 = vadd.f32 %v1840, %v1841
        %v1843 = vrot.slane %v1842, 1
        %v1844 = vadd.f32 %v1842, %v1843
        %v1845 = vadd.f32 %v1809, %v1812
        %v1846 = vadd.f32 %v1845, %v1815
        %v1847 = vadd.f32 %v1846, %v1818
        %v1848 = vadd.f32 %v1847, %v1821
        %v1849 = vadd.f32 %v1848, %v1824
        %v1850 = vadd.f32 %v1849, %v1827
        %v1851 = vadd.f32 %v1850, %v1830
        %v1852 = vrot.slane %v1851, 4
        %v1853 = vadd.f32 %v1851, %v1852
        %v1854 = vrot.slane %v1853, 2
        %v1855 = vadd.f32 %v1853, %v1854
        %v1856 = vrot.slane %v1855, 1
        %v1857 = vadd.f32 %v1855, %v1856
        %v1858 = vadd.f32 %v1810, %v1813
        %v1859 = vadd.f32 %v1858, %v1816
        %v1860 = vadd.f32 %v1859, %v1819
        %v1861 = vadd.f32 %v1860, %v1822
        %v1862 = vadd.f32 %v1861, %v1825
        %v1863 = vadd.f32 %v1862, %v1828
        %v1864 = vadd.f32 %v1863, %v1831
        %v1865 = vrot.slane %v1864, 4
        %v1866 = vadd.f32 %v1864, %v1865
        %v1867 = vrot.slane %v1866, 2
        %v1868 = vadd.f32 %v1866, %v1867
        %v1869 = vrot.slane %v1868, 1
        %v1870 = vadd.f32 %v1868, %v1869
        %v1871 = vadd.f32 %v1459, %v1844
        %v1872 = vadd.f32 %v1460, %v1857
        %v1873 = vadd.f32 %v1461, %v1870
        %v1874 = vld [vmem:[%s202 + $0x80] sm:$0xf]
        %v1875 = vld [vmem:[%s202 + $0x84] sm:$0xf]
        %v1876 = vld [vmem:[%s202 + $0x88] sm:$0xf]
        %v1877 = vld [vmem:[%s202 + $0x8c] sm:$0xf]
        %v1878 = vld [vmem:[%s202 + $0x90] sm:$0xf]
        %v1879 = vld [vmem:[%s202 + $0x94] sm:$0xf]
        %v1880 = vld [vmem:[%s202 + $0x98] sm:$0xf]
        %v1881 = vld [vmem:[%s202 + $0x9c] sm:$0xf]
        %v1890 = vunpack.c.l.b16 %v1874
        %v1891 = vunpack.c.l.b16 %v1875
        %v1892 = vunpack.c.l.b16 %v1876
        %v1893 = vunpack.c.l.b16 %v1877
        %v1894 = vunpack.c.l.b16 %v1878
        %v1895 = vunpack.c.l.b16 %v1879
        %v1896 = vunpack.c.l.b16 %v1880
        %v1897 = vunpack.c.l.b16 %v1881
        %v1898 = vpack.c.b16 %v1891, %v1890
        %v1899 = vpack.c.b16 %v1893, %v1892
        %v1900 = vpack.c.b16 %v1895, %v1894
        %v1901 = vpack.c.b16 %v1897, %v1896
        %v1903 = vsel %vm270, %v1898, 0
        %v1906 = vsel %vm270, %v1899, 0
        %v1909 = vsel %vm270, %v1900, 0
        %v1912 = vsel %vm270, %v1901, 0
        %1914 = vmatprep.subr.bf16.mxu0 0
        %1915 = vmatpush1.bf16.msra.mxu0 0
        %1916 = vmatprep.subr.bf16.mxu0 0
        %1917 = vmatpush1.bf16.msra.mxu0 0
        %1918 = vmatprep.subr.bf16.mxu0 0
        %1919 = vmatpush1.bf16.msra.mxu0 0
        %1920 = vmatprep.subr.bf16.mxu0 0
        %1921 = vmatpush1.bf16.msra.mxu0 0
        %1922 = vmatprep.subr.bf16.mxu0 0
        %1923 = vmatpush1.bf16.msra.mxu0 0
        %1924 = vmatprep.subr.bf16.mxu0 0
        %1925 = vmatpush1.bf16.msra.mxu0 0
        %1926 = vmatprep.subr.bf16.mxu0 0
        %1927 = vmatpush1.bf16.msra.mxu0 0
        %1928 = vmatprep.subr.bf16.mxu0 %v288
        %1929 = vmatpush1.bf16.msra.mxu0 %v285
        %1930 = vmatprep.subr.bf16.mxu0 0
        %1931 = vmatpush2.bf16.msra.mxu0 0
        %1932 = vmatprep.subr.bf16.mxu0 0
        %1933 = vmatpush2.bf16.msra.mxu0 0
        %1934 = vmatprep.subr.bf16.mxu0 0
        %1935 = vmatpush2.bf16.msra.mxu0 0
        %1936 = vmatprep.subr.bf16.mxu0 0
        %1937 = vmatpush2.bf16.msra.mxu0 0
        %1938 = vmatprep.subr.bf16.mxu0 0
        %1939 = vmatpush2.bf16.msra.mxu0 0
        %1940 = vmatprep.subr.bf16.mxu0 0
        %1941 = vmatpush2.bf16.msra.mxu0 0
        %1942 = vmatprep.subr.bf16.mxu0 0
        %1943 = vmatpush2.bf16.msra.mxu0 0
        %1944 = vmatprep.subr.bf16.mxu0 0
        %1945 = vmatpush2.bf16.msra.mxu0 0
        %1946 = vmatprep.mubr.bf16.mxu0 0
        %1947 = vmatmul.mubr.bf16.gmra.mxu0 %v1903
        %v1948 = vpop.f32.mrf.mxu0
        %v1949 = vadd.f32 %v225, %v1948
        %v1950 = vpop.f32.mrf.mxu0
        %v1951 = vadd.f32 %v229, %v1950
        %v1952 = vpop.f32.mrf.mxu0
        %v1953 = vadd.f32 %v225, %v1952
        %v1954 = vpop.f32.mrf.mxu0
        %v1955 = vadd.f32 %v229, %v1954
        %1956 = vmatprep.mubr.bf16.mxu0 0
        %1957 = vmatmul.mubr.bf16.gmra.mxu0 %v1906
        %v1958 = vpop.f32.mrf.mxu0
        %v1959 = vadd.f32 %v225, %v1958
        %v1960 = vpop.f32.mrf.mxu0
        %v1961 = vadd.f32 %v229, %v1960
        %v1962 = vpop.f32.mrf.mxu0
        %v1963 = vadd.f32 %v225, %v1962
        %v1964 = vpop.f32.mrf.mxu0
        %v1965 = vadd.f32 %v229, %v1964
        %1966 = vmatprep.mubr.bf16.mxu0 0
        %1967 = vmatmul.mubr.bf16.gmra.mxu0 %v1909
        %v1968 = vpop.f32.mrf.mxu0
        %v1969 = vadd.f32 %v225, %v1968
        %v1970 = vpop.f32.mrf.mxu0
        %v1971 = vadd.f32 %v229, %v1970
        %v1972 = vpop.f32.mrf.mxu0
        %v1973 = vadd.f32 %v225, %v1972
        %v1974 = vpop.f32.mrf.mxu0
        %v1975 = vadd.f32 %v229, %v1974
        %1976 = vmatprep.mubr.bf16.mxu0 0
        %1977 = vmatmul.mubr.bf16.gmra.mxu0 %v1912
        %v1978 = vpop.f32.mrf.mxu0
        %v1979 = vadd.f32 %v225, %v1978
        %v1980 = vpop.f32.mrf.mxu0
        %v1981 = vadd.f32 %v229, %v1980
        %v1982 = vpop.f32.mrf.mxu0
        %v1983 = vadd.f32 %v225, %v1982
        %v1984 = vpop.f32.mrf.mxu0
        %v1985 = vadd.f32 %v229, %v1984
        %1986 = vdwg.mxu0
        %1987 = vmatprep.subr.bf16.mxu0 0
        %1988 = vmatpush1.bf16.msra.mxu0 0
        %1989 = vmatprep.subr.bf16.mxu0 0
        %1990 = vmatpush1.bf16.msra.mxu0 0
        %1991 = vmatprep.subr.bf16.mxu0 0
        %1992 = vmatpush1.bf16.msra.mxu0 0
        %1993 = vmatprep.subr.bf16.mxu0 0
        %1994 = vmatpush1.bf16.msra.mxu0 0
        %1995 = vmatprep.subr.bf16.mxu0 0
        %1996 = vmatpush1.bf16.msra.mxu0 0
        %1997 = vmatprep.subr.bf16.mxu0 0
        %1998 = vmatpush1.bf16.msra.mxu0 0
        %1999 = vmatprep.subr.bf16.mxu0 0
        %2000 = vmatpush1.bf16.msra.mxu0 0
        %2001 = vmatprep.subr.bf16.mxu0 0
        %2002 = vmatpush1.bf16.msra.mxu0 %v291
        %2003 = vmatprep.subr.bf16.mxu0 0
        %2004 = vmatpush2.bf16.msra.mxu0 0
        %2005 = vmatprep.subr.bf16.mxu0 0
        %2006 = vmatpush2.bf16.msra.mxu0 0
        %2007 = vmatprep.subr.bf16.mxu0 0
        %2008 = vmatpush2.bf16.msra.mxu0 0
        %2009 = vmatprep.subr.bf16.mxu0 0
        %2010 = vmatpush2.bf16.msra.mxu0 0
        %2011 = vmatprep.subr.bf16.mxu0 0
        %2012 = vmatpush2.bf16.msra.mxu0 0
        %2013 = vmatprep.subr.bf16.mxu0 0
        %2014 = vmatpush2.bf16.msra.mxu0 0
        %2015 = vmatprep.subr.bf16.mxu0 0
        %2016 = vmatpush2.bf16.msra.mxu0 0
        %2017 = vmatprep.subr.bf16.mxu0 0
        %2018 = vmatpush2.bf16.msra.mxu0 0
        %2019 = vmatprep.mubr.bf16.mxu0 0
        %2020 = vmatmul.mubr.bf16.gmra.mxu0 %v1903
        %v2021 = vpop.f32.mrf.mxu0
        %v2022 = vadd.f32 %v233, %v2021
        %v2023 = vpop.f32.mrf.mxu0
        %v2024 = vpop.f32.mrf.mxu0
        %v2025 = vadd.f32 %v233, %v2024
        %v2026 = vpop.f32.mrf.mxu0
        %2027 = vmatprep.mubr.bf16.mxu0 0
        %2028 = vmatmul.mubr.bf16.gmra.mxu0 %v1906
        %v2029 = vpop.f32.mrf.mxu0
        %v2030 = vadd.f32 %v233, %v2029
        %v2031 = vpop.f32.mrf.mxu0
        %v2032 = vpop.f32.mrf.mxu0
        %v2033 = vadd.f32 %v233, %v2032
        %v2034 = vpop.f32.mrf.mxu0
        %2035 = vmatprep.mubr.bf16.mxu0 0
        %2036 = vmatmul.mubr.bf16.gmra.mxu0 %v1909
        %v2037 = vpop.f32.mrf.mxu0
        %v2038 = vadd.f32 %v233, %v2037
        %v2039 = vpop.f32.mrf.mxu0
        %v2040 = vpop.f32.mrf.mxu0
        %v2041 = vadd.f32 %v233, %v2040
        %v2042 = vpop.f32.mrf.mxu0
        %2043 = vmatprep.mubr.bf16.mxu0 0
        %2044 = vmatmul.mubr.bf16.gmra.mxu0 %v1912
        %v2045 = vpop.f32.mrf.mxu0
        %v2046 = vadd.f32 %v233, %v2045
        %v2047 = vpop.f32.mrf.mxu0
        %v2048 = vpop.f32.mrf.mxu0
        %v2049 = vadd.f32 %v233, %v2048
        %v2050 = vpop.f32.mrf.mxu0
        %2051 = vdwg.mxu0
        %v2052 = vmax.f32 %v1640, %v1949
        %v2053 = vmax.f32 %v1641, %v1951
        %v2054 = vmax.f32 %v1642, %v2022
        %v2055 = vmax.f32 %v1643, %v1953
        %v2056 = vmax.f32 %v1644, %v1955
        %v2057 = vmax.f32 %v1645, %v2025
        %v2058 = vmax.f32 %v1646, %v1959
        %v2059 = vmax.f32 %v1647, %v1961
        %v2060 = vmax.f32 %v1648, %v2030
        %v2061 = vmax.f32 %v1649, %v1963
        %v2062 = vmax.f32 %v1650, %v1965
        %v2063 = vmax.f32 %v1651, %v2033
        %v2064 = vmax.f32 %v1652, %v1969
        %v2065 = vmax.f32 %v1653, %v1971
        %v2066 = vmax.f32 %v1654, %v2038
        %v2067 = vmax.f32 %v1655, %v1973
        %v2068 = vmax.f32 %v1656, %v1975
        %v2069 = vmax.f32 %v1657, %v2041
        %v2070 = vmax.f32 %v1658, %v1979
        %v2071 = vmax.f32 %v1659, %v1981
        %v2072 = vmax.f32 %v1660, %v2046
        %v2073 = vmax.f32 %v1661, %v1983
        %v2074 = vmax.f32 %v1662, %v1985
        %v2075 = vmax.f32 %v1663, %v2049
        %v2076 = vmul.f32 %v1949, %v1949
        %v2077 = vmul.f32 %v1951, %v1951
        %v2078 = vmul.f32 %v2022, %v2022
        %v2079 = vmul.f32 %v1953, %v1953
        %v2080 = vmul.f32 %v1955, %v1955
        %v2081 = vmul.f32 %v2025, %v2025
        %v2082 = vmul.f32 %v1959, %v1959
        %v2083 = vmul.f32 %v1961, %v1961
        %v2084 = vmul.f32 %v2030, %v2030
        %v2085 = vmul.f32 %v1963, %v1963
        %v2086 = vmul.f32 %v1965, %v1965
        %v2087 = vmul.f32 %v2033, %v2033
        %v2088 = vmul.f32 %v1969, %v1969
        %v2089 = vmul.f32 %v1971, %v1971
        %v2090 = vmul.f32 %v2038, %v2038
        %v2091 = vmul.f32 %v1973, %v1973
        %v2092 = vmul.f32 %v1975, %v1975
        %v2093 = vmul.f32 %v2041, %v2041
        %v2094 = vmul.f32 %v1979, %v1979
        %v2095 = vmul.f32 %v1981, %v1981
        %v2096 = vmul.f32 %v2046, %v2046
        %v2097 = vmul.f32 %v1983, %v1983
        %v2098 = vmul.f32 %v1985, %v1985
        %v2099 = vmul.f32 %v2049, %v2049
        %v2100 = vadd.f32 %v2076, %v2077
        %v2101 = vadd.f32 %v2100, %v2078
        %2102 = vadd.xlane.f32.xlu0 %v2101
        %v2103 = vpop.xlane.xlu0 %2102
        %v2104 = vadd.f32 %v2079, %v2080
        %v2105 = vadd.f32 %v2104, %v2081
        %2106 = vadd.xlane.f32.xlu0 %v2105
        %v2107 = vpop.xlane.xlu0 %2106
        %v2108 = vadd.f32 %v2082, %v2083
        %v2109 = vadd.f32 %v2108, %v2084
        %2110 = vadd.xlane.f32.xlu0 %v2109
        %v2111 = vpop.xlane.xlu0 %2110
        %v2112 = vadd.f32 %v2085, %v2086
        %v2113 = vadd.f32 %v2112, %v2087
        %2114 = vadd.xlane.f32.xlu0 %v2113
        %v2115 = vpop.xlane.xlu0 %2114
        %v2116 = vadd.f32 %v2088, %v2089
        %v2117 = vadd.f32 %v2116, %v2090
        %2118 = vadd.xlane.f32.xlu0 %v2117
        %v2119 = vpop.xlane.xlu0 %2118
        %v2120 = vadd.f32 %v2091, %v2092
        %v2121 = vadd.f32 %v2120, %v2093
        %2122 = vadd.xlane.f32.xlu0 %v2121
        %v2123 = vpop.xlane.xlu0 %2122
        %v2124 = vadd.f32 %v2094, %v2095
        %v2125 = vadd.f32 %v2124, %v2096
        %2126 = vadd.xlane.f32.xlu0 %v2125
        %v2127 = vpop.xlane.xlu0 %2126
        %v2128 = vadd.f32 %v2097, %v2098
        %v2129 = vadd.f32 %v2128, %v2099
        %2130 = vadd.xlane.f32.xlu0 %v2129
        %v2131 = vpop.xlane.xlu0 %2130
        %v2132 = vmax.f32 %v2103, 1e-24
        %v2133 = vmax.f32 %v2107, 1e-24
        %v2134 = vmax.f32 %v2111, 1e-24
        %v2135 = vmax.f32 %v2115, 1e-24
        %v2136 = vmax.f32 %v2119, 1e-24
        %v2137 = vmax.f32 %v2123, 1e-24
        %v2138 = vmax.f32 %v2127, 1e-24
        %v2139 = vmax.f32 %v2131, 1e-24
        %v2140 = vrsqrt.pop %v2132
        %v2141 = vrsqrt.pop %v2133
        %v2142 = vrsqrt.pop %v2134
        %v2143 = vrsqrt.pop %v2135
        %v2144 = vrsqrt.pop %v2136
        %v2145 = vrsqrt.pop %v2137
        %v2146 = vrsqrt.pop %v2138
        %v2147 = vrsqrt.pop %v2139
        %v2148 = vmul.f32 %v1949, %v2140
        %v2149 = vmul.f32 %v1951, %v2140
        %v2150 = vmul.f32 %v2022, %v2140
        %v2151 = vmul.f32 %v1953, %v2141
        %v2152 = vmul.f32 %v1955, %v2141
        %v2153 = vmul.f32 %v2025, %v2141
        %v2154 = vmul.f32 %v1959, %v2142
        %v2155 = vmul.f32 %v1961, %v2142
        %v2156 = vmul.f32 %v2030, %v2142
        %v2157 = vmul.f32 %v1963, %v2143
        %v2158 = vmul.f32 %v1965, %v2143
        %v2159 = vmul.f32 %v2033, %v2143
        %v2160 = vmul.f32 %v1969, %v2144
        %v2161 = vmul.f32 %v1971, %v2144
        %v2162 = vmul.f32 %v2038, %v2144
        %v2163 = vmul.f32 %v1973, %v2145
        %v2164 = vmul.f32 %v1975, %v2145
        %v2165 = vmul.f32 %v2041, %v2145
        %v2166 = vmul.f32 %v1979, %v2146
        %v2167 = vmul.f32 %v1981, %v2146
        %v2168 = vmul.f32 %v2046, %v2146
        %v2169 = vmul.f32 %v1983, %v2147
        %v2170 = vmul.f32 %v1985, %v2147
        %v2171 = vmul.f32 %v2049, %v2147
        %v2172 = vmax.f32 %v2148, 1e-06
        %v2173 = vmax.f32 %v2149, 1e-06
        %v2174 = vmax.f32 %v2150, 1e-06
        %v2175 = vmax.f32 %v2151, 1e-06
        %v2176 = vmax.f32 %v2152, 1e-06
        %v2177 = vmax.f32 %v2153, 1e-06
        %v2178 = vmax.f32 %v2154, 1e-06
        %v2179 = vmax.f32 %v2155, 1e-06
        %v2180 = vmax.f32 %v2156, 1e-06
        %v2181 = vmax.f32 %v2157, 1e-06
        %v2182 = vmax.f32 %v2158, 1e-06
        %v2183 = vmax.f32 %v2159, 1e-06
        %v2184 = vmax.f32 %v2160, 1e-06
        %v2185 = vmax.f32 %v2161, 1e-06
        %v2186 = vmax.f32 %v2162, 1e-06
        %v2187 = vmax.f32 %v2163, 1e-06
        %v2188 = vmax.f32 %v2164, 1e-06
        %v2189 = vmax.f32 %v2165, 1e-06
        %v2190 = vmax.f32 %v2166, 1e-06
        %v2191 = vmax.f32 %v2167, 1e-06
        %v2192 = vmax.f32 %v2168, 1e-06
        %v2193 = vmax.f32 %v2169, 1e-06
        %v2194 = vmax.f32 %v2170, 1e-06
        %v2195 = vmax.f32 %v2171, 1e-06
        %v2196 = vmul.f32 %v2172, %v2172
        %v2197 = vmul.f32 %v2173, %v2173
        %v2198 = vmul.f32 %v2174, %v2174
        %v2199 = vmul.f32 %v2175, %v2175
        %v2200 = vmul.f32 %v2176, %v2176
        %v2201 = vmul.f32 %v2177, %v2177
        %v2202 = vmul.f32 %v2178, %v2178
        %v2203 = vmul.f32 %v2179, %v2179
        %v2204 = vmul.f32 %v2180, %v2180
        %v2205 = vmul.f32 %v2181, %v2181
        %v2206 = vmul.f32 %v2182, %v2182
        %v2207 = vmul.f32 %v2183, %v2183
        %v2208 = vmul.f32 %v2184, %v2184
        %v2209 = vmul.f32 %v2185, %v2185
        %v2210 = vmul.f32 %v2186, %v2186
        %v2211 = vmul.f32 %v2187, %v2187
        %v2212 = vmul.f32 %v2188, %v2188
        %v2213 = vmul.f32 %v2189, %v2189
        %v2214 = vmul.f32 %v2190, %v2190
        %v2215 = vmul.f32 %v2191, %v2191
        %v2216 = vmul.f32 %v2192, %v2192
        %v2217 = vmul.f32 %v2193, %v2193
        %v2218 = vmul.f32 %v2194, %v2194
        %v2219 = vmul.f32 %v2195, %v2195
        %v2220 = vmul.f32 %v2196, %v2172
        %v2221 = vmul.f32 %v2197, %v2173
        %v2222 = vmul.f32 %v2198, %v2174
        %v2223 = vmul.f32 %v2199, %v2175
        %v2224 = vmul.f32 %v2200, %v2176
        %v2225 = vmul.f32 %v2201, %v2177
        %v2226 = vmul.f32 %v2202, %v2178
        %v2227 = vmul.f32 %v2203, %v2179
        %v2228 = vmul.f32 %v2204, %v2180
        %v2229 = vmul.f32 %v2205, %v2181
        %v2230 = vmul.f32 %v2206, %v2182
        %v2231 = vmul.f32 %v2207, %v2183
        %v2232 = vmul.f32 %v2208, %v2184
        %v2233 = vmul.f32 %v2209, %v2185
        %v2234 = vmul.f32 %v2210, %v2186
        %v2235 = vmul.f32 %v2211, %v2187
        %v2236 = vmul.f32 %v2212, %v2188
        %v2237 = vmul.f32 %v2213, %v2189
        %v2238 = vmul.f32 %v2214, %v2190
        %v2239 = vmul.f32 %v2215, %v2191
        %v2240 = vmul.f32 %v2216, %v2192
        %v2241 = vmul.f32 %v2217, %v2193
        %v2242 = vmul.f32 %v2218, %v2194
        %v2243 = vmul.f32 %v2219, %v2195
        %v2244 = vadd.f32 %v2220, %v2223
        %v2245 = vadd.f32 %v2244, %v2226
        %v2246 = vadd.f32 %v2245, %v2229
        %v2247 = vadd.f32 %v2246, %v2232
        %v2248 = vadd.f32 %v2247, %v2235
        %v2249 = vadd.f32 %v2248, %v2238
        %v2250 = vadd.f32 %v2249, %v2241
        %v2251 = vrot.slane %v2250, 4
        %v2252 = vadd.f32 %v2250, %v2251
        %v2253 = vrot.slane %v2252, 2
        %v2254 = vadd.f32 %v2252, %v2253
        %v2255 = vrot.slane %v2254, 1
        %v2256 = vadd.f32 %v2254, %v2255
        %v2257 = vadd.f32 %v2221, %v2224
        %v2258 = vadd.f32 %v2257, %v2227
        %v2259 = vadd.f32 %v2258, %v2230
        %v2260 = vadd.f32 %v2259, %v2233
        %v2261 = vadd.f32 %v2260, %v2236
        %v2262 = vadd.f32 %v2261, %v2239
        %v2263 = vadd.f32 %v2262, %v2242
        %v2264 = vrot.slane %v2263, 4
        %v2265 = vadd.f32 %v2263, %v2264
        %v2266 = vrot.slane %v2265, 2
        %v2267 = vadd.f32 %v2265, %v2266
        %v2268 = vrot.slane %v2267, 1
        %v2269 = vadd.f32 %v2267, %v2268
        %v2270 = vadd.f32 %v2222, %v2225
        %v2271 = vadd.f32 %v2270, %v2228
        %v2272 = vadd.f32 %v2271, %v2231
        %v2273 = vadd.f32 %v2272, %v2234
        %v2274 = vadd.f32 %v2273, %v2237
        %v2275 = vadd.f32 %v2274, %v2240
        %v2276 = vadd.f32 %v2275, %v2243
        %v2277 = vrot.slane %v2276, 4
        %v2278 = vadd.f32 %v2276, %v2277
        %v2279 = vrot.slane %v2278, 2
        %v2280 = vadd.f32 %v2278, %v2279
        %v2281 = vrot.slane %v2280, 1
        %v2282 = vadd.f32 %v2280, %v2281
        %v2283 = vadd.f32 %v1871, %v2256
        %v2284 = vadd.f32 %v1872, %v2269
        %v2285 = vadd.f32 %v1873, %v2282
        %v2286 = vld [vmem:[%s202 + $0xa0] sm:$0xf]
        %v2287 = vld [vmem:[%s202 + $0xa4] sm:$0xf]
        %v2288 = vld [vmem:[%s202 + $0xa8] sm:$0xf]
        %v2289 = vld [vmem:[%s202 + $0xac] sm:$0xf]
        %v2290 = vld [vmem:[%s202 + $0xb0] sm:$0xf]
        %v2291 = vld [vmem:[%s202 + $0xb4] sm:$0xf]
        %v2292 = vld [vmem:[%s202 + $0xb8] sm:$0xf]
        %v2293 = vld [vmem:[%s202 + $0xbc] sm:$0xf]
        %v2302 = vunpack.c.l.b16 %v2286
        %v2303 = vunpack.c.l.b16 %v2287
        %v2304 = vunpack.c.l.b16 %v2288
        %v2305 = vunpack.c.l.b16 %v2289
        %v2306 = vunpack.c.l.b16 %v2290
        %v2307 = vunpack.c.l.b16 %v2291
        %v2308 = vunpack.c.l.b16 %v2292
        %v2309 = vunpack.c.l.b16 %v2293
        %v2310 = vpack.c.b16 %v2303, %v2302
        %v2311 = vpack.c.b16 %v2305, %v2304
        %v2312 = vpack.c.b16 %v2307, %v2306
        %v2313 = vpack.c.b16 %v2309, %v2308
        %v2315 = vsel %vm270, %v2310, 0
        %v2318 = vsel %vm270, %v2311, 0
        %v2321 = vsel %vm270, %v2312, 0
        %v2324 = vsel %vm270, %v2313, 0
        %2326 = vmatprep.subr.bf16.mxu0 0
        %2327 = vmatpush1.bf16.msra.mxu0 0
        %2328 = vmatprep.subr.bf16.mxu0 0
        %2329 = vmatpush1.bf16.msra.mxu0 0
        %2330 = vmatprep.subr.bf16.mxu0 0
        %2331 = vmatpush1.bf16.msra.mxu0 0
        %2332 = vmatprep.subr.bf16.mxu0 0
        %2333 = vmatpush1.bf16.msra.mxu0 0
        %2334 = vmatprep.subr.bf16.mxu0 0
        %2335 = vmatpush1.bf16.msra.mxu0 0
        %2336 = vmatprep.subr.bf16.mxu0 0
        %2337 = vmatpush1.bf16.msra.mxu0 0
        %2338 = vmatprep.subr.bf16.mxu0 0
        %2339 = vmatpush1.bf16.msra.mxu0 0
        %2340 = vmatprep.subr.bf16.mxu0 %v288
        %2341 = vmatpush1.bf16.msra.mxu0 %v285
        %2342 = vmatprep.subr.bf16.mxu0 0
        %2343 = vmatpush2.bf16.msra.mxu0 0
        %2344 = vmatprep.subr.bf16.mxu0 0
        %2345 = vmatpush2.bf16.msra.mxu0 0
        %2346 = vmatprep.subr.bf16.mxu0 0
        %2347 = vmatpush2.bf16.msra.mxu0 0
        %2348 = vmatprep.subr.bf16.mxu0 0
        %2349 = vmatpush2.bf16.msra.mxu0 0
        %2350 = vmatprep.subr.bf16.mxu0 0
        %2351 = vmatpush2.bf16.msra.mxu0 0
        %2352 = vmatprep.subr.bf16.mxu0 0
        %2353 = vmatpush2.bf16.msra.mxu0 0
        %2354 = vmatprep.subr.bf16.mxu0 0
        %2355 = vmatpush2.bf16.msra.mxu0 0
        %2356 = vmatprep.subr.bf16.mxu0 0
        %2357 = vmatpush2.bf16.msra.mxu0 0
        %2358 = vmatprep.mubr.bf16.mxu0 0
        %2359 = vmatmul.mubr.bf16.gmra.mxu0 %v2315
        %v2360 = vpop.f32.mrf.mxu0
        %v2361 = vadd.f32 %v225, %v2360
        %v2362 = vpop.f32.mrf.mxu0
        %v2363 = vadd.f32 %v229, %v2362
        %v2364 = vpop.f32.mrf.mxu0
        %v2365 = vadd.f32 %v225, %v2364
        %v2366 = vpop.f32.mrf.mxu0
        %v2367 = vadd.f32 %v229, %v2366
        %2368 = vmatprep.mubr.bf16.mxu0 0
        %2369 = vmatmul.mubr.bf16.gmra.mxu0 %v2318
        %v2370 = vpop.f32.mrf.mxu0
        %v2371 = vadd.f32 %v225, %v2370
        %v2372 = vpop.f32.mrf.mxu0
        %v2373 = vadd.f32 %v229, %v2372
        %v2374 = vpop.f32.mrf.mxu0
        %v2375 = vadd.f32 %v225, %v2374
        %v2376 = vpop.f32.mrf.mxu0
        %v2377 = vadd.f32 %v229, %v2376
        %2378 = vmatprep.mubr.bf16.mxu0 0
        %2379 = vmatmul.mubr.bf16.gmra.mxu0 %v2321
        %v2380 = vpop.f32.mrf.mxu0
        %v2381 = vadd.f32 %v225, %v2380
        %v2382 = vpop.f32.mrf.mxu0
        %v2383 = vadd.f32 %v229, %v2382
        %v2384 = vpop.f32.mrf.mxu0
        %v2385 = vadd.f32 %v225, %v2384
        %v2386 = vpop.f32.mrf.mxu0
        %v2387 = vadd.f32 %v229, %v2386
        %2388 = vmatprep.mubr.bf16.mxu0 0
        %2389 = vmatmul.mubr.bf16.gmra.mxu0 %v2324
        %v2390 = vpop.f32.mrf.mxu0
        %v2391 = vadd.f32 %v225, %v2390
        %v2392 = vpop.f32.mrf.mxu0
        %v2393 = vadd.f32 %v229, %v2392
        %v2394 = vpop.f32.mrf.mxu0
        %v2395 = vadd.f32 %v225, %v2394
        %v2396 = vpop.f32.mrf.mxu0
        %v2397 = vadd.f32 %v229, %v2396
        %2398 = vdwg.mxu0
        %2399 = vmatprep.subr.bf16.mxu0 0
        %2400 = vmatpush1.bf16.msra.mxu0 0
        %2401 = vmatprep.subr.bf16.mxu0 0
        %2402 = vmatpush1.bf16.msra.mxu0 0
        %2403 = vmatprep.subr.bf16.mxu0 0
        %2404 = vmatpush1.bf16.msra.mxu0 0
        %2405 = vmatprep.subr.bf16.mxu0 0
        %2406 = vmatpush1.bf16.msra.mxu0 0
        %2407 = vmatprep.subr.bf16.mxu0 0
        %2408 = vmatpush1.bf16.msra.mxu0 0
        %2409 = vmatprep.subr.bf16.mxu0 0
        %2410 = vmatpush1.bf16.msra.mxu0 0
        %2411 = vmatprep.subr.bf16.mxu0 0
        %2412 = vmatpush1.bf16.msra.mxu0 0
        %2413 = vmatprep.subr.bf16.mxu0 0
        %2414 = vmatpush1.bf16.msra.mxu0 %v291
        %2415 = vmatprep.subr.bf16.mxu0 0
        %2416 = vmatpush2.bf16.msra.mxu0 0
        %2417 = vmatprep.subr.bf16.mxu0 0
        %2418 = vmatpush2.bf16.msra.mxu0 0
        %2419 = vmatprep.subr.bf16.mxu0 0
        %2420 = vmatpush2.bf16.msra.mxu0 0
        %2421 = vmatprep.subr.bf16.mxu0 0
        %2422 = vmatpush2.bf16.msra.mxu0 0
        %2423 = vmatprep.subr.bf16.mxu0 0
        %2424 = vmatpush2.bf16.msra.mxu0 0
        %2425 = vmatprep.subr.bf16.mxu0 0
        %2426 = vmatpush2.bf16.msra.mxu0 0
        %2427 = vmatprep.subr.bf16.mxu0 0
        %2428 = vmatpush2.bf16.msra.mxu0 0
        %2429 = vmatprep.subr.bf16.mxu0 0
        %2430 = vmatpush2.bf16.msra.mxu0 0
        %2431 = vmatprep.mubr.bf16.mxu0 0
        %2432 = vmatmul.mubr.bf16.gmra.mxu0 %v2315
        %v2433 = vpop.f32.mrf.mxu0
        %v2434 = vadd.f32 %v233, %v2433
        %v2435 = vpop.f32.mrf.mxu0
        %v2436 = vpop.f32.mrf.mxu0
        %v2437 = vadd.f32 %v233, %v2436
        %v2438 = vpop.f32.mrf.mxu0
        %2439 = vmatprep.mubr.bf16.mxu0 0
        %2440 = vmatmul.mubr.bf16.gmra.mxu0 %v2318
        %v2441 = vpop.f32.mrf.mxu0
        %v2442 = vadd.f32 %v233, %v2441
        %v2443 = vpop.f32.mrf.mxu0
        %v2444 = vpop.f32.mrf.mxu0
        %v2445 = vadd.f32 %v233, %v2444
        %v2446 = vpop.f32.mrf.mxu0
        %2447 = vmatprep.mubr.bf16.mxu0 0
        %2448 = vmatmul.mubr.bf16.gmra.mxu0 %v2321
        %v2449 = vpop.f32.mrf.mxu0
        %v2450 = vadd.f32 %v233, %v2449
        %v2451 = vpop.f32.mrf.mxu0
        %v2452 = vpop.f32.mrf.mxu0
        %v2453 = vadd.f32 %v233, %v2452
        %v2454 = vpop.f32.mrf.mxu0
        %2455 = vmatprep.mubr.bf16.mxu0 0
        %2456 = vmatmul.mubr.bf16.gmra.mxu0 %v2324
        %v2457 = vpop.f32.mrf.mxu0
        %v2458 = vadd.f32 %v233, %v2457
        %v2459 = vpop.f32.mrf.mxu0
        %v2460 = vpop.f32.mrf.mxu0
        %v2461 = vadd.f32 %v233, %v2460
        %v2462 = vpop.f32.mrf.mxu0
        %2463 = vdwg.mxu0
        %v2464 = vmax.f32 %v2052, %v2361
        %v2465 = vmax.f32 %v2053, %v2363
        %v2466 = vmax.f32 %v2054, %v2434
        %v2467 = vmax.f32 %v2055, %v2365
        %v2468 = vmax.f32 %v2056, %v2367
        %v2469 = vmax.f32 %v2057, %v2437
        %v2470 = vmax.f32 %v2058, %v2371
        %v2471 = vmax.f32 %v2059, %v2373
        %v2472 = vmax.f32 %v2060, %v2442
        %v2473 = vmax.f32 %v2061, %v2375
        %v2474 = vmax.f32 %v2062, %v2377
        %v2475 = vmax.f32 %v2063, %v2445
        %v2476 = vmax.f32 %v2064, %v2381
        %v2477 = vmax.f32 %v2065, %v2383
        %v2478 = vmax.f32 %v2066, %v2450
        %v2479 = vmax.f32 %v2067, %v2385
        %v2480 = vmax.f32 %v2068, %v2387
        %v2481 = vmax.f32 %v2069, %v2453
        %v2482 = vmax.f32 %v2070, %v2391
        %v2483 = vmax.f32 %v2071, %v2393
        %v2484 = vmax.f32 %v2072, %v2458
        %v2485 = vmax.f32 %v2073, %v2395
        %v2486 = vmax.f32 %v2074, %v2397
        %v2487 = vmax.f32 %v2075, %v2461
        %v2488 = vmul.f32 %v2361, %v2361
        %v2489 = vmul.f32 %v2363, %v2363
        %v2490 = vmul.f32 %v2434, %v2434
        %v2491 = vmul.f32 %v2365, %v2365
        %v2492 = vmul.f32 %v2367, %v2367
        %v2493 = vmul.f32 %v2437, %v2437
        %v2494 = vmul.f32 %v2371, %v2371
        %v2495 = vmul.f32 %v2373, %v2373
        %v2496 = vmul.f32 %v2442, %v2442
        %v2497 = vmul.f32 %v2375, %v2375
        %v2498 = vmul.f32 %v2377, %v2377
        %v2499 = vmul.f32 %v2445, %v2445
        %v2500 = vmul.f32 %v2381, %v2381
        %v2501 = vmul.f32 %v2383, %v2383
        %v2502 = vmul.f32 %v2450, %v2450
        %v2503 = vmul.f32 %v2385, %v2385
        %v2504 = vmul.f32 %v2387, %v2387
        %v2505 = vmul.f32 %v2453, %v2453
        %v2506 = vmul.f32 %v2391, %v2391
        %v2507 = vmul.f32 %v2393, %v2393
        %v2508 = vmul.f32 %v2458, %v2458
        %v2509 = vmul.f32 %v2395, %v2395
        %v2510 = vmul.f32 %v2397, %v2397
        %v2511 = vmul.f32 %v2461, %v2461
        %v2512 = vadd.f32 %v2488, %v2489
        %v2513 = vadd.f32 %v2512, %v2490
        %2514 = vadd.xlane.f32.xlu0 %v2513
        %v2515 = vpop.xlane.xlu0 %2514
        %v2516 = vadd.f32 %v2491, %v2492
        %v2517 = vadd.f32 %v2516, %v2493
        %2518 = vadd.xlane.f32.xlu0 %v2517
        %v2519 = vpop.xlane.xlu0 %2518
        %v2520 = vadd.f32 %v2494, %v2495
        %v2521 = vadd.f32 %v2520, %v2496
        %2522 = vadd.xlane.f32.xlu0 %v2521
        %v2523 = vpop.xlane.xlu0 %2522
        %v2524 = vadd.f32 %v2497, %v2498
        %v2525 = vadd.f32 %v2524, %v2499
        %2526 = vadd.xlane.f32.xlu0 %v2525
        %v2527 = vpop.xlane.xlu0 %2526
        %v2528 = vadd.f32 %v2500, %v2501
        %v2529 = vadd.f32 %v2528, %v2502
        %2530 = vadd.xlane.f32.xlu0 %v2529
        %v2531 = vpop.xlane.xlu0 %2530
        %v2532 = vadd.f32 %v2503, %v2504
        %v2533 = vadd.f32 %v2532, %v2505
        %2534 = vadd.xlane.f32.xlu0 %v2533
        %v2535 = vpop.xlane.xlu0 %2534
        %v2536 = vadd.f32 %v2506, %v2507
        %v2537 = vadd.f32 %v2536, %v2508
        %2538 = vadd.xlane.f32.xlu0 %v2537
        %v2539 = vpop.xlane.xlu0 %2538
        %v2540 = vadd.f32 %v2509, %v2510
        %v2541 = vadd.f32 %v2540, %v2511
        %2542 = vadd.xlane.f32.xlu0 %v2541
        %v2543 = vpop.xlane.xlu0 %2542
        %v2544 = vmax.f32 %v2515, 1e-24
        %v2545 = vmax.f32 %v2519, 1e-24
        %v2546 = vmax.f32 %v2523, 1e-24
        %v2547 = vmax.f32 %v2527, 1e-24
        %v2548 = vmax.f32 %v2531, 1e-24
        %v2549 = vmax.f32 %v2535, 1e-24
        %v2550 = vmax.f32 %v2539, 1e-24
        %v2551 = vmax.f32 %v2543, 1e-24
        %v2552 = vrsqrt.pop %v2544
        %v2553 = vrsqrt.pop %v2545
        %v2554 = vrsqrt.pop %v2546
        %v2555 = vrsqrt.pop %v2547
        %v2556 = vrsqrt.pop %v2548
        %v2557 = vrsqrt.pop %v2549
        %v2558 = vrsqrt.pop %v2550
        %v2559 = vrsqrt.pop %v2551
        %v2560 = vmul.f32 %v2361, %v2552
        %v2561 = vmul.f32 %v2363, %v2552
        %v2562 = vmul.f32 %v2434, %v2552
        %v2563 = vmul.f32 %v2365, %v2553
        %v2564 = vmul.f32 %v2367, %v2553
        %v2565 = vmul.f32 %v2437, %v2553
        %v2566 = vmul.f32 %v2371, %v2554
        %v2567 = vmul.f32 %v2373, %v2554
        %v2568 = vmul.f32 %v2442, %v2554
        %v2569 = vmul.f32 %v2375, %v2555
        %v2570 = vmul.f32 %v2377, %v2555
        %v2571 = vmul.f32 %v2445, %v2555
        %v2572 = vmul.f32 %v2381, %v2556
        %v2573 = vmul.f32 %v2383, %v2556
        %v2574 = vmul.f32 %v2450, %v2556
        %v2575 = vmul.f32 %v2385, %v2557
        %v2576 = vmul.f32 %v2387, %v2557
        %v2577 = vmul.f32 %v2453, %v2557
        %v2578 = vmul.f32 %v2391, %v2558
        %v2579 = vmul.f32 %v2393, %v2558
        %v2580 = vmul.f32 %v2458, %v2558
        %v2581 = vmul.f32 %v2395, %v2559
        %v2582 = vmul.f32 %v2397, %v2559
        %v2583 = vmul.f32 %v2461, %v2559
        %v2584 = vmax.f32 %v2560, 1e-06
        %v2585 = vmax.f32 %v2561, 1e-06
        %v2586 = vmax.f32 %v2562, 1e-06
        %v2587 = vmax.f32 %v2563, 1e-06
        %v2588 = vmax.f32 %v2564, 1e-06
        %v2589 = vmax.f32 %v2565, 1e-06
        %v2590 = vmax.f32 %v2566, 1e-06
        %v2591 = vmax.f32 %v2567, 1e-06
        %v2592 = vmax.f32 %v2568, 1e-06
        %v2593 = vmax.f32 %v2569, 1e-06
        %v2594 = vmax.f32 %v2570, 1e-06
        %v2595 = vmax.f32 %v2571, 1e-06
        %v2596 = vmax.f32 %v2572, 1e-06
        %v2597 = vmax.f32 %v2573, 1e-06
        %v2598 = vmax.f32 %v2574, 1e-06
        %v2599 = vmax.f32 %v2575, 1e-06
        %v2600 = vmax.f32 %v2576, 1e-06
        %v2601 = vmax.f32 %v2577, 1e-06
        %v2602 = vmax.f32 %v2578, 1e-06
        %v2603 = vmax.f32 %v2579, 1e-06
        %v2604 = vmax.f32 %v2580, 1e-06
        %v2605 = vmax.f32 %v2581, 1e-06
        %v2606 = vmax.f32 %v2582, 1e-06
        %v2607 = vmax.f32 %v2583, 1e-06
        %v2608 = vmul.f32 %v2584, %v2584
        %v2609 = vmul.f32 %v2585, %v2585
        %v2610 = vmul.f32 %v2586, %v2586
        %v2611 = vmul.f32 %v2587, %v2587
        %v2612 = vmul.f32 %v2588, %v2588
        %v2613 = vmul.f32 %v2589, %v2589
        %v2614 = vmul.f32 %v2590, %v2590
        %v2615 = vmul.f32 %v2591, %v2591
        %v2616 = vmul.f32 %v2592, %v2592
        %v2617 = vmul.f32 %v2593, %v2593
        %v2618 = vmul.f32 %v2594, %v2594
        %v2619 = vmul.f32 %v2595, %v2595
        %v2620 = vmul.f32 %v2596, %v2596
        %v2621 = vmul.f32 %v2597, %v2597
        %v2622 = vmul.f32 %v2598, %v2598
        %v2623 = vmul.f32 %v2599, %v2599
        %v2624 = vmul.f32 %v2600, %v2600
        %v2625 = vmul.f32 %v2601, %v2601
        %v2626 = vmul.f32 %v2602, %v2602
        %v2627 = vmul.f32 %v2603, %v2603
        %v2628 = vmul.f32 %v2604, %v2604
        %v2629 = vmul.f32 %v2605, %v2605
        %v2630 = vmul.f32 %v2606, %v2606
        %v2631 = vmul.f32 %v2607, %v2607
        %v2632 = vmul.f32 %v2608, %v2584
        %v2633 = vmul.f32 %v2609, %v2585
        %v2634 = vmul.f32 %v2610, %v2586
        %v2635 = vmul.f32 %v2611, %v2587
        %v2636 = vmul.f32 %v2612, %v2588
        %v2637 = vmul.f32 %v2613, %v2589
        %v2638 = vmul.f32 %v2614, %v2590
        %v2639 = vmul.f32 %v2615, %v2591
        %v2640 = vmul.f32 %v2616, %v2592
        %v2641 = vmul.f32 %v2617, %v2593
        %v2642 = vmul.f32 %v2618, %v2594
        %v2643 = vmul.f32 %v2619, %v2595
        %v2644 = vmul.f32 %v2620, %v2596
        %v2645 = vmul.f32 %v2621, %v2597
        %v2646 = vmul.f32 %v2622, %v2598
        %v2647 = vmul.f32 %v2623, %v2599
        %v2648 = vmul.f32 %v2624, %v2600
        %v2649 = vmul.f32 %v2625, %v2601
        %v2650 = vmul.f32 %v2626, %v2602
        %v2651 = vmul.f32 %v2627, %v2603
        %v2652 = vmul.f32 %v2628, %v2604
        %v2653 = vmul.f32 %v2629, %v2605
        %v2654 = vmul.f32 %v2630, %v2606
        %v2655 = vmul.f32 %v2631, %v2607
        %v2656 = vadd.f32 %v2632, %v2635
        %v2657 = vadd.f32 %v2656, %v2638
        %v2658 = vadd.f32 %v2657, %v2641
        %v2659 = vadd.f32 %v2658, %v2644
        %v2660 = vadd.f32 %v2659, %v2647
        %v2661 = vadd.f32 %v2660, %v2650
        %v2662 = vadd.f32 %v2661, %v2653
        %v2663 = vrot.slane %v2662, 4
        %v2664 = vadd.f32 %v2662, %v2663
        %v2665 = vrot.slane %v2664, 2
        %v2666 = vadd.f32 %v2664, %v2665
        %v2667 = vrot.slane %v2666, 1
        %v2668 = vadd.f32 %v2666, %v2667
        %v2669 = vadd.f32 %v2633, %v2636
        %v2670 = vadd.f32 %v2669, %v2639
        %v2671 = vadd.f32 %v2670, %v2642
        %v2672 = vadd.f32 %v2671, %v2645
        %v2673 = vadd.f32 %v2672, %v2648
        %v2674 = vadd.f32 %v2673, %v2651
        %v2675 = vadd.f32 %v2674, %v2654
        %v2676 = vrot.slane %v2675, 4
        %v2677 = vadd.f32 %v2675, %v2676
        %v2678 = vrot.slane %v2677, 2
        %v2679 = vadd.f32 %v2677, %v2678
        %v2680 = vrot.slane %v2679, 1
        %v2681 = vadd.f32 %v2679, %v2680
        %v2682 = vadd.f32 %v2634, %v2637
        %v2683 = vadd.f32 %v2682, %v2640
        %v2684 = vadd.f32 %v2683, %v2643
        %v2685 = vadd.f32 %v2684, %v2646
        %v2686 = vadd.f32 %v2685, %v2649
        %v2687 = vadd.f32 %v2686, %v2652
        %v2688 = vadd.f32 %v2687, %v2655
        %v2689 = vrot.slane %v2688, 4
        %v2690 = vadd.f32 %v2688, %v2689
        %v2691 = vrot.slane %v2690, 2
        %v2692 = vadd.f32 %v2690, %v2691
        %v2693 = vrot.slane %v2692, 1
        %v2694 = vadd.f32 %v2692, %v2693
        %v2695 = vadd.f32 %v2283, %v2668
        %v2696 = vadd.f32 %v2284, %v2681
        %v2697 = vadd.f32 %v2285, %v2694
        %v2698 = vld [vmem:[%s202 + $0xc0] sm:$0xf]
        %v2699 = vld [vmem:[%s202 + $0xc4] sm:$0xf]
        %v2700 = vld [vmem:[%s202 + $0xc8] sm:$0xf]
        %v2701 = vld [vmem:[%s202 + $0xcc] sm:$0xf]
        %v2702 = vld [vmem:[%s202 + $0xd0] sm:$0xf]
        %v2703 = vld [vmem:[%s202 + $0xd4] sm:$0xf]
        %v2704 = vld [vmem:[%s202 + $0xd8] sm:$0xf]
        %v2705 = vld [vmem:[%s202 + $0xdc] sm:$0xf]
        %v2714 = vunpack.c.l.b16 %v2698
        %v2715 = vunpack.c.l.b16 %v2699
        %v2716 = vunpack.c.l.b16 %v2700
        %v2717 = vunpack.c.l.b16 %v2701
        %v2718 = vunpack.c.l.b16 %v2702
        %v2719 = vunpack.c.l.b16 %v2703
        %v2720 = vunpack.c.l.b16 %v2704
        %v2721 = vunpack.c.l.b16 %v2705
        %v2722 = vpack.c.b16 %v2715, %v2714
        %v2723 = vpack.c.b16 %v2717, %v2716
        %v2724 = vpack.c.b16 %v2719, %v2718
        %v2725 = vpack.c.b16 %v2721, %v2720
        %v2727 = vsel %vm270, %v2722, 0
        %v2730 = vsel %vm270, %v2723, 0
        %v2733 = vsel %vm270, %v2724, 0
        %v2736 = vsel %vm270, %v2725, 0
        %2738 = vmatprep.subr.bf16.mxu0 0
        %2739 = vmatpush1.bf16.msra.mxu0 0
        %2740 = vmatprep.subr.bf16.mxu0 0
        %2741 = vmatpush1.bf16.msra.mxu0 0
        %2742 = vmatprep.subr.bf16.mxu0 0
        %2743 = vmatpush1.bf16.msra.mxu0 0
        %2744 = vmatprep.subr.bf16.mxu0 0
        %2745 = vmatpush1.bf16.msra.mxu0 0
        %2746 = vmatprep.subr.bf16.mxu0 0
        %2747 = vmatpush1.bf16.msra.mxu0 0
        %2748 = vmatprep.subr.bf16.mxu0 0
        %2749 = vmatpush1.bf16.msra.mxu0 0
        %2750 = vmatprep.subr.bf16.mxu0 0
        %2751 = vmatpush1.bf16.msra.mxu0 0
        %2752 = vmatprep.subr.bf16.mxu0 %v288
        %2753 = vmatpush1.bf16.msra.mxu0 %v285
        %2754 = vmatprep.subr.bf16.mxu0 0
        %2755 = vmatpush2.bf16.msra.mxu0 0
        %2756 = vmatprep.subr.bf16.mxu0 0
        %2757 = vmatpush2.bf16.msra.mxu0 0
        %2758 = vmatprep.subr.bf16.mxu0 0
        %2759 = vmatpush2.bf16.msra.mxu0 0
        %2760 = vmatprep.subr.bf16.mxu0 0
        %2761 = vmatpush2.bf16.msra.mxu0 0
        %2762 = vmatprep.subr.bf16.mxu0 0
        %2763 = vmatpush2.bf16.msra.mxu0 0
        %2764 = vmatprep.subr.bf16.mxu0 0
        %2765 = vmatpush2.bf16.msra.mxu0 0
        %2766 = vmatprep.subr.bf16.mxu0 0
        %2767 = vmatpush2.bf16.msra.mxu0 0
        %2768 = vmatprep.subr.bf16.mxu0 0
        %2769 = vmatpush2.bf16.msra.mxu0 0
        %2770 = vmatprep.mubr.bf16.mxu0 0
        %2771 = vmatmul.mubr.bf16.gmra.mxu0 %v2727
        %v2772 = vpop.f32.mrf.mxu0
        %v2773 = vadd.f32 %v225, %v2772
        %v2774 = vpop.f32.mrf.mxu0
        %v2775 = vadd.f32 %v229, %v2774
        %v2776 = vpop.f32.mrf.mxu0
        %v2777 = vadd.f32 %v225, %v2776
        %v2778 = vpop.f32.mrf.mxu0
        %v2779 = vadd.f32 %v229, %v2778
        %2780 = vmatprep.mubr.bf16.mxu0 0
        %2781 = vmatmul.mubr.bf16.gmra.mxu0 %v2730
        %v2782 = vpop.f32.mrf.mxu0
        %v2783 = vadd.f32 %v225, %v2782
        %v2784 = vpop.f32.mrf.mxu0
        %v2785 = vadd.f32 %v229, %v2784
        %v2786 = vpop.f32.mrf.mxu0
        %v2787 = vadd.f32 %v225, %v2786
        %v2788 = vpop.f32.mrf.mxu0
        %v2789 = vadd.f32 %v229, %v2788
        %2790 = vmatprep.mubr.bf16.mxu0 0
        %2791 = vmatmul.mubr.bf16.gmra.mxu0 %v2733
        %v2792 = vpop.f32.mrf.mxu0
        %v2793 = vadd.f32 %v225, %v2792
        %v2794 = vpop.f32.mrf.mxu0
        %v2795 = vadd.f32 %v229, %v2794
        %v2796 = vpop.f32.mrf.mxu0
        %v2797 = vadd.f32 %v225, %v2796
        %v2798 = vpop.f32.mrf.mxu0
        %v2799 = vadd.f32 %v229, %v2798
        %2800 = vmatprep.mubr.bf16.mxu0 0
        %2801 = vmatmul.mubr.bf16.gmra.mxu0 %v2736
        %v2802 = vpop.f32.mrf.mxu0
        %v2803 = vadd.f32 %v225, %v2802
        %v2804 = vpop.f32.mrf.mxu0
        %v2805 = vadd.f32 %v229, %v2804
        %v2806 = vpop.f32.mrf.mxu0
        %v2807 = vadd.f32 %v225, %v2806
        %v2808 = vpop.f32.mrf.mxu0
        %v2809 = vadd.f32 %v229, %v2808
        %2810 = vdwg.mxu0
        %2811 = vmatprep.subr.bf16.mxu0 0
        %2812 = vmatpush1.bf16.msra.mxu0 0
        %2813 = vmatprep.subr.bf16.mxu0 0
        %2814 = vmatpush1.bf16.msra.mxu0 0
        %2815 = vmatprep.subr.bf16.mxu0 0
        %2816 = vmatpush1.bf16.msra.mxu0 0
        %2817 = vmatprep.subr.bf16.mxu0 0
        %2818 = vmatpush1.bf16.msra.mxu0 0
        %2819 = vmatprep.subr.bf16.mxu0 0
        %2820 = vmatpush1.bf16.msra.mxu0 0
        %2821 = vmatprep.subr.bf16.mxu0 0
        %2822 = vmatpush1.bf16.msra.mxu0 0
        %2823 = vmatprep.subr.bf16.mxu0 0
        %2824 = vmatpush1.bf16.msra.mxu0 0
        %2825 = vmatprep.subr.bf16.mxu0 0
        %2826 = vmatpush1.bf16.msra.mxu0 %v291
        %2827 = vmatprep.subr.bf16.mxu0 0
        %2828 = vmatpush2.bf16.msra.mxu0 0
        %2829 = vmatprep.subr.bf16.mxu0 0
        %2830 = vmatpush2.bf16.msra.mxu0 0
        %2831 = vmatprep.subr.bf16.mxu0 0
        %2832 = vmatpush2.bf16.msra.mxu0 0
        %2833 = vmatprep.subr.bf16.mxu0 0
        %2834 = vmatpush2.bf16.msra.mxu0 0
        %2835 = vmatprep.subr.bf16.mxu0 0
        %2836 = vmatpush2.bf16.msra.mxu0 0
        %2837 = vmatprep.subr.bf16.mxu0 0
        %2838 = vmatpush2.bf16.msra.mxu0 0
        %2839 = vmatprep.subr.bf16.mxu0 0
        %2840 = vmatpush2.bf16.msra.mxu0 0
        %2841 = vmatprep.subr.bf16.mxu0 0
        %2842 = vmatpush2.bf16.msra.mxu0 0
        %2843 = vmatprep.mubr.bf16.mxu0 0
        %2844 = vmatmul.mubr.bf16.gmra.mxu0 %v2727
        %v2845 = vpop.f32.mrf.mxu0
        %v2846 = vadd.f32 %v233, %v2845
        %v2847 = vpop.f32.mrf.mxu0
        %v2848 = vpop.f32.mrf.mxu0
        %v2849 = vadd.f32 %v233, %v2848
        %v2850 = vpop.f32.mrf.mxu0
        %2851 = vmatprep.mubr.bf16.mxu0 0
        %2852 = vmatmul.mubr.bf16.gmra.mxu0 %v2730
        %v2853 = vpop.f32.mrf.mxu0
        %v2854 = vadd.f32 %v233, %v2853
        %v2855 = vpop.f32.mrf.mxu0
        %v2856 = vpop.f32.mrf.mxu0
        %v2857 = vadd.f32 %v233, %v2856
        %v2858 = vpop.f32.mrf.mxu0
        %2859 = vmatprep.mubr.bf16.mxu0 0
        %2860 = vmatmul.mubr.bf16.gmra.mxu0 %v2733
        %v2861 = vpop.f32.mrf.mxu0
        %v2862 = vadd.f32 %v233, %v2861
        %v2863 = vpop.f32.mrf.mxu0
        %v2864 = vpop.f32.mrf.mxu0
        %v2865 = vadd.f32 %v233, %v2864
        %v2866 = vpop.f32.mrf.mxu0
        %2867 = vmatprep.mubr.bf16.mxu0 0
        %2868 = vmatmul.mubr.bf16.gmra.mxu0 %v2736
        %v2869 = vpop.f32.mrf.mxu0
        %v2870 = vadd.f32 %v233, %v2869
        %v2871 = vpop.f32.mrf.mxu0
        %v2872 = vpop.f32.mrf.mxu0
        %v2873 = vadd.f32 %v233, %v2872
        %v2874 = vpop.f32.mrf.mxu0
        %2875 = vdwg.mxu0
        %v2876 = vmax.f32 %v2464, %v2773
        %v2877 = vmax.f32 %v2465, %v2775
        %v2878 = vmax.f32 %v2466, %v2846
        %v2879 = vmax.f32 %v2467, %v2777
        %v2880 = vmax.f32 %v2468, %v2779
        %v2881 = vmax.f32 %v2469, %v2849
        %v2882 = vmax.f32 %v2470, %v2783
        %v2883 = vmax.f32 %v2471, %v2785
        %v2884 = vmax.f32 %v2472, %v2854
        %v2885 = vmax.f32 %v2473, %v2787
        %v2886 = vmax.f32 %v2474, %v2789
        %v2887 = vmax.f32 %v2475, %v2857
        %v2888 = vmax.f32 %v2476, %v2793
        %v2889 = vmax.f32 %v2477, %v2795
        %v2890 = vmax.f32 %v2478, %v2862
        %v2891 = vmax.f32 %v2479, %v2797
        %v2892 = vmax.f32 %v2480, %v2799
        %v2893 = vmax.f32 %v2481, %v2865
        %v2894 = vmax.f32 %v2482, %v2803
        %v2895 = vmax.f32 %v2483, %v2805
        %v2896 = vmax.f32 %v2484, %v2870
        %v2897 = vmax.f32 %v2485, %v2807
        %v2898 = vmax.f32 %v2486, %v2809
        %v2899 = vmax.f32 %v2487, %v2873
        %v2900 = vmul.f32 %v2773, %v2773
        %v2901 = vmul.f32 %v2775, %v2775
        %v2902 = vmul.f32 %v2846, %v2846
        %v2903 = vmul.f32 %v2777, %v2777
        %v2904 = vmul.f32 %v2779, %v2779
        %v2905 = vmul.f32 %v2849, %v2849
        %v2906 = vmul.f32 %v2783, %v2783
        %v2907 = vmul.f32 %v2785, %v2785
        %v2908 = vmul.f32 %v2854, %v2854
        %v2909 = vmul.f32 %v2787, %v2787
        %v2910 = vmul.f32 %v2789, %v2789
        %v2911 = vmul.f32 %v2857, %v2857
        %v2912 = vmul.f32 %v2793, %v2793
        %v2913 = vmul.f32 %v2795, %v2795
        %v2914 = vmul.f32 %v2862, %v2862
        %v2915 = vmul.f32 %v2797, %v2797
        %v2916 = vmul.f32 %v2799, %v2799
        %v2917 = vmul.f32 %v2865, %v2865
        %v2918 = vmul.f32 %v2803, %v2803
        %v2919 = vmul.f32 %v2805, %v2805
        %v2920 = vmul.f32 %v2870, %v2870
        %v2921 = vmul.f32 %v2807, %v2807
        %v2922 = vmul.f32 %v2809, %v2809
        %v2923 = vmul.f32 %v2873, %v2873
        %v2924 = vadd.f32 %v2900, %v2901
        %v2925 = vadd.f32 %v2924, %v2902
        %2926 = vadd.xlane.f32.xlu0 %v2925
        %v2927 = vpop.xlane.xlu0 %2926
        %v2928 = vadd.f32 %v2903, %v2904
        %v2929 = vadd.f32 %v2928, %v2905
        %2930 = vadd.xlane.f32.xlu0 %v2929
        %v2931 = vpop.xlane.xlu0 %2930
        %v2932 = vadd.f32 %v2906, %v2907
        %v2933 = vadd.f32 %v2932, %v2908
        %2934 = vadd.xlane.f32.xlu0 %v2933
        %v2935 = vpop.xlane.xlu0 %2934
        %v2936 = vadd.f32 %v2909, %v2910
        %v2937 = vadd.f32 %v2936, %v2911
        %2938 = vadd.xlane.f32.xlu0 %v2937
        %v2939 = vpop.xlane.xlu0 %2938
        %v2940 = vadd.f32 %v2912, %v2913
        %v2941 = vadd.f32 %v2940, %v2914
        %2942 = vadd.xlane.f32.xlu0 %v2941
        %v2943 = vpop.xlane.xlu0 %2942
        %v2944 = vadd.f32 %v2915, %v2916
        %v2945 = vadd.f32 %v2944, %v2917
        %2946 = vadd.xlane.f32.xlu0 %v2945
        %v2947 = vpop.xlane.xlu0 %2946
        %v2948 = vadd.f32 %v2918, %v2919
        %v2949 = vadd.f32 %v2948, %v2920
        %2950 = vadd.xlane.f32.xlu0 %v2949
        %v2951 = vpop.xlane.xlu0 %2950
        %v2952 = vadd.f32 %v2921, %v2922
        %v2953 = vadd.f32 %v2952, %v2923
        %2954 = vadd.xlane.f32.xlu0 %v2953
        %v2955 = vpop.xlane.xlu0 %2954
        %v2956 = vmax.f32 %v2927, 1e-24
        %v2957 = vmax.f32 %v2931, 1e-24
        %v2958 = vmax.f32 %v2935, 1e-24
        %v2959 = vmax.f32 %v2939, 1e-24
        %v2960 = vmax.f32 %v2943, 1e-24
        %v2961 = vmax.f32 %v2947, 1e-24
        %v2962 = vmax.f32 %v2951, 1e-24
        %v2963 = vmax.f32 %v2955, 1e-24
        %v2964 = vrsqrt.pop %v2956
        %v2965 = vrsqrt.pop %v2957
        %v2966 = vrsqrt.pop %v2958
        %v2967 = vrsqrt.pop %v2959
        %v2968 = vrsqrt.pop %v2960
        %v2969 = vrsqrt.pop %v2961
        %v2970 = vrsqrt.pop %v2962
        %v2971 = vrsqrt.pop %v2963
        %v2972 = vmul.f32 %v2773, %v2964
        %v2973 = vmul.f32 %v2775, %v2964
        %v2974 = vmul.f32 %v2846, %v2964
        %v2975 = vmul.f32 %v2777, %v2965
        %v2976 = vmul.f32 %v2779, %v2965
        %v2977 = vmul.f32 %v2849, %v2965
        %v2978 = vmul.f32 %v2783, %v2966
        %v2979 = vmul.f32 %v2785, %v2966
        %v2980 = vmul.f32 %v2854, %v2966
        %v2981 = vmul.f32 %v2787, %v2967
        %v2982 = vmul.f32 %v2789, %v2967
        %v2983 = vmul.f32 %v2857, %v2967
        %v2984 = vmul.f32 %v2793, %v2968
        %v2985 = vmul.f32 %v2795, %v2968
        %v2986 = vmul.f32 %v2862, %v2968
        %v2987 = vmul.f32 %v2797, %v2969
        %v2988 = vmul.f32 %v2799, %v2969
        %v2989 = vmul.f32 %v2865, %v2969
        %v2990 = vmul.f32 %v2803, %v2970
        %v2991 = vmul.f32 %v2805, %v2970
        %v2992 = vmul.f32 %v2870, %v2970
        %v2993 = vmul.f32 %v2807, %v2971
        %v2994 = vmul.f32 %v2809, %v2971
        %v2995 = vmul.f32 %v2873, %v2971
        %v2996 = vmax.f32 %v2972, 1e-06
        %v2997 = vmax.f32 %v2973, 1e-06
        %v2998 = vmax.f32 %v2974, 1e-06
        %v2999 = vmax.f32 %v2975, 1e-06
        %v3000 = vmax.f32 %v2976, 1e-06
        %v3001 = vmax.f32 %v2977, 1e-06
        %v3002 = vmax.f32 %v2978, 1e-06
        %v3003 = vmax.f32 %v2979, 1e-06
        %v3004 = vmax.f32 %v2980, 1e-06
        %v3005 = vmax.f32 %v2981, 1e-06
        %v3006 = vmax.f32 %v2982, 1e-06
        %v3007 = vmax.f32 %v2983, 1e-06
        %v3008 = vmax.f32 %v2984, 1e-06
        %v3009 = vmax.f32 %v2985, 1e-06
        %v3010 = vmax.f32 %v2986, 1e-06
        %v3011 = vmax.f32 %v2987, 1e-06
        %v3012 = vmax.f32 %v2988, 1e-06
        %v3013 = vmax.f32 %v2989, 1e-06
        %v3014 = vmax.f32 %v2990, 1e-06
        %v3015 = vmax.f32 %v2991, 1e-06
        %v3016 = vmax.f32 %v2992, 1e-06
        %v3017 = vmax.f32 %v2993, 1e-06
        %v3018 = vmax.f32 %v2994, 1e-06
        %v3019 = vmax.f32 %v2995, 1e-06
        %v3020 = vmul.f32 %v2996, %v2996
        %v3021 = vmul.f32 %v2997, %v2997
        %v3022 = vmul.f32 %v2998, %v2998
        %v3023 = vmul.f32 %v2999, %v2999
        %v3024 = vmul.f32 %v3000, %v3000
        %v3025 = vmul.f32 %v3001, %v3001
        %v3026 = vmul.f32 %v3002, %v3002
        %v3027 = vmul.f32 %v3003, %v3003
        %v3028 = vmul.f32 %v3004, %v3004
        %v3029 = vmul.f32 %v3005, %v3005
        %v3030 = vmul.f32 %v3006, %v3006
        %v3031 = vmul.f32 %v3007, %v3007
        %v3032 = vmul.f32 %v3008, %v3008
        %v3033 = vmul.f32 %v3009, %v3009
        %v3034 = vmul.f32 %v3010, %v3010
        %v3035 = vmul.f32 %v3011, %v3011
        %v3036 = vmul.f32 %v3012, %v3012
        %v3037 = vmul.f32 %v3013, %v3013
        %v3038 = vmul.f32 %v3014, %v3014
        %v3039 = vmul.f32 %v3015, %v3015
        %v3040 = vmul.f32 %v3016, %v3016
        %v3041 = vmul.f32 %v3017, %v3017
        %v3042 = vmul.f32 %v3018, %v3018
        %v3043 = vmul.f32 %v3019, %v3019
        %v3044 = vmul.f32 %v3020, %v2996
        %v3045 = vmul.f32 %v3021, %v2997
        %v3046 = vmul.f32 %v3022, %v2998
        %v3047 = vmul.f32 %v3023, %v2999
        %v3048 = vmul.f32 %v3024, %v3000
        %v3049 = vmul.f32 %v3025, %v3001
        %v3050 = vmul.f32 %v3026, %v3002
        %v3051 = vmul.f32 %v3027, %v3003
        %v3052 = vmul.f32 %v3028, %v3004
        %v3053 = vmul.f32 %v3029, %v3005
        %v3054 = vmul.f32 %v3030, %v3006
        %v3055 = vmul.f32 %v3031, %v3007
        %v3056 = vmul.f32 %v3032, %v3008
        %v3057 = vmul.f32 %v3033, %v3009
        %v3058 = vmul.f32 %v3034, %v3010
        %v3059 = vmul.f32 %v3035, %v3011
        %v3060 = vmul.f32 %v3036, %v3012
        %v3061 = vmul.f32 %v3037, %v3013
        %v3062 = vmul.f32 %v3038, %v3014
        %v3063 = vmul.f32 %v3039, %v3015
        %v3064 = vmul.f32 %v3040, %v3016
        %v3065 = vmul.f32 %v3041, %v3017
        %v3066 = vmul.f32 %v3042, %v3018
        %v3067 = vmul.f32 %v3043, %v3019
        %v3068 = vadd.f32 %v3044, %v3047
        %v3069 = vadd.f32 %v3068, %v3050
        %v3070 = vadd.f32 %v3069, %v3053
        %v3071 = vadd.f32 %v3070, %v3056
        %v3072 = vadd.f32 %v3071, %v3059
        %v3073 = vadd.f32 %v3072, %v3062
        %v3074 = vadd.f32 %v3073, %v3065
        %v3075 = vrot.slane %v3074, 4
        %v3076 = vadd.f32 %v3074, %v3075
        %v3077 = vrot.slane %v3076, 2
        %v3078 = vadd.f32 %v3076, %v3077
        %v3079 = vrot.slane %v3078, 1
        %v3080 = vadd.f32 %v3078, %v3079
        %v3081 = vadd.f32 %v3045, %v3048
        %v3082 = vadd.f32 %v3081, %v3051
        %v3083 = vadd.f32 %v3082, %v3054
        %v3084 = vadd.f32 %v3083, %v3057
        %v3085 = vadd.f32 %v3084, %v3060
        %v3086 = vadd.f32 %v3085, %v3063
        %v3087 = vadd.f32 %v3086, %v3066
        %v3088 = vrot.slane %v3087, 4
        %v3089 = vadd.f32 %v3087, %v3088
        %v3090 = vrot.slane %v3089, 2
        %v3091 = vadd.f32 %v3089, %v3090
        %v3092 = vrot.slane %v3091, 1
        %v3093 = vadd.f32 %v3091, %v3092
        %v3094 = vadd.f32 %v3046, %v3049
        %v3095 = vadd.f32 %v3094, %v3052
        %v3096 = vadd.f32 %v3095, %v3055
        %v3097 = vadd.f32 %v3096, %v3058
        %v3098 = vadd.f32 %v3097, %v3061
        %v3099 = vadd.f32 %v3098, %v3064
        %v3100 = vadd.f32 %v3099, %v3067
        %v3101 = vrot.slane %v3100, 4
        %v3102 = vadd.f32 %v3100, %v3101
        %v3103 = vrot.slane %v3102, 2
        %v3104 = vadd.f32 %v3102, %v3103
        %v3105 = vrot.slane %v3104, 1
        %v3106 = vadd.f32 %v3104, %v3105
        %v3107 = vadd.f32 %v2695, %v3080
        %v3108 = vadd.f32 %v2696, %v3093
        %v3109 = vadd.f32 %v2697, %v3106
        %v3110 = vld [vmem:[%s202 + $0xe0] sm:$0xf]
        %v3111 = vld [vmem:[%s202 + $0xe4] sm:$0xf]
        %v3112 = vld [vmem:[%s202 + $0xe8] sm:$0xf]
        %v3113 = vld [vmem:[%s202 + $0xec] sm:$0xf]
        %v3114 = vld [vmem:[%s202 + $0xf0] sm:$0xf]
        %v3115 = vld [vmem:[%s202 + $0xf4] sm:$0xf]
        %v3116 = vld [vmem:[%s202 + $0xf8] sm:$0xf]
        %v3117 = vld [vmem:[%s202 + $0xfc] sm:$0xf]
        %v3126 = vunpack.c.l.b16 %v3110
        %v3127 = vunpack.c.l.b16 %v3111
        %v3128 = vunpack.c.l.b16 %v3112
        %v3129 = vunpack.c.l.b16 %v3113
        %v3130 = vunpack.c.l.b16 %v3114
        %v3131 = vunpack.c.l.b16 %v3115
        %v3132 = vunpack.c.l.b16 %v3116
        %v3133 = vunpack.c.l.b16 %v3117
        %v3134 = vpack.c.b16 %v3127, %v3126
        %v3135 = vpack.c.b16 %v3129, %v3128
        %v3136 = vpack.c.b16 %v3131, %v3130
        %v3137 = vpack.c.b16 %v3133, %v3132
        %v3139 = vsel %vm270, %v3134, 0
        %v3142 = vsel %vm270, %v3135, 0
        %v3145 = vsel %vm270, %v3136, 0
        %v3148 = vsel %vm270, %v3137, 0
        %3150 = vmatprep.subr.bf16.mxu0 0
        %3151 = vmatpush1.bf16.msra.mxu0 0
        %3152 = vmatprep.subr.bf16.mxu0 0
        %3153 = vmatpush1.bf16.msra.mxu0 0
        %3154 = vmatprep.subr.bf16.mxu0 0
        %3155 = vmatpush1.bf16.msra.mxu0 0
        %3156 = vmatprep.subr.bf16.mxu0 0
        %3157 = vmatpush1.bf16.msra.mxu0 0
        %3158 = vmatprep.subr.bf16.mxu0 0
        %3159 = vmatpush1.bf16.msra.mxu0 0
        %3160 = vmatprep.subr.bf16.mxu0 0
        %3161 = vmatpush1.bf16.msra.mxu0 0
        %3162 = vmatprep.subr.bf16.mxu0 0
        %3163 = vmatpush1.bf16.msra.mxu0 0
        %3164 = vmatprep.subr.bf16.mxu0 %v288
        %3165 = vmatpush1.bf16.msra.mxu0 %v285
        %3166 = vmatprep.subr.bf16.mxu0 0
        %3167 = vmatpush2.bf16.msra.mxu0 0
        %3168 = vmatprep.subr.bf16.mxu0 0
        %3169 = vmatpush2.bf16.msra.mxu0 0
        %3170 = vmatprep.subr.bf16.mxu0 0
        %3171 = vmatpush2.bf16.msra.mxu0 0
        %3172 = vmatprep.subr.bf16.mxu0 0
        %3173 = vmatpush2.bf16.msra.mxu0 0
        %3174 = vmatprep.subr.bf16.mxu0 0
        %3175 = vmatpush2.bf16.msra.mxu0 0
        %3176 = vmatprep.subr.bf16.mxu0 0
        %3177 = vmatpush2.bf16.msra.mxu0 0
        %3178 = vmatprep.subr.bf16.mxu0 0
        %3179 = vmatpush2.bf16.msra.mxu0 0
        %3180 = vmatprep.subr.bf16.mxu0 0
        %3181 = vmatpush2.bf16.msra.mxu0 0
        %3182 = vmatprep.mubr.bf16.mxu0 0
        %3183 = vmatmul.mubr.bf16.gmra.mxu0 %v3139
        %v3184 = vpop.f32.mrf.mxu0
        %v3185 = vadd.f32 %v225, %v3184
        %v3186 = vpop.f32.mrf.mxu0
        %v3187 = vadd.f32 %v229, %v3186
        %v3188 = vpop.f32.mrf.mxu0
        %v3189 = vadd.f32 %v225, %v3188
        %v3190 = vpop.f32.mrf.mxu0
        %v3191 = vadd.f32 %v229, %v3190
        %3192 = vmatprep.mubr.bf16.mxu0 0
        %3193 = vmatmul.mubr.bf16.gmra.mxu0 %v3142
        %v3194 = vpop.f32.mrf.mxu0
        %v3195 = vadd.f32 %v225, %v3194
        %v3196 = vpop.f32.mrf.mxu0
        %v3197 = vadd.f32 %v229, %v3196
        %v3198 = vpop.f32.mrf.mxu0
        %v3199 = vadd.f32 %v225, %v3198
        %v3200 = vpop.f32.mrf.mxu0
        %v3201 = vadd.f32 %v229, %v3200
        %3202 = vmatprep.mubr.bf16.mxu0 0
        %3203 = vmatmul.mubr.bf16.gmra.mxu0 %v3145
        %v3204 = vpop.f32.mrf.mxu0
        %v3205 = vadd.f32 %v225, %v3204
        %v3206 = vpop.f32.mrf.mxu0
        %v3207 = vadd.f32 %v229, %v3206
        %v3208 = vpop.f32.mrf.mxu0
        %v3209 = vadd.f32 %v225, %v3208
        %v3210 = vpop.f32.mrf.mxu0
        %v3211 = vadd.f32 %v229, %v3210
        %3212 = vmatprep.mubr.bf16.mxu0 0
        %3213 = vmatmul.mubr.bf16.gmra.mxu0 %v3148
        %v3214 = vpop.f32.mrf.mxu0
        %v3215 = vadd.f32 %v225, %v3214
        %v3216 = vpop.f32.mrf.mxu0
        %v3217 = vadd.f32 %v229, %v3216
        %v3218 = vpop.f32.mrf.mxu0
        %v3219 = vadd.f32 %v225, %v3218
        %v3220 = vpop.f32.mrf.mxu0
        %v3221 = vadd.f32 %v229, %v3220
        %3222 = vdwg.mxu0
        %3223 = vmatprep.subr.bf16.mxu0 0
        %3224 = vmatpush1.bf16.msra.mxu0 0
        %3225 = vmatprep.subr.bf16.mxu0 0
        %3226 = vmatpush1.bf16.msra.mxu0 0
        %3227 = vmatprep.subr.bf16.mxu0 0
        %3228 = vmatpush1.bf16.msra.mxu0 0
        %3229 = vmatprep.subr.bf16.mxu0 0
        %3230 = vmatpush1.bf16.msra.mxu0 0
        %3231 = vmatprep.subr.bf16.mxu0 0
        %3232 = vmatpush1.bf16.msra.mxu0 0
        %3233 = vmatprep.subr.bf16.mxu0 0
        %3234 = vmatpush1.bf16.msra.mxu0 0
        %3235 = vmatprep.subr.bf16.mxu0 0
        %3236 = vmatpush1.bf16.msra.mxu0 0
        %3237 = vmatprep.subr.bf16.mxu0 0
        %3238 = vmatpush1.bf16.msra.mxu0 %v291
        %3239 = vmatprep.subr.bf16.mxu0 0
        %3240 = vmatpush2.bf16.msra.mxu0 0
        %3241 = vmatprep.subr.bf16.mxu0 0
        %3242 = vmatpush2.bf16.msra.mxu0 0
        %3243 = vmatprep.subr.bf16.mxu0 0
        %3244 = vmatpush2.bf16.msra.mxu0 0
        %3245 = vmatprep.subr.bf16.mxu0 0
        %3246 = vmatpush2.bf16.msra.mxu0 0
        %3247 = vmatprep.subr.bf16.mxu0 0
        %3248 = vmatpush2.bf16.msra.mxu0 0
        %3249 = vmatprep.subr.bf16.mxu0 0
        %3250 = vmatpush2.bf16.msra.mxu0 0
        %3251 = vmatprep.subr.bf16.mxu0 0
        %3252 = vmatpush2.bf16.msra.mxu0 0
        %3253 = vmatprep.subr.bf16.mxu0 0
        %3254 = vmatpush2.bf16.msra.mxu0 0
        %3255 = vmatprep.mubr.bf16.mxu0 0
        %3256 = vmatmul.mubr.bf16.gmra.mxu0 %v3139
        %v3257 = vpop.f32.mrf.mxu0
        %v3258 = vadd.f32 %v233, %v3257
        %v3259 = vpop.f32.mrf.mxu0
        %v3260 = vpop.f32.mrf.mxu0
        %v3261 = vadd.f32 %v233, %v3260
        %v3262 = vpop.f32.mrf.mxu0
        %3263 = vmatprep.mubr.bf16.mxu0 0
        %3264 = vmatmul.mubr.bf16.gmra.mxu0 %v3142
        %v3265 = vpop.f32.mrf.mxu0
        %v3266 = vadd.f32 %v233, %v3265
        %v3267 = vpop.f32.mrf.mxu0
        %v3268 = vpop.f32.mrf.mxu0
        %v3269 = vadd.f32 %v233, %v3268
        %v3270 = vpop.f32.mrf.mxu0
        %3271 = vmatprep.mubr.bf16.mxu0 0
        %3272 = vmatmul.mubr.bf16.gmra.mxu0 %v3145
        %v3273 = vpop.f32.mrf.mxu0
        %v3274 = vadd.f32 %v233, %v3273
        %v3275 = vpop.f32.mrf.mxu0
        %v3276 = vpop.f32.mrf.mxu0
        %v3277 = vadd.f32 %v233, %v3276
        %v3278 = vpop.f32.mrf.mxu0
        %3279 = vmatprep.mubr.bf16.mxu0 0
        %3280 = vmatmul.mubr.bf16.gmra.mxu0 %v3148
        %v3281 = vpop.f32.mrf.mxu0
        %v3282 = vadd.f32 %v233, %v3281
        %v3283 = vpop.f32.mrf.mxu0
        %v3284 = vpop.f32.mrf.mxu0
        %v3285 = vadd.f32 %v233, %v3284
        %v3286 = vpop.f32.mrf.mxu0
        %3287 = vdwg.mxu0
        %v3288 = vmax.f32 %v2876, %v3185
        %v3289 = vmax.f32 %v2877, %v3187
        %v3290 = vmax.f32 %v2878, %v3258
        %v3291 = vmax.f32 %v2879, %v3189
        %v3292 = vmax.f32 %v2880, %v3191
        %v3293 = vmax.f32 %v2881, %v3261
        %v3294 = vmax.f32 %v2882, %v3195
        %v3295 = vmax.f32 %v2883, %v3197
        %v3296 = vmax.f32 %v2884, %v3266
        %v3297 = vmax.f32 %v2885, %v3199
        %v3298 = vmax.f32 %v2886, %v3201
        %v3299 = vmax.f32 %v2887, %v3269
        %v3300 = vmax.f32 %v2888, %v3205
        %v3301 = vmax.f32 %v2889, %v3207
        %v3302 = vmax.f32 %v2890, %v3274
        %v3303 = vmax.f32 %v2891, %v3209
        %v3304 = vmax.f32 %v2892, %v3211
        %v3305 = vmax.f32 %v2893, %v3277
        %v3306 = vmax.f32 %v2894, %v3215
        %v3307 = vmax.f32 %v2895, %v3217
        %v3308 = vmax.f32 %v2896, %v3282
        %v3309 = vmax.f32 %v2897, %v3219
        %v3310 = vmax.f32 %v2898, %v3221
        %v3311 = vmax.f32 %v2899, %v3285
        %v3312 = vmul.f32 %v3185, %v3185
        %v3313 = vmul.f32 %v3187, %v3187
        %v3314 = vmul.f32 %v3258, %v3258
        %v3315 = vmul.f32 %v3189, %v3189
        %v3316 = vmul.f32 %v3191, %v3191
        %v3317 = vmul.f32 %v3261, %v3261
        %v3318 = vmul.f32 %v3195, %v3195
        %v3319 = vmul.f32 %v3197, %v3197
        %v3320 = vmul.f32 %v3266, %v3266
        %v3321 = vmul.f32 %v3199, %v3199
        %v3322 = vmul.f32 %v3201, %v3201
        %v3323 = vmul.f32 %v3269, %v3269
        %v3324 = vmul.f32 %v3205, %v3205
        %v3325 = vmul.f32 %v3207, %v3207
        %v3326 = vmul.f32 %v3274, %v3274
        %v3327 = vmul.f32 %v3209, %v3209
        %v3328 = vmul.f32 %v3211, %v3211
        %v3329 = vmul.f32 %v3277, %v3277
        %v3330 = vmul.f32 %v3215, %v3215
        %v3331 = vmul.f32 %v3217, %v3217
        %v3332 = vmul.f32 %v3282, %v3282
        %v3333 = vmul.f32 %v3219, %v3219
        %v3334 = vmul.f32 %v3221, %v3221
        %v3335 = vmul.f32 %v3285, %v3285
        %v3336 = vadd.f32 %v3312, %v3313
        %v3337 = vadd.f32 %v3336, %v3314
        %3338 = vadd.xlane.f32.xlu0 %v3337
        %v3339 = vpop.xlane.xlu0 %3338
        %v3340 = vadd.f32 %v3315, %v3316
        %v3341 = vadd.f32 %v3340, %v3317
        %3342 = vadd.xlane.f32.xlu0 %v3341
        %v3343 = vpop.xlane.xlu0 %3342
        %v3344 = vadd.f32 %v3318, %v3319
        %v3345 = vadd.f32 %v3344, %v3320
        %3346 = vadd.xlane.f32.xlu0 %v3345
        %v3347 = vpop.xlane.xlu0 %3346
        %v3348 = vadd.f32 %v3321, %v3322
        %v3349 = vadd.f32 %v3348, %v3323
        %3350 = vadd.xlane.f32.xlu0 %v3349
        %v3351 = vpop.xlane.xlu0 %3350
        %v3352 = vadd.f32 %v3324, %v3325
        %v3353 = vadd.f32 %v3352, %v3326
        %3354 = vadd.xlane.f32.xlu0 %v3353
        %v3355 = vpop.xlane.xlu0 %3354
        %v3356 = vadd.f32 %v3327, %v3328
        %v3357 = vadd.f32 %v3356, %v3329
        %3358 = vadd.xlane.f32.xlu0 %v3357
        %v3359 = vpop.xlane.xlu0 %3358
        %v3360 = vadd.f32 %v3330, %v3331
        %v3361 = vadd.f32 %v3360, %v3332
        %3362 = vadd.xlane.f32.xlu0 %v3361
        %v3363 = vpop.xlane.xlu0 %3362
        %v3364 = vadd.f32 %v3333, %v3334
        %v3365 = vadd.f32 %v3364, %v3335
        %3366 = vadd.xlane.f32.xlu0 %v3365
        %v3367 = vpop.xlane.xlu0 %3366
        %v3368 = vmax.f32 %v3339, 1e-24
        %v3369 = vmax.f32 %v3343, 1e-24
        %v3370 = vmax.f32 %v3347, 1e-24
        %v3371 = vmax.f32 %v3351, 1e-24
        %v3372 = vmax.f32 %v3355, 1e-24
        %v3373 = vmax.f32 %v3359, 1e-24
        %v3374 = vmax.f32 %v3363, 1e-24
        %v3375 = vmax.f32 %v3367, 1e-24
        %v3376 = vrsqrt.pop %v3368
        %v3377 = vrsqrt.pop %v3369
        %v3378 = vrsqrt.pop %v3370
        %v3379 = vrsqrt.pop %v3371
        %v3380 = vrsqrt.pop %v3372
        %v3381 = vrsqrt.pop %v3373
        %v3382 = vrsqrt.pop %v3374
        %v3383 = vrsqrt.pop %v3375
        %v3384 = vmul.f32 %v3185, %v3376
        %v3385 = vmul.f32 %v3187, %v3376
        %v3386 = vmul.f32 %v3258, %v3376
        %v3387 = vmul.f32 %v3189, %v3377
        %v3388 = vmul.f32 %v3191, %v3377
        %v3389 = vmul.f32 %v3261, %v3377
        %v3390 = vmul.f32 %v3195, %v3378
        %v3391 = vmul.f32 %v3197, %v3378
        %v3392 = vmul.f32 %v3266, %v3378
        %v3393 = vmul.f32 %v3199, %v3379
        %v3394 = vmul.f32 %v3201, %v3379
        %v3395 = vmul.f32 %v3269, %v3379
        %v3396 = vmul.f32 %v3205, %v3380
        %v3397 = vmul.f32 %v3207, %v3380
        %v3398 = vmul.f32 %v3274, %v3380
        %v3399 = vmul.f32 %v3209, %v3381
        %v3400 = vmul.f32 %v3211, %v3381
        %v3401 = vmul.f32 %v3277, %v3381
        %v3402 = vmul.f32 %v3215, %v3382
        %v3403 = vmul.f32 %v3217, %v3382
        %v3404 = vmul.f32 %v3282, %v3382
        %v3405 = vmul.f32 %v3219, %v3383
        %v3406 = vmul.f32 %v3221, %v3383
        %v3407 = vmul.f32 %v3285, %v3383
        %v3408 = vmax.f32 %v3384, 1e-06
        %v3409 = vmax.f32 %v3385, 1e-06
        %v3410 = vmax.f32 %v3386, 1e-06
        %v3411 = vmax.f32 %v3387, 1e-06
        %v3412 = vmax.f32 %v3388, 1e-06
        %v3413 = vmax.f32 %v3389, 1e-06
        %v3414 = vmax.f32 %v3390, 1e-06
        %v3415 = vmax.f32 %v3391, 1e-06
        %v3416 = vmax.f32 %v3392, 1e-06
        %v3417 = vmax.f32 %v3393, 1e-06
        %v3418 = vmax.f32 %v3394, 1e-06
        %v3419 = vmax.f32 %v3395, 1e-06
        %v3420 = vmax.f32 %v3396, 1e-06
        %v3421 = vmax.f32 %v3397, 1e-06
        %v3422 = vmax.f32 %v3398, 1e-06
        %v3423 = vmax.f32 %v3399, 1e-06
        %v3424 = vmax.f32 %v3400, 1e-06
        %v3425 = vmax.f32 %v3401, 1e-06
        %v3426 = vmax.f32 %v3402, 1e-06
        %v3427 = vmax.f32 %v3403, 1e-06
        %v3428 = vmax.f32 %v3404, 1e-06
        %v3429 = vmax.f32 %v3405, 1e-06
        %v3430 = vmax.f32 %v3406, 1e-06
        %v3431 = vmax.f32 %v3407, 1e-06
        %v3432 = vmul.f32 %v3408, %v3408
        %v3433 = vmul.f32 %v3409, %v3409
        %v3434 = vmul.f32 %v3410, %v3410
        %v3435 = vmul.f32 %v3411, %v3411
        %v3436 = vmul.f32 %v3412, %v3412
        %v3437 = vmul.f32 %v3413, %v3413
        %v3438 = vmul.f32 %v3414, %v3414
        %v3439 = vmul.f32 %v3415, %v3415
        %v3440 = vmul.f32 %v3416, %v3416
        %v3441 = vmul.f32 %v3417, %v3417
        %v3442 = vmul.f32 %v3418, %v3418
        %v3443 = vmul.f32 %v3419, %v3419
        %v3444 = vmul.f32 %v3420, %v3420
        %v3445 = vmul.f32 %v3421, %v3421
        %v3446 = vmul.f32 %v3422, %v3422
        %v3447 = vmul.f32 %v3423, %v3423
        %v3448 = vmul.f32 %v3424, %v3424
        %v3449 = vmul.f32 %v3425, %v3425
        %v3450 = vmul.f32 %v3426, %v3426
        %v3451 = vmul.f32 %v3427, %v3427
        %v3452 = vmul.f32 %v3428, %v3428
        %v3453 = vmul.f32 %v3429, %v3429
        %v3454 = vmul.f32 %v3430, %v3430
        %v3455 = vmul.f32 %v3431, %v3431
        %v3456 = vmul.f32 %v3432, %v3408
        %v3457 = vmul.f32 %v3433, %v3409
        %v3458 = vmul.f32 %v3434, %v3410
        %v3459 = vmul.f32 %v3435, %v3411
        %v3460 = vmul.f32 %v3436, %v3412
        %v3461 = vmul.f32 %v3437, %v3413
        %v3462 = vmul.f32 %v3438, %v3414
        %v3463 = vmul.f32 %v3439, %v3415
        %v3464 = vmul.f32 %v3440, %v3416
        %v3465 = vmul.f32 %v3441, %v3417
        %v3466 = vmul.f32 %v3442, %v3418
        %v3467 = vmul.f32 %v3443, %v3419
        %v3468 = vmul.f32 %v3444, %v3420
        %v3469 = vmul.f32 %v3445, %v3421
        %v3470 = vmul.f32 %v3446, %v3422
        %v3471 = vmul.f32 %v3447, %v3423
        %v3472 = vmul.f32 %v3448, %v3424
        %v3473 = vmul.f32 %v3449, %v3425
        %v3474 = vmul.f32 %v3450, %v3426
        %v3475 = vmul.f32 %v3451, %v3427
        %v3476 = vmul.f32 %v3452, %v3428
        %v3477 = vmul.f32 %v3453, %v3429
        %v3478 = vmul.f32 %v3454, %v3430
        %v3479 = vmul.f32 %v3455, %v3431
        %v3480 = vadd.f32 %v3456, %v3459
        %v3481 = vadd.f32 %v3480, %v3462
        %v3482 = vadd.f32 %v3481, %v3465
        %v3483 = vadd.f32 %v3482, %v3468
        %v3484 = vadd.f32 %v3483, %v3471
        %v3485 = vadd.f32 %v3484, %v3474
        %v3486 = vadd.f32 %v3485, %v3477
        %v3487 = vrot.slane %v3486, 4
        %v3488 = vadd.f32 %v3486, %v3487
        %v3489 = vrot.slane %v3488, 2
        %v3490 = vadd.f32 %v3488, %v3489
        %v3491 = vrot.slane %v3490, 1
        %v3492 = vadd.f32 %v3490, %v3491
        %v3493 = vadd.f32 %v3457, %v3460
        %v3494 = vadd.f32 %v3493, %v3463
        %v3495 = vadd.f32 %v3494, %v3466
        %v3496 = vadd.f32 %v3495, %v3469
        %v3497 = vadd.f32 %v3496, %v3472
        %v3498 = vadd.f32 %v3497, %v3475
        %v3499 = vadd.f32 %v3498, %v3478
        %v3500 = vrot.slane %v3499, 4
        %v3501 = vadd.f32 %v3499, %v3500
        %v3502 = vrot.slane %v3501, 2
        %v3503 = vadd.f32 %v3501, %v3502
        %v3504 = vrot.slane %v3503, 1
        %v3505 = vadd.f32 %v3503, %v3504
        %v3506 = vadd.f32 %v3458, %v3461
        %v3507 = vadd.f32 %v3506, %v3464
        %v3508 = vadd.f32 %v3507, %v3467
        %v3509 = vadd.f32 %v3508, %v3470
        %v3510 = vadd.f32 %v3509, %v3473
        %v3511 = vadd.f32 %v3510, %v3476
        %v3512 = vadd.f32 %v3511, %v3479
        %v3513 = vrot.slane %v3512, 4
        %v3514 = vadd.f32 %v3512, %v3513
        %v3515 = vrot.slane %v3514, 2
        %v3516 = vadd.f32 %v3514, %v3515
        %v3517 = vrot.slane %v3516, 1
        %v3518 = vadd.f32 %v3516, %v3517
        %v3519 = vadd.f32 %v3107, %v3492
        %v3520 = vadd.f32 %v3108, %v3505
        %v3521 = vadd.f32 %v3109, %v3518
        %v3522 = vld [vmem:[%s202 + $0x100] sm:$0xf]
        %v3523 = vld [vmem:[%s202 + $0x104] sm:$0xf]
        %v3524 = vld [vmem:[%s202 + $0x108] sm:$0xf]
        %v3525 = vld [vmem:[%s202 + $0x10c] sm:$0xf]
        %v3526 = vld [vmem:[%s202 + $0x110] sm:$0xf]
        %v3527 = vld [vmem:[%s202 + $0x114] sm:$0xf]
        %v3528 = vld [vmem:[%s202 + $0x118] sm:$0xf]
        %v3529 = vld [vmem:[%s202 + $0x11c] sm:$0xf]
        %v3538 = vunpack.c.l.b16 %v3522
        %v3539 = vunpack.c.l.b16 %v3523
        %v3540 = vunpack.c.l.b16 %v3524
        %v3541 = vunpack.c.l.b16 %v3525
        %v3542 = vunpack.c.l.b16 %v3526
        %v3543 = vunpack.c.l.b16 %v3527
        %v3544 = vunpack.c.l.b16 %v3528
        %v3545 = vunpack.c.l.b16 %v3529
        %v3546 = vpack.c.b16 %v3539, %v3538
        %v3547 = vpack.c.b16 %v3541, %v3540
        %v3548 = vpack.c.b16 %v3543, %v3542
        %v3549 = vpack.c.b16 %v3545, %v3544
        %v3551 = vsel %vm270, %v3546, 0
        %v3554 = vsel %vm270, %v3547, 0
        %v3557 = vsel %vm270, %v3548, 0
        %v3560 = vsel %vm270, %v3549, 0
        %3562 = vmatprep.subr.bf16.mxu0 0
        %3563 = vmatpush1.bf16.msra.mxu0 0
        %3564 = vmatprep.subr.bf16.mxu0 0
        %3565 = vmatpush1.bf16.msra.mxu0 0
        %3566 = vmatprep.subr.bf16.mxu0 0
        %3567 = vmatpush1.bf16.msra.mxu0 0
        %3568 = vmatprep.subr.bf16.mxu0 0
        %3569 = vmatpush1.bf16.msra.mxu0 0
        %3570 = vmatprep.subr.bf16.mxu0 0
        %3571 = vmatpush1.bf16.msra.mxu0 0
        %3572 = vmatprep.subr.bf16.mxu0 0
        %3573 = vmatpush1.bf16.msra.mxu0 0
        %3574 = vmatprep.subr.bf16.mxu0 0
        %3575 = vmatpush1.bf16.msra.mxu0 0
        %3576 = vmatprep.subr.bf16.mxu0 %v288
        %3577 = vmatpush1.bf16.msra.mxu0 %v285
        %3578 = vmatprep.subr.bf16.mxu0 0
        %3579 = vmatpush2.bf16.msra.mxu0 0
        %3580 = vmatprep.subr.bf16.mxu0 0
        %3581 = vmatpush2.bf16.msra.mxu0 0
        %3582 = vmatprep.subr.bf16.mxu0 0
        %3583 = vmatpush2.bf16.msra.mxu0 0
        %3584 = vmatprep.subr.bf16.mxu0 0
        %3585 = vmatpush2.bf16.msra.mxu0 0
        %3586 = vmatprep.subr.bf16.mxu0 0
        %3587 = vmatpush2.bf16.msra.mxu0 0
        %3588 = vmatprep.subr.bf16.mxu0 0
        %3589 = vmatpush2.bf16.msra.mxu0 0
        %3590 = vmatprep.subr.bf16.mxu0 0
        %3591 = vmatpush2.bf16.msra.mxu0 0
        %3592 = vmatprep.subr.bf16.mxu0 0
        %3593 = vmatpush2.bf16.msra.mxu0 0
        %3594 = vmatprep.mubr.bf16.mxu0 0
        %3595 = vmatmul.mubr.bf16.gmra.mxu0 %v3551
        %v3596 = vpop.f32.mrf.mxu0
        %v3597 = vadd.f32 %v225, %v3596
        %v3598 = vpop.f32.mrf.mxu0
        %v3599 = vadd.f32 %v229, %v3598
        %v3600 = vpop.f32.mrf.mxu0
        %v3601 = vadd.f32 %v225, %v3600
        %v3602 = vpop.f32.mrf.mxu0
        %v3603 = vadd.f32 %v229, %v3602
        %3604 = vmatprep.mubr.bf16.mxu0 0
        %3605 = vmatmul.mubr.bf16.gmra.mxu0 %v3554
        %v3606 = vpop.f32.mrf.mxu0
        %v3607 = vadd.f32 %v225, %v3606
        %v3608 = vpop.f32.mrf.mxu0
        %v3609 = vadd.f32 %v229, %v3608
        %v3610 = vpop.f32.mrf.mxu0
        %v3611 = vadd.f32 %v225, %v3610
        %v3612 = vpop.f32.mrf.mxu0
        %v3613 = vadd.f32 %v229, %v3612
        %3614 = vmatprep.mubr.bf16.mxu0 0
        %3615 = vmatmul.mubr.bf16.gmra.mxu0 %v3557
        %v3616 = vpop.f32.mrf.mxu0
        %v3617 = vadd.f32 %v225, %v3616
        %v3618 = vpop.f32.mrf.mxu0
        %v3619 = vadd.f32 %v229, %v3618
        %v3620 = vpop.f32.mrf.mxu0
        %v3621 = vadd.f32 %v225, %v3620
        %v3622 = vpop.f32.mrf.mxu0
        %v3623 = vadd.f32 %v229, %v3622
        %3624 = vmatprep.mubr.bf16.mxu0 0
        %3625 = vmatmul.mubr.bf16.gmra.mxu0 %v3560
        %v3626 = vpop.f32.mrf.mxu0
        %v3627 = vadd.f32 %v225, %v3626
        %v3628 = vpop.f32.mrf.mxu0
        %v3629 = vadd.f32 %v229, %v3628
        %v3630 = vpop.f32.mrf.mxu0
        %v3631 = vadd.f32 %v225, %v3630
        %v3632 = vpop.f32.mrf.mxu0
        %v3633 = vadd.f32 %v229, %v3632
        %3634 = vdwg.mxu0
        %3635 = vmatprep.subr.bf16.mxu0 0
        %3636 = vmatpush1.bf16.msra.mxu0 0
        %3637 = vmatprep.subr.bf16.mxu0 0
        %3638 = vmatpush1.bf16.msra.mxu0 0
        %3639 = vmatprep.subr.bf16.mxu0 0
        %3640 = vmatpush1.bf16.msra.mxu0 0
        %3641 = vmatprep.subr.bf16.mxu0 0
        %3642 = vmatpush1.bf16.msra.mxu0 0
        %3643 = vmatprep.subr.bf16.mxu0 0
        %3644 = vmatpush1.bf16.msra.mxu0 0
        %3645 = vmatprep.subr.bf16.mxu0 0
        %3646 = vmatpush1.bf16.msra.mxu0 0
        %3647 = vmatprep.subr.bf16.mxu0 0
        %3648 = vmatpush1.bf16.msra.mxu0 0
        %3649 = vmatprep.subr.bf16.mxu0 0
        %3650 = vmatpush1.bf16.msra.mxu0 %v291
        %3651 = vmatprep.subr.bf16.mxu0 0
        %3652 = vmatpush2.bf16.msra.mxu0 0
        %3653 = vmatprep.subr.bf16.mxu0 0
        %3654 = vmatpush2.bf16.msra.mxu0 0
        %3655 = vmatprep.subr.bf16.mxu0 0
        %3656 = vmatpush2.bf16.msra.mxu0 0
        %3657 = vmatprep.subr.bf16.mxu0 0
        %3658 = vmatpush2.bf16.msra.mxu0 0
        %3659 = vmatprep.subr.bf16.mxu0 0
        %3660 = vmatpush2.bf16.msra.mxu0 0
        %3661 = vmatprep.subr.bf16.mxu0 0
        %3662 = vmatpush2.bf16.msra.mxu0 0
        %3663 = vmatprep.subr.bf16.mxu0 0
        %3664 = vmatpush2.bf16.msra.mxu0 0
        %3665 = vmatprep.subr.bf16.mxu0 0
        %3666 = vmatpush2.bf16.msra.mxu0 0
        %3667 = vmatprep.mubr.bf16.mxu0 0
        %3668 = vmatmul.mubr.bf16.gmra.mxu0 %v3551
        %v3669 = vpop.f32.mrf.mxu0
        %v3670 = vadd.f32 %v233, %v3669
        %v3671 = vpop.f32.mrf.mxu0
        %v3672 = vpop.f32.mrf.mxu0
        %v3673 = vadd.f32 %v233, %v3672
        %v3674 = vpop.f32.mrf.mxu0
        %3675 = vmatprep.mubr.bf16.mxu0 0
        %3676 = vmatmul.mubr.bf16.gmra.mxu0 %v3554
        %v3677 = vpop.f32.mrf.mxu0
        %v3678 = vadd.f32 %v233, %v3677
        %v3679 = vpop.f32.mrf.mxu0
        %v3680 = vpop.f32.mrf.mxu0
        %v3681 = vadd.f32 %v233, %v3680
        %v3682 = vpop.f32.mrf.mxu0
        %3683 = vmatprep.mubr.bf16.mxu0 0
        %3684 = vmatmul.mubr.bf16.gmra.mxu0 %v3557
        %v3685 = vpop.f32.mrf.mxu0
        %v3686 = vadd.f32 %v233, %v3685
        %v3687 = vpop.f32.mrf.mxu0
        %v3688 = vpop.f32.mrf.mxu0
        %v3689 = vadd.f32 %v233, %v3688
        %v3690 = vpop.f32.mrf.mxu0
        %3691 = vmatprep.mubr.bf16.mxu0 0
        %3692 = vmatmul.mubr.bf16.gmra.mxu0 %v3560
        %v3693 = vpop.f32.mrf.mxu0
        %v3694 = vadd.f32 %v233, %v3693
        %v3695 = vpop.f32.mrf.mxu0
        %v3696 = vpop.f32.mrf.mxu0
        %v3697 = vadd.f32 %v233, %v3696
        %v3698 = vpop.f32.mrf.mxu0
        %3699 = vdwg.mxu0
        %v3700 = vmax.f32 %v3288, %v3597
        %v3701 = vmax.f32 %v3289, %v3599
        %v3702 = vmax.f32 %v3290, %v3670
        %v3703 = vmax.f32 %v3291, %v3601
        %v3704 = vmax.f32 %v3292, %v3603
        %v3705 = vmax.f32 %v3293, %v3673
        %v3706 = vmax.f32 %v3294, %v3607
        %v3707 = vmax.f32 %v3295, %v3609
        %v3708 = vmax.f32 %v3296, %v3678
        %v3709 = vmax.f32 %v3297, %v3611
        %v3710 = vmax.f32 %v3298, %v3613
        %v3711 = vmax.f32 %v3299, %v3681
        %v3712 = vmax.f32 %v3300, %v3617
        %v3713 = vmax.f32 %v3301, %v3619
        %v3714 = vmax.f32 %v3302, %v3686
        %v3715 = vmax.f32 %v3303, %v3621
        %v3716 = vmax.f32 %v3304, %v3623
        %v3717 = vmax.f32 %v3305, %v3689
        %v3718 = vmax.f32 %v3306, %v3627
        %v3719 = vmax.f32 %v3307, %v3629
        %v3720 = vmax.f32 %v3308, %v3694
        %v3721 = vmax.f32 %v3309, %v3631
        %v3722 = vmax.f32 %v3310, %v3633
        %v3723 = vmax.f32 %v3311, %v3697
        %v3724 = vmul.f32 %v3597, %v3597
        %v3725 = vmul.f32 %v3599, %v3599
        %v3726 = vmul.f32 %v3670, %v3670
        %v3727 = vmul.f32 %v3601, %v3601
        %v3728 = vmul.f32 %v3603, %v3603
        %v3729 = vmul.f32 %v3673, %v3673
        %v3730 = vmul.f32 %v3607, %v3607
        %v3731 = vmul.f32 %v3609, %v3609
        %v3732 = vmul.f32 %v3678, %v3678
        %v3733 = vmul.f32 %v3611, %v3611
        %v3734 = vmul.f32 %v3613, %v3613
        %v3735 = vmul.f32 %v3681, %v3681
        %v3736 = vmul.f32 %v3617, %v3617
        %v3737 = vmul.f32 %v3619, %v3619
        %v3738 = vmul.f32 %v3686, %v3686
        %v3739 = vmul.f32 %v3621, %v3621
        %v3740 = vmul.f32 %v3623, %v3623
        %v3741 = vmul.f32 %v3689, %v3689
        %v3742 = vmul.f32 %v3627, %v3627
        %v3743 = vmul.f32 %v3629, %v3629
        %v3744 = vmul.f32 %v3694, %v3694
        %v3745 = vmul.f32 %v3631, %v3631
        %v3746 = vmul.f32 %v3633, %v3633
        %v3747 = vmul.f32 %v3697, %v3697
        %v3748 = vadd.f32 %v3724, %v3725
        %v3749 = vadd.f32 %v3748, %v3726
        %3750 = vadd.xlane.f32.xlu0 %v3749
        %v3751 = vpop.xlane.xlu0 %3750
        %v3752 = vadd.f32 %v3727, %v3728
        %v3753 = vadd.f32 %v3752, %v3729
        %3754 = vadd.xlane.f32.xlu0 %v3753
        %v3755 = vpop.xlane.xlu0 %3754
        %v3756 = vadd.f32 %v3730, %v3731
        %v3757 = vadd.f32 %v3756, %v3732
        %3758 = vadd.xlane.f32.xlu0 %v3757
        %v3759 = vpop.xlane.xlu0 %3758
        %v3760 = vadd.f32 %v3733, %v3734
        %v3761 = vadd.f32 %v3760, %v3735
        %3762 = vadd.xlane.f32.xlu0 %v3761
        %v3763 = vpop.xlane.xlu0 %3762
        %v3764 = vadd.f32 %v3736, %v3737
        %v3765 = vadd.f32 %v3764, %v3738
        %3766 = vadd.xlane.f32.xlu0 %v3765
        %v3767 = vpop.xlane.xlu0 %3766
        %v3768 = vadd.f32 %v3739, %v3740
        %v3769 = vadd.f32 %v3768, %v3741
        %3770 = vadd.xlane.f32.xlu0 %v3769
        %v3771 = vpop.xlane.xlu0 %3770
        %v3772 = vadd.f32 %v3742, %v3743
        %v3773 = vadd.f32 %v3772, %v3744
        %3774 = vadd.xlane.f32.xlu0 %v3773
        %v3775 = vpop.xlane.xlu0 %3774
        %v3776 = vadd.f32 %v3745, %v3746
        %v3777 = vadd.f32 %v3776, %v3747
        %3778 = vadd.xlane.f32.xlu0 %v3777
        %v3779 = vpop.xlane.xlu0 %3778
        %v3780 = vmax.f32 %v3751, 1e-24
        %v3781 = vmax.f32 %v3755, 1e-24
        %v3782 = vmax.f32 %v3759, 1e-24
        %v3783 = vmax.f32 %v3763, 1e-24
        %v3784 = vmax.f32 %v3767, 1e-24
        %v3785 = vmax.f32 %v3771, 1e-24
        %v3786 = vmax.f32 %v3775, 1e-24
        %v3787 = vmax.f32 %v3779, 1e-24
        %v3788 = vrsqrt.pop %v3780
        %v3789 = vrsqrt.pop %v3781
        %v3790 = vrsqrt.pop %v3782
        %v3791 = vrsqrt.pop %v3783
        %v3792 = vrsqrt.pop %v3784
        %v3793 = vrsqrt.pop %v3785
        %v3794 = vrsqrt.pop %v3786
        %v3795 = vrsqrt.pop %v3787
        %v3796 = vmul.f32 %v3597, %v3788
        %v3797 = vmul.f32 %v3599, %v3788
        %v3798 = vmul.f32 %v3670, %v3788
        %v3799 = vmul.f32 %v3601, %v3789
        %v3800 = vmul.f32 %v3603, %v3789
        %v3801 = vmul.f32 %v3673, %v3789
        %v3802 = vmul.f32 %v3607, %v3790
        %v3803 = vmul.f32 %v3609, %v3790
        %v3804 = vmul.f32 %v3678, %v3790
        %v3805 = vmul.f32 %v3611, %v3791
        %v3806 = vmul.f32 %v3613, %v3791
        %v3807 = vmul.f32 %v3681, %v3791
        %v3808 = vmul.f32 %v3617, %v3792
        %v3809 = vmul.f32 %v3619, %v3792
        %v3810 = vmul.f32 %v3686, %v3792
        %v3811 = vmul.f32 %v3621, %v3793
        %v3812 = vmul.f32 %v3623, %v3793
        %v3813 = vmul.f32 %v3689, %v3793
        %v3814 = vmul.f32 %v3627, %v3794
        %v3815 = vmul.f32 %v3629, %v3794
        %v3816 = vmul.f32 %v3694, %v3794
        %v3817 = vmul.f32 %v3631, %v3795
        %v3818 = vmul.f32 %v3633, %v3795
        %v3819 = vmul.f32 %v3697, %v3795
        %v3820 = vmax.f32 %v3796, 1e-06
        %v3821 = vmax.f32 %v3797, 1e-06
        %v3822 = vmax.f32 %v3798, 1e-06
        %v3823 = vmax.f32 %v3799, 1e-06
        %v3824 = vmax.f32 %v3800, 1e-06
        %v3825 = vmax.f32 %v3801, 1e-06
        %v3826 = vmax.f32 %v3802, 1e-06
        %v3827 = vmax.f32 %v3803, 1e-06
        %v3828 = vmax.f32 %v3804, 1e-06
        %v3829 = vmax.f32 %v3805, 1e-06
        %v3830 = vmax.f32 %v3806, 1e-06
        %v3831 = vmax.f32 %v3807, 1e-06
        %v3832 = vmax.f32 %v3808, 1e-06
        %v3833 = vmax.f32 %v3809, 1e-06
        %v3834 = vmax.f32 %v3810, 1e-06
        %v3835 = vmax.f32 %v3811, 1e-06
        %v3836 = vmax.f32 %v3812, 1e-06
        %v3837 = vmax.f32 %v3813, 1e-06
        %v3838 = vmax.f32 %v3814, 1e-06
        %v3839 = vmax.f32 %v3815, 1e-06
        %v3840 = vmax.f32 %v3816, 1e-06
        %v3841 = vmax.f32 %v3817, 1e-06
        %v3842 = vmax.f32 %v3818, 1e-06
        %v3843 = vmax.f32 %v3819, 1e-06
        %v3844 = vmul.f32 %v3820, %v3820
        %v3845 = vmul.f32 %v3821, %v3821
        %v3846 = vmul.f32 %v3822, %v3822
        %v3847 = vmul.f32 %v3823, %v3823
        %v3848 = vmul.f32 %v3824, %v3824
        %v3849 = vmul.f32 %v3825, %v3825
        %v3850 = vmul.f32 %v3826, %v3826
        %v3851 = vmul.f32 %v3827, %v3827
        %v3852 = vmul.f32 %v3828, %v3828
        %v3853 = vmul.f32 %v3829, %v3829
        %v3854 = vmul.f32 %v3830, %v3830
        %v3855 = vmul.f32 %v3831, %v3831
        %v3856 = vmul.f32 %v3832, %v3832
        %v3857 = vmul.f32 %v3833, %v3833
        %v3858 = vmul.f32 %v3834, %v3834
        %v3859 = vmul.f32 %v3835, %v3835
        %v3860 = vmul.f32 %v3836, %v3836
        %v3861 = vmul.f32 %v3837, %v3837
        %v3862 = vmul.f32 %v3838, %v3838
        %v3863 = vmul.f32 %v3839, %v3839
        %v3864 = vmul.f32 %v3840, %v3840
        %v3865 = vmul.f32 %v3841, %v3841
        %v3866 = vmul.f32 %v3842, %v3842
        %v3867 = vmul.f32 %v3843, %v3843
        %v3868 = vmul.f32 %v3844, %v3820
        %v3869 = vmul.f32 %v3845, %v3821
        %v3870 = vmul.f32 %v3846, %v3822
        %v3871 = vmul.f32 %v3847, %v3823
        %v3872 = vmul.f32 %v3848, %v3824
        %v3873 = vmul.f32 %v3849, %v3825
        %v3874 = vmul.f32 %v3850, %v3826
        %v3875 = vmul.f32 %v3851, %v3827
        %v3876 = vmul.f32 %v3852, %v3828
        %v3877 = vmul.f32 %v3853, %v3829
        %v3878 = vmul.f32 %v3854, %v3830
        %v3879 = vmul.f32 %v3855, %v3831
        %v3880 = vmul.f32 %v3856, %v3832
        %v3881 = vmul.f32 %v3857, %v3833
        %v3882 = vmul.f32 %v3858, %v3834
        %v3883 = vmul.f32 %v3859, %v3835
        %v3884 = vmul.f32 %v3860, %v3836
        %v3885 = vmul.f32 %v3861, %v3837
        %v3886 = vmul.f32 %v3862, %v3838
        %v3887 = vmul.f32 %v3863, %v3839
        %v3888 = vmul.f32 %v3864, %v3840
        %v3889 = vmul.f32 %v3865, %v3841
        %v3890 = vmul.f32 %v3866, %v3842
        %v3891 = vmul.f32 %v3867, %v3843
        %v3892 = vadd.f32 %v3868, %v3871
        %v3893 = vadd.f32 %v3892, %v3874
        %v3894 = vadd.f32 %v3893, %v3877
        %v3895 = vadd.f32 %v3894, %v3880
        %v3896 = vadd.f32 %v3895, %v3883
        %v3897 = vadd.f32 %v3896, %v3886
        %v3898 = vadd.f32 %v3897, %v3889
        %v3899 = vrot.slane %v3898, 4
        %v3900 = vadd.f32 %v3898, %v3899
        %v3901 = vrot.slane %v3900, 2
        %v3902 = vadd.f32 %v3900, %v3901
        %v3903 = vrot.slane %v3902, 1
        %v3904 = vadd.f32 %v3902, %v3903
        %v3905 = vadd.f32 %v3869, %v3872
        %v3906 = vadd.f32 %v3905, %v3875
        %v3907 = vadd.f32 %v3906, %v3878
        %v3908 = vadd.f32 %v3907, %v3881
        %v3909 = vadd.f32 %v3908, %v3884
        %v3910 = vadd.f32 %v3909, %v3887
        %v3911 = vadd.f32 %v3910, %v3890
        %v3912 = vrot.slane %v3911, 4
        %v3913 = vadd.f32 %v3911, %v3912
        %v3914 = vrot.slane %v3913, 2
        %v3915 = vadd.f32 %v3913, %v3914
        %v3916 = vrot.slane %v3915, 1
        %v3917 = vadd.f32 %v3915, %v3916
        %v3918 = vadd.f32 %v3870, %v3873
        %v3919 = vadd.f32 %v3918, %v3876
        %v3920 = vadd.f32 %v3919, %v3879
        %v3921 = vadd.f32 %v3920, %v3882
        %v3922 = vadd.f32 %v3921, %v3885
        %v3923 = vadd.f32 %v3922, %v3888
        %v3924 = vadd.f32 %v3923, %v3891
        %v3925 = vrot.slane %v3924, 4
        %v3926 = vadd.f32 %v3924, %v3925
        %v3927 = vrot.slane %v3926, 2
        %v3928 = vadd.f32 %v3926, %v3927
        %v3929 = vrot.slane %v3928, 1
        %v3930 = vadd.f32 %v3928, %v3929
        %v3931 = vadd.f32 %v3519, %v3904
        %v3932 = vadd.f32 %v3520, %v3917
        %v3933 = vadd.f32 %v3521, %v3930
        %v3934 = vmul.f32 %v3700, %v3700
        %v3935 = vmul.f32 %v3701, %v3701
        %v3936 = vmul.f32 %v3702, %v3702
        %v3937 = vmul.f32 %v3703, %v3703
        %v3938 = vmul.f32 %v3704, %v3704
        %v3939 = vmul.f32 %v3705, %v3705
        %v3940 = vmul.f32 %v3706, %v3706
        %v3941 = vmul.f32 %v3707, %v3707
        %v3942 = vmul.f32 %v3708, %v3708
        %v3943 = vmul.f32 %v3709, %v3709
        %v3944 = vmul.f32 %v3710, %v3710
        %v3945 = vmul.f32 %v3711, %v3711
        %v3946 = vmul.f32 %v3712, %v3712
        %v3947 = vmul.f32 %v3713, %v3713
        %v3948 = vmul.f32 %v3714, %v3714
        %v3949 = vmul.f32 %v3715, %v3715
        %v3950 = vmul.f32 %v3716, %v3716
        %v3951 = vmul.f32 %v3717, %v3717
        %v3952 = vmul.f32 %v3718, %v3718
        %v3953 = vmul.f32 %v3719, %v3719
        %v3954 = vmul.f32 %v3720, %v3720
        %v3955 = vmul.f32 %v3721, %v3721
        %v3956 = vmul.f32 %v3722, %v3722
        %v3957 = vmul.f32 %v3723, %v3723
        %v3958 = vadd.f32 %v3934, %v3935
        %v3959 = vadd.f32 %v3958, %v3936
        %3960 = vadd.xlane.f32.xlu0 %v3959
        %v3961 = vpop.xlane.xlu0 %3960
        %v3962 = vadd.f32 %v3937, %v3938
        %v3963 = vadd.f32 %v3962, %v3939
        %3964 = vadd.xlane.f32.xlu0 %v3963
        %v3965 = vpop.xlane.xlu0 %3964
        %v3966 = vadd.f32 %v3940, %v3941
        %v3967 = vadd.f32 %v3966, %v3942
        %3968 = vadd.xlane.f32.xlu0 %v3967
        %v3969 = vpop.xlane.xlu0 %3968
        %v3970 = vadd.f32 %v3943, %v3944
        %v3971 = vadd.f32 %v3970, %v3945
        %3972 = vadd.xlane.f32.xlu0 %v3971
        %v3973 = vpop.xlane.xlu0 %3972
        %v3974 = vadd.f32 %v3946, %v3947
        %v3975 = vadd.f32 %v3974, %v3948
        %3976 = vadd.xlane.f32.xlu0 %v3975
        %v3977 = vpop.xlane.xlu0 %3976
        %v3978 = vadd.f32 %v3949, %v3950
        %v3979 = vadd.f32 %v3978, %v3951
        %3980 = vadd.xlane.f32.xlu0 %v3979
        %v3981 = vpop.xlane.xlu0 %3980
        %v3982 = vadd.f32 %v3952, %v3953
        %v3983 = vadd.f32 %v3982, %v3954
        %3984 = vadd.xlane.f32.xlu0 %v3983
        %v3985 = vpop.xlane.xlu0 %3984
        %v3986 = vadd.f32 %v3955, %v3956
        %v3987 = vadd.f32 %v3986, %v3957
        %3988 = vadd.xlane.f32.xlu0 %v3987
        %v3989 = vpop.xlane.xlu0 %3988
        %v3990 = vmax.f32 %v3961, 1e-24
        %v3991 = vmax.f32 %v3965, 1e-24
        %v3992 = vmax.f32 %v3969, 1e-24
        %v3993 = vmax.f32 %v3973, 1e-24
        %v3994 = vmax.f32 %v3977, 1e-24
        %v3995 = vmax.f32 %v3981, 1e-24
        %v3996 = vmax.f32 %v3985, 1e-24
        %v3997 = vmax.f32 %v3989, 1e-24
        %v3998 = vrsqrt.pop %v3990
        %v3999 = vrsqrt.pop %v3991
        %v4000 = vrsqrt.pop %v3992
        %v4001 = vrsqrt.pop %v3993
        %v4002 = vrsqrt.pop %v3994
        %v4003 = vrsqrt.pop %v3995
        %v4004 = vrsqrt.pop %v3996
        %v4005 = vrsqrt.pop %v3997
        %v4006 = vmul.f32 %v3700, %v3998
        %v4007 = vmul.f32 %v3701, %v3998
        %v4008 = vmul.f32 %v3702, %v3998
        %v4009 = vmul.f32 %v3703, %v3999
        %v4010 = vmul.f32 %v3704, %v3999
        %v4011 = vmul.f32 %v3705, %v3999
        %v4012 = vmul.f32 %v3706, %v4000
        %v4013 = vmul.f32 %v3707, %v4000
        %v4014 = vmul.f32 %v3708, %v4000
        %v4015 = vmul.f32 %v3709, %v4001
        %v4016 = vmul.f32 %v3710, %v4001
        %v4017 = vmul.f32 %v3711, %v4001
        %v4018 = vmul.f32 %v3712, %v4002
        %v4019 = vmul.f32 %v3713, %v4002
        %v4020 = vmul.f32 %v3714, %v4002
        %v4021 = vmul.f32 %v3715, %v4003
        %v4022 = vmul.f32 %v3716, %v4003
        %v4023 = vmul.f32 %v3717, %v4003
        %v4024 = vmul.f32 %v3718, %v4004
        %v4025 = vmul.f32 %v3719, %v4004
        %v4026 = vmul.f32 %v3720, %v4004
        %v4027 = vmul.f32 %v3721, %v4005
        %v4028 = vmul.f32 %v3722, %v4005
        %v4029 = vmul.f32 %v3723, %v4005
        %4030 = vst [vmem:[%s191] sm:$0xff] %v4006
        %4031 = vst [vmem:[%s191 + $0x8] sm:$0xff] %v4007
        %4032 = vst [vmem:[%s191 + $0x10] sm:$0xff] %v4008
        %4033 = vst [vmem:[%s191 + $0x18] sm:$0xff] %v4009
        %4034 = vst [vmem:[%s191 + $0x20] sm:$0xff] %v4010
        %4035 = vst [vmem:[%s191 + $0x28] sm:$0xff] %v4011
        %4036 = vst [vmem:[%s191 + $0x30] sm:$0xff] %v4012
        %4037 = vst [vmem:[%s191 + $0x38] sm:$0xff] %v4013
        %4038 = vst [vmem:[%s191 + $0x40] sm:$0xff] %v4014
        %4039 = vst [vmem:[%s191 + $0x48] sm:$0xff] %v4015
        %4040 = vst [vmem:[%s191 + $0x50] sm:$0xff] %v4016
        %4041 = vst [vmem:[%s191 + $0x58] sm:$0xff] %v4017
        %4042 = vst [vmem:[%s191 + $0x60] sm:$0xff] %v4018
        %4043 = vst [vmem:[%s191 + $0x68] sm:$0xff] %v4019
        %4044 = vst [vmem:[%s191 + $0x70] sm:$0xff] %v4020
        %4045 = vst [vmem:[%s191 + $0x78] sm:$0xff] %v4021
        %4046 = vst [vmem:[%s191 + $0x80] sm:$0xff] %v4022
        %4047 = vst [vmem:[%s191 + $0x88] sm:$0xff] %v4023
        %4048 = vst [vmem:[%s191 + $0x90] sm:$0xff] %v4024
        %4049 = vst [vmem:[%s191 + $0x98] sm:$0xff] %v4025
        %4050 = vst [vmem:[%s191 + $0xa0] sm:$0xff] %v4026
        %4051 = vst [vmem:[%s191 + $0xa8] sm:$0xff] %v4027
        %4052 = vst [vmem:[%s191 + $0xb0] sm:$0xff] %v4028
        %4053 = vst [vmem:[%s191 + $0xb8] sm:$0xff] %v4029
        %v4054 = vmul.f32 %v3931, 0.0017361111
        %v4055 = vmul.f32 %v3932, 0.0017361111
        %v4056 = vmul.f32 %v3933, 0.0017361111
        %v4057 = vlog2.pop %v4054
        %v4058 = vmul.f32 %v4057, 0.6931472
        %v4059 = vlog2.pop %v4055
        %v4060 = vmul.f32 %v4059, 0.6931472
        %v4061 = vlog2.pop %v4056
        %v4062 = vmul.f32 %v4061, 0.6931472
        %v4063 = vmul.f32 %v4058, 0.33333334
        %v4064 = vmul.f32 %v4060, 0.33333334
        %v4065 = vmul.f32 %v4062, 0.33333334
        %v4066 = vmul.f32 %v4063, 1.442695
        %v4067 = vpow.pop %v4066
        %v4068 = vmul.f32 %v4064, 1.442695
        %v4069 = vpow.pop %v4068
        %v4070 = vmul.f32 %v4065, 1.442695
        %v4071 = vpow.pop %v4070
        %v4072 = vmul.f32 %v4067, %v4067
        %v4073 = vmul.f32 %v4069, %v4069
        %v4074 = vmul.f32 %v4071, %v4071
        %v4075 = vadd.f32 %v4072, %v4073
        %v4076 = vadd.f32 %v4075, %v4074
        %4077 = vadd.xlane.f32.xlu0 %v4076
        %v4078 = vpop.xlane.xlu0 %4077
        %v4079 = vmax.f32 %v4078, 1e-24
        %v4080 = vrsqrt.pop %v4079
        %v4081 = vmul.f32 %v4067, %v4080
        %v4082 = vmul.f32 %v4069, %v4080
        %v4083 = vmul.f32 %v4071, %v4080
        %v4087 = vcombine.low %v4081, %v4082
        %v4089 = vunpack.c.l.s4 1966171168
        %v4090 = vunpack.c.0.s8 %v4089
        %v4091 = vlaneseq
        %v4092 = vshrl.u32 %v4091, 7
        %v4093 = vsub.s32 %v4090, %v4092
        %v4094 = vrot.slane %v4087, %v4093
        %v4096 = vunpack.c.l.s4 1966171168
        %v4097 = vunpack.c.0.s8 %v4096
        %v4098 = vlaneseq
        %v4099 = vshrl.u32 %v4098, 7
        %v4100 = vsub.s32 %v4097, %v4099
        %v4101 = vrot.slane %v4083, %v4100
        %v4102 = vcombine.low %v4094, %v4101
        %v4104 = vunpack.c.l.s4 1966171168
        %v4105 = vunpack.c.0.s8 %v4104
        %v4106 = vlaneseq
        %v4107 = vshrl.u32 %v4106, 7
        %v4108 = vsub.s32 %v4105, %v4107
        %v4109 = vrot.slane %v4102, %v4108
        %v4111 = vlaneseq
        %vm4112 = vcmp.ge.s32.totalorder %v4111, 0
        %vm4113 = vcmp.lt.s32.totalorder %v4111, 384
        %vm4114 = vmand %vm4112, %vm4113
        %4115 = vst.msk [vmem:[%s206] sm:$0x7] %vm4114, %v4109
        %s4116 = sand.u32 %s95, 1
        %s4117 = scalar_lea.sflag [#allocation3], %s4116
        %s4118 = sand.u32 %s95, 1
        %s4119 = smul.addr %s4118, 192
        %s4120 = scalar_lea.vmem [#allocation2], %s4119
        %p4121 = scmp.lt.s32.totalorder %s19, 1
        %s4122 = scalar_select %p4121, %s19, 1
        %s4123 = smul.addr %s4122, 3
        %s4124 = scalar_lea.vmem %s4, %s4123
        // Predicated region
        $region33: #{geo_localization_net.1} parent=31 // pred_check
          %p4125 = pneg %p105
        $region34: #{geo_localization_net.1} parent=31 // pred_check_branch
          %4127 = sbr.rel (%p4125) target = $region36
        $region35: #{geo_localization_net.1} parent=31 // pred_region
          %s4129 = ssub.s32 3072, 3072
          %4130 = vsyncadd %s4117, %s4129
          %s4131 = smul.addr %s19, 24
          %s4132 = smul.addr %s4131, 128
          %s4133 = scalar_lea.hbm %s3, %s4132
          %s4134 = sshll.u32 %s4120, 4
          %s4135 = int_to_ptr.vmem [resolvable:$true] %s4134
          %4140 = dma.vmem_to_hbm [thread:$0]  %s4135, 3072, %s4133, %s4117, 384, 384, 24
        $region36: #{geo_localization_net.1} parent=31 // pred_fallthru
          _
        // Predicated region
        $region37: #{geo_localization_net.1} parent=31 // pred_check
          %p4141 = pneg %p131
        $region38: #{geo_localization_net.1} parent=31 // pred_check_branch
          %4143 = sbr.rel (%p4141) target = $region40
        $region39: #{geo_localization_net.1} parent=31 // pred_region
          _
        $region40: #{geo_localization_net.1} parent=31 // pred_fallthru
          _
      $region32: #{geo_localization_net.1} parent=5 // pred_fallthru
        _
      %p4144 = scmp.le.s32.totalorder 2, %s14
      // Predicated region
      $region41: #{geo_localization_net.1} parent=5 // pred_check
        %p4145 = pneg %p4144
      $region42: #{geo_localization_net.1} parent=5 // pred_check_branch
        %4147 = sbr.rel (%p4145) target = $region44
      $region43: #{geo_localization_net.1} parent=5 // pred_region
        %s4148 = ssub.s32 %s14, 2
        // Predicated region
        $region45: #{geo_localization_net.1} parent=43 // pred_check
          %p4149 = pneg %p111
        $region46: #{geo_localization_net.1} parent=43 // pred_check_branch
          %4151 = sbr.rel (%p4149) target = $region48
        $region47: #{geo_localization_net.1} parent=43 // pred_region
          %s4152 = sand.u32 %s96, 1
          %s4153 = scalar_lea.sflag [#allocation3], %s4152
          %s4154 = sand.u32 %s96, 1
          %s4155 = smul.addr %s4154, 192
          %s4156 = scalar_lea.vmem [#allocation2], %s4155
          %4157 = dma.done %s4153, 3072
        $region48: #{geo_localization_net.1} parent=43 // pred_fallthru
          _
        // Predicated region
        $region49: #{geo_localization_net.1} parent=43 // pred_check
          %p4158 = pneg %p137
        $region50: #{geo_localization_net.1} parent=43 // pred_check_branch
          %4160 = sbr.rel (%p4158) target = $region52
        $region51: #{geo_localization_net.1} parent=43 // pred_region
          %p4161 = scmp.lt.s32.totalorder %s20, 1
          %s4162 = scalar_select %p4161, %s20, 1
          %s4163 = smul.addr %s4162, 3
          %s4164 = scalar_lea.vmem %s4, %s4163
        $region52: #{geo_localization_net.1} parent=43 // pred_fallthru
          _
      $region44: #{geo_localization_net.1} parent=5 // pred_fallthru
        _
    $region6: #{geo_localization_net.1} parent=1 // loop_footer
      %s18 = sadd.s32 1, %s14
    $region7: #{geo_localization_net.1} parent=1 // loop_footer_branch
      %13 = sbr.rel target = $region3
    $region8: #{geo_localization_net.1} parent=1 // loop_exit
      _
    %4165 = vsyncpa [#allocation3], 1
    %s4166 = scalar_lea.sflag [#allocation3], 1
    %4167 = vsyncpa %s4166, 1

</llo_original>
